<compile_context>
chip_gen: v7x
topology: tpu7x:2x2x1
jax: 0.10.0
libtpu: 0.0.40
codegen_flags: <defaults>
</compile_context>

<pallas_src>
import functools

import jax
import jax.numpy as jnp
from jax.experimental import pallas as pl
from jax.experimental.pallas import tpu as pltpu

KSIZE = 7
PAD = 3                       # conv halo radius (7x7 conv, padding=3)
PAD_L = 8                     # left pad = 8 -> sublane-aligned residual read
COL0 = PAD_L - PAD            # first padded column touched by the conv taps
EPS_LN = 1e-6
LANE = 128


def _round_up(x, m):
    return (x + m - 1) // m * m


def _pad_axis(a, axis, target):
    pad = [(0, 0)] * a.ndim
    pad[axis] = (0, target - a.shape[axis])
    return jnp.pad(a, pad)


def acl_kernel(xp_hbm, wdw_ref, bdw_ref, lnw_ref, lnb_ref,
               w1_ref, b1_ref, w2_ref, b2_ref, gamma_ref,
               o_ref, buf_ref, sem_ref, *, C, approx_gelu):
    """One (batch, row-tile) step.

    xp_hbm : (N, Hp, Wp, Cp) padded NHWC image, left in HBM (pl.ANY).
    o_ref  : (1, TH, W, Cp)  output row tile (VMEM, auto-pipelined).
    buf_ref: (2, TH+6, Wp, Cp) VMEM halo slabs (manual double buffer).
    """
    _, TH, W, Cp = o_ref.shape
    HALO = TH + 2 * PAD

    n = pl.program_id(0)
    t = pl.program_id(1)
    nt = pl.num_programs(1)
    slot = t % 2

    def halo_copy(t_idx, s):
        return pltpu.make_async_copy(
            xp_hbm.at[n, pl.ds(t_idx * TH, HALO), :, :],
            buf_ref.at[s],
            sem_ref.at[s])

    # Prime the pipeline at the first row tile of every batch element (keeps
    # the prefetch chain self-contained per n, so sharding the batch axis
    # across TensorCores stays correct), then prefetch the next tile's halo.
    @pl.when(t == 0)
    def _():
        halo_copy(t, slot).start()

    @pl.when(t + 1 < nt)
    def _():
        halo_copy(t + 1, 1 - slot).start()

    halo_copy(t, slot).wait()
    cur = buf_ref.at[slot]                          # (HALO, Wp, Cp) f32 view

    # ---- depthwise 7x7 conv: 49 taps read straight from the VMEM slab ------
    wdw = wdw_ref[...]                              # (7, 7, Cp), hoisted
    acc = jnp.zeros((TH, W, Cp), jnp.float32)
    for kh in range(KSIZE):
        for kw in range(KSIZE):
            tap = cur[pl.ds(kh, TH), pl.ds(COL0 + kw, W), :]
            acc = acc + tap * wdw[kh, kw, :]
    acc = acc + bdw_ref[0]

    # ---- LayerNorm over channels (channels_first semantics) ----------------
    # Padded channels of `acc` are exactly zero (zero weights/bias/input), so
    # channel sums over Cp equal sums over the real C channels; the mask keeps
    # the variance exact for the padded lanes.
    inv_c = jnp.float32(1.0 / C)
    u = jnp.sum(acc, axis=-1, keepdims=True) * inv_c
    d = acc - u
    if C != Cp:
        ch = jax.lax.broadcasted_iota(jnp.int32, (1, 1, Cp), 2)
        d = jnp.where(ch < C, d, 0.0)
    s = jnp.sum(d * d, axis=-1, keepdims=True) * inv_c
    xn = d * jax.lax.rsqrt(s + EPS_LN) * lnw_ref[0] + lnb_ref[0]

    # ---- pwconv1 -> GELU -> pwconv2 on the MXU (f32 acc) --------------------
    mm_dtype = w1_ref.dtype                         # f32 by default
    x2 = xn.reshape(TH * W, Cp).astype(mm_dtype)
    y1 = jnp.dot(x2, w1_ref[...], preferred_element_type=jnp.float32) + b1_ref[0]
    if approx_gelu:
        y1 = jax.nn.gelu(y1, approximate=True)      # tanh path -> EUP slot
    else:                                           # exact GELU (nn.GELU())
        y1 = 0.5 * y1 * (1.0 + jax.lax.erf(y1 * 0.7071067811865476))
    y2 = jnp.dot(y1.astype(mm_dtype), w2_ref[...],
                 preferred_element_type=jnp.float32) + b2_ref[0]

    # ---- layer scale + residual (sublane-aligned read at column PAD_L) -----
    y2 = (y2 * gamma_ref[0]).reshape(TH, W, Cp)
    x_in = cur[pl.ds(PAD, TH), pl.ds(PAD_L, W), :]
    o_ref[0] = (x_in + y2).astype(o_ref.dtype)


def acl_forward(x_nchw, params, *, tile_h=None, approx_gelu=False,
                bf16_matmul=False):
    N, C, H, W = x_nchw.shape
    Cp = _round_up(C, LANE)                         # lane-dense channel dim
    Hd = _round_up(4 * C, LANE)                     # lane-dense hidden dim
    Hp = H + 2 * PAD
    Wp = _round_up(W + PAD_L + PAD, 8)              # sublane-aligned width
    pad_r = Wp - W - PAD_L

    # ---- generation-aware VMEM budget + row-tile selection ------------------
    try:
        vmem_cap = int(pltpu.get_tpu_info().vmem_capacity_bytes)
    except Exception:                               # CPU / interpret fallback
        vmem_cap = 64 * 2**20                       # assume smallest (v7x)

    wbytes = 2 if bf16_matmul else 4

    def vmem_bytes(th):
        halo = 2 * (th + 2 * PAD) * Wp * Cp * 4             # manual dbl buffer
        outb = 2 * th * W * Cp * 4                          # pipelined out blk
        wts = 2 * (2 * Cp * Hd * wbytes + (KSIZE * KSIZE + 5) * Cp * 4 + Hd * 4)
        live = th * W * (4 * Cp + 2 * Hd) * 4               # f32 intermediates
        return halo + outb + wts + live

    budget = vmem_cap * 45 // 100
    divs = [d for d in range(1, H + 1) if H % d == 0]
    if tile_h is not None:
        cap = max(1, min(int(tile_h), H))
        divs = [d for d in divs if d <= cap]
    fit = [d for d in divs if vmem_bytes(d) <= budget]
    if not fit:                                     # fail fast, don't clamp
        raise ValueError(
            f"ACLV1 kernel does not fit VMEM: needs {vmem_bytes(divs[0])} B at "
            f"tile_h={divs[0]}, budget {budget} B (capacity {vmem_cap} B).")
    # Prefer M = tile_h*W a multiple of 256 (MXU row ingest), then 128.
    tile_h = max(fit, key=lambda d: ((d * W) % 256 == 0, (d * W) % 128 == 0, d))

    vmem_limit = int(min(vmem_cap * 7 // 8,
                         max(32 * 2**20, vmem_bytes(tile_h) * 3 // 2)))

    # ---- pad + transpose input, pad parameters ------------------------------
    # TODO(synk): when stacking multiple ACLV1 blocks, keep activations in
    # padded NHWC between blocks; the NCHW<->NHWC transposes and Cp pad/unpad
    # below are extra HBM passes that dominate for tiny C.
    x_nhwc = jnp.transpose(x_nchw, (0, 2, 3, 1)).astype(jnp.float32)
    xp = jnp.pad(x_nhwc, ((0, 0), (PAD, PAD), (PAD_L, pad_r), (0, Cp - C)))

    mm_dtype = jnp.bfloat16 if bf16_matmul else jnp.float32
    w_dw = _pad_axis(params["w_dw"], 2, Cp).astype(jnp.float32)     # (7,7,Cp)
    b_dw = _pad_axis(params["b_dw"], 0, Cp).reshape(1, Cp)
    ln_w = _pad_axis(params["ln_w"], 0, Cp).reshape(1, Cp)
    ln_b = _pad_axis(params["ln_b"], 0, Cp).reshape(1, Cp)
    w1 = jnp.pad(params["w1"], ((0, Cp - C), (0, Hd - 4 * C))).astype(mm_dtype)
    b1 = _pad_axis(params["b1"], 0, Hd).reshape(1, Hd)
    w2 = jnp.pad(params["w2"], ((0, Hd - 4 * C), (0, Cp - C))).astype(mm_dtype)
    b2 = _pad_axis(params["b2"], 0, Cp).reshape(1, Cp)
    gamma = _pad_axis(params["gamma"], 0, Cp).reshape(1, Cp)

    grid = (N, H // tile_h)

    cost = pl.CostEstimate(
        flops=int(2 * N * H * W * (KSIZE * KSIZE * Cp + 2 * Cp * Hd)),
        transcendentals=int(N * H * W * Hd),
        bytes_accessed=int(xp.size * 4 + N * H * W * Cp * 4
                           + 2 * Cp * Hd * wbytes
                           + (KSIZE * KSIZE + 5) * Cp * 4 + Hd * 4),
    )

    def const_spec(shape):
        return pl.BlockSpec(shape, lambda n, t: (0,) * len(shape))

    out_nhwc = pl.pallas_call(
        functools.partial(acl_kernel, C=C, approx_gelu=approx_gelu),
        out_shape=jax.ShapeDtypeStruct((N, H, W, Cp), jnp.float32),
        grid=grid,
        in_specs=[
            pl.BlockSpec(memory_space=pl.ANY),       # padded image stays in HBM
            const_spec((KSIZE, KSIZE, Cp)),          # w_dw
            const_spec((1, Cp)),                     # b_dw
            const_spec((1, Cp)),                     # ln_w
            const_spec((1, Cp)),                     # ln_b
            const_spec((Cp, Hd)),                    # w1
            const_spec((1, Hd)),                     # b1
            const_spec((Hd, Cp)),                    # w2
            const_spec((1, Cp)),                     # b2
            const_spec((1, Cp)),                     # gamma
        ],
        out_specs=pl.BlockSpec((1, tile_h, W, Cp), lambda n, t: (n, t, 0, 0)),
        scratch_shapes=[
            pltpu.VMEM((2, tile_h + 2 * PAD, Wp, Cp), jnp.float32),
            pltpu.SemaphoreType.DMA((2,)),
        ],
        compiler_params=pltpu.CompilerParams(
            dimension_semantics=("parallel", "arbitrary"),
            vmem_limit_bytes=vmem_limit,
        ),
        cost_estimate=cost,
    )(xp, w_dw, b_dw, ln_w, ln_b, w1, b1, w2, b2, gamma)

    out = out_nhwc[..., :C]                                  # drop channel pad
    return jnp.transpose(out, (0, 3, 1, 2)).astype(x_nchw.dtype)


def init_params(key, dim, layer_scale_init_value=1e-6):
    """Deterministic synthetic parameters matching ACLV1.__init__ shapes."""
    ks = jax.random.split(key, 8)
    # ACBlock(dim, dim, 7, padding=3, groups=dim, deploy=False): square 7x7 +
    # vertical 7x1 + horizontal 1x7 depthwise branches, each followed by BN.
    # TODO(synk): acb.ACBlock source not provided; BNs folded at their
    # inference-identity statistics (mean=0, var=1, weight=1, bias=0, eps=1e-5)
    # and the three branches fused into one 7x7 depthwise kernel.
    k_sq = 0.1 * jax.random.normal(ks[0], (KSIZE, KSIZE, dim), jnp.float32)
    k_ver = 0.1 * jax.random.normal(ks[1], (KSIZE, 1, dim), jnp.float32)
    k_hor = 0.1 * jax.random.normal(ks[2], (1, KSIZE, dim), jnp.float32)
    bn_scale = 1.0 / jnp.sqrt(1.0 + 1e-5)
    w_dw = bn_scale * k_sq
    w_dw = w_dw.at[:, PAD:PAD + 1, :].add(bn_scale * k_ver)
    w_dw = w_dw.at[PAD:PAD + 1, :, :].add(bn_scale * k_hor)
    b_dw = jnp.zeros((dim,), jnp.float32)

    ln_w = jnp.ones((dim,), jnp.float32)
    ln_b = jnp.zeros((dim,), jnp.float32)

    # pwconv1: Conv2d(dim, 4*dim, 1) stored as (C, 4C); pwconv2 as (4C, C).
    w1 = 0.2 * jax.random.normal(ks[3], (dim, 4 * dim), jnp.float32)
    b1 = 0.1 * jax.random.normal(ks[4], (4 * dim,), jnp.float32)
    w2 = 0.2 * jax.random.normal(ks[5], (4 * dim, dim), jnp.float32)
    b2 = 0.1 * jax.random.normal(ks[6], (dim,), jnp.float32)

    gamma = layer_scale_init_value * jnp.ones((dim,), jnp.float32)
    # drop_path = 0.0 (module default) -> Identity, so it is omitted.
    return dict(w_dw=w_dw, b_dw=b_dw, ln_w=ln_w, ln_b=ln_b,
                w1=w1, b1=b1, w2=w2, b2=b2, gamma=gamma)


def ref_forward(x_nchw, p):
    """Pure-JAX f32 reference of ACLV1.forward (exact GELU, f32 matmuls)."""
    N, C, H, W = x_nchw.shape
    kern = jnp.transpose(p["w_dw"], (2, 0, 1))[:, None, :, :]      # (C,1,7,7)
    y = jax.lax.conv_general_dilated(
        x_nchw, kern, (1, 1), [(PAD, PAD), (PAD, PAD)],
        dimension_numbers=("NCHW", "OIHW", "NCHW"), feature_group_count=C)
    y = y + p["b_dw"].reshape(1, C, 1, 1)
    u = y.mean(1, keepdims=True)
    s = ((y - u) ** 2).mean(1, keepdims=True)
    y = (y - u) / jnp.sqrt(s + EPS_LN)
    y = p["ln_w"].reshape(1, C, 1, 1) * y + p["ln_b"].reshape(1, C, 1, 1)
    y = jnp.einsum("nchw,cd->ndhw", y, p["w1"]) + p["b1"].reshape(1, -1, 1, 1)
    y = 0.5 * y * (1.0 + jax.lax.erf(y * 0.7071067811865476))      # exact GELU
    y = jnp.einsum("ndhw,dc->nchw", y, p["w2"]) + p["b2"].reshape(1, -1, 1, 1)
    y = y * p["gamma"].reshape(1, C, 1, 1)
    return x_nchw + y


if __name__ == "__main__":
    key = jax.random.PRNGKey(0)
    k_x, k_p = jax.random.split(key)

    N, C, H, W = 2, 4, 16, 16
    x = jax.random.normal(k_x, (N, C, H, W), jnp.float32)
    # layer_scale_init_value=1.0 (module default is 1e-6) so the fused
    # dwconv/LN/MLP branch is actually visible in the numerical check.
    params = init_params(k_p, C, layer_scale_init_value=1.0)

    # tile_h=8 forces 2 row tiles per image, exercising the halo double-buffer
    # prefetch path; tile_h=None would pick the full-image tile for this size.
    fwd = jax.jit(functools.partial(acl_forward, tile_h=8))
    out = jax.block_until_ready(fwd(x, params))

    ref = jax.block_until_ready(ref_forward(x, params))
    assert out.shape == (N, C, H, W)
    max_err = float(jnp.max(jnp.abs(out - ref)))
    assert jnp.allclose(out, ref, rtol=2e-2, atol=2e-2), max_err

    print("KERNEL_OK")
</pallas_src>

<mosaic_0001>
module attributes {stable_mosaic.version = 11 : i64} {
  func.func @acl_kernel(%arg0: i32, %arg1: i32, %arg2: memref<2x22x32x128xf32, #tpu.memory_space<any>>, %arg3: memref<7x7x128xf32, #tpu.memory_space<vmem>>, %arg4: memref<1x128xf32, #tpu.memory_space<vmem>>, %arg5: memref<1x128xf32, #tpu.memory_space<vmem>>, %arg6: memref<1x128xf32, #tpu.memory_space<vmem>>, %arg7: memref<128x128xf32, #tpu.memory_space<vmem>>, %arg8: memref<1x128xf32, #tpu.memory_space<vmem>>, %arg9: memref<128x128xf32, #tpu.memory_space<vmem>>, %arg10: memref<1x128xf32, #tpu.memory_space<vmem>>, %arg11: memref<1x128xf32, #tpu.memory_space<vmem>>, %arg12: memref<1x8x16x128xf32, #tpu.memory_space<vmem>>, %arg13: memref<2x14x32x128xf32, #tpu.memory_space<vmem>>, %arg14: memref<2x!tpu.dma_semaphore, #tpu.memory_space<semaphore_mem>>) attributes {dimension_semantics = [#tpu.dimension_semantics<parallel>, #tpu.dimension_semantics<arbitrary>], iteration_bounds = array<i64: 2, 2>, scalar_prefetch = 0 : i64, scratch_operands = 2 : i64, tpu.core_type = #tpu.core_type<tc>, window_params = [{}, {pipeline_mode = #tpu.pipeline_mode<synchronous>, transform_indices = @transform_1, window_bounds = array<i64: 7, 7, 128>}, {pipeline_mode = #tpu.pipeline_mode<synchronous>, transform_indices = @transform_2, window_bounds = array<i64: 1, 128>}, {pipeline_mode = #tpu.pipeline_mode<synchronous>, transform_indices = @transform_3, window_bounds = array<i64: 1, 128>}, {pipeline_mode = #tpu.pipeline_mode<synchronous>, transform_indices = @transform_4, window_bounds = array<i64: 1, 128>}, {pipeline_mode = #tpu.pipeline_mode<synchronous>, transform_indices = @transform_5, window_bounds = array<i64: 128, 128>}, {pipeline_mode = #tpu.pipeline_mode<synchronous>, transform_indices = @transform_6, window_bounds = array<i64: 1, 128>}, {pipeline_mode = #tpu.pipeline_mode<synchronous>, transform_indices = @transform_7, window_bounds = array<i64: 128, 128>}, {pipeline_mode = #tpu.pipeline_mode<synchronous>, transform_indices = @transform_8, window_bounds = array<i64: 1, 128>}, {pipeline_mode = #tpu.pipeline_mode<synchronous>, transform_indices = @transform_9, window_bounds = array<i64: 1, 128>}, {transform_indices = @transform_10, window_bounds = array<i64: 1, 8, 16, 128>}]} {
    %c2_i32 = arith.constant 2 : i32
    %c0_i32 = arith.constant 0 : i32
    %0 = arith.cmpi eq, %c2_i32, %c0_i32 : i32
    %c1_i32 = arith.constant 1 : i32
    %1 = arith.select %0, %c1_i32, %c2_i32 : i32
    %2 = arith.remsi %arg1, %1 : i32
    %c0_i32_0 = arith.constant 0 : i32
    %3 = arith.cmpi ne, %2, %c0_i32_0 : i32
    %c0_i32_1 = arith.constant 0 : i32
    %4 = arith.cmpi slt, %2, %c0_i32_1 : i32
    %c0_i32_2 = arith.constant 0 : i32
    %5 = arith.cmpi slt, %1, %c0_i32_2 : i32
    %6 = arith.xori %4, %5 : i1
    %7 = arith.andi %6, %3 : i1
    %8 = arith.addi %2, %1 : i32
    %9 = arith.select %7, %8, %2 : i32
    %c0_i32_3 = arith.constant 0 : i32
    %10 = arith.cmpi eq, %arg1, %c0_i32_3 : i32
    %11 = arith.extui %10 : i1 to i32
    %c0_i32_4 = arith.constant 0 : i32
    %12 = arith.cmpi ne, %11, %c0_i32_4 : i32
    scf.if %12 {
      %c8_i32_335 = arith.constant 8 : i32
      %541 = arith.muli %arg1, %c8_i32_335 : i32
      %c0_i32_336 = arith.constant 0 : i32
      %c0_i32_337 = arith.constant 0 : i32
      %542 = tpu.memref_slice %arg2[%arg0, %541, %c0_i32_336, %c0_i32_337] : memref<2x22x32x128xf32, #tpu.memory_space<any>> -> memref<1x14x32x128xf32, #tpu.memory_space<any>>
      %543 = tpu.memref_squeeze %542 : memref<1x14x32x128xf32, #tpu.memory_space<any>> -> memref<14x32x128xf32, #tpu.memory_space<any>>
      %c0_i32_338 = arith.constant 0 : i32
      %c0_i32_339 = arith.constant 0 : i32
      %c0_i32_340 = arith.constant 0 : i32
      %544 = tpu.memref_slice %arg13[%9, %c0_i32_338, %c0_i32_339, %c0_i32_340] : memref<2x14x32x128xf32, #tpu.memory_space<vmem>> -> memref<1x14x32x128xf32, #tpu.memory_space<vmem>>
      %545 = tpu.memref_squeeze %544 : memref<1x14x32x128xf32, #tpu.memory_space<vmem>> -> memref<14x32x128xf32, #tpu.memory_space<vmem>>
      %546 = tpu.memref_slice %arg14[%9] : memref<2x!tpu.dma_semaphore, #tpu.memory_space<semaphore_mem>> -> memref<1x!tpu.dma_semaphore, #tpu.memory_space<semaphore_mem>>
      %547 = tpu.memref_squeeze %546 : memref<1x!tpu.dma_semaphore, #tpu.memory_space<semaphore_mem>> -> memref<!tpu.dma_semaphore, #tpu.memory_space<semaphore_mem>>
      tpu.enqueue_dma source(%543 : memref<14x32x128xf32, #tpu.memory_space<any>>) target(%545 : memref<14x32x128xf32, #tpu.memory_space<vmem>>) target_semaphore(%547 : memref<!tpu.dma_semaphore, #tpu.memory_space<semaphore_mem>>)
    } else {
    }
    %c1_i32_5 = arith.constant 1 : i32
    %13 = arith.addi %arg1, %c1_i32_5 : i32
    %c2_i32_6 = arith.constant 2 : i32
    %14 = arith.cmpi slt, %13, %c2_i32_6 : i32
    %15 = arith.extui %14 : i1 to i32
    %c0_i32_7 = arith.constant 0 : i32
    %16 = arith.cmpi ne, %15, %c0_i32_7 : i32
    scf.if %16 {
      %c1_i32_335 = arith.constant 1 : i32
      %541 = arith.addi %arg1, %c1_i32_335 : i32
      %c1_i32_336 = arith.constant 1 : i32
      %542 = arith.subi %c1_i32_336, %9 : i32
      %c8_i32_337 = arith.constant 8 : i32
      %543 = arith.muli %541, %c8_i32_337 : i32
      %c0_i32_338 = arith.constant 0 : i32
      %c0_i32_339 = arith.constant 0 : i32
      %544 = tpu.memref_slice %arg2[%arg0, %543, %c0_i32_338, %c0_i32_339] : memref<2x22x32x128xf32, #tpu.memory_space<any>> -> memref<1x14x32x128xf32, #tpu.memory_space<any>>
      %545 = tpu.memref_squeeze %544 : memref<1x14x32x128xf32, #tpu.memory_space<any>> -> memref<14x32x128xf32, #tpu.memory_space<any>>
      %c0_i32_340 = arith.constant 0 : i32
      %c0_i32_341 = arith.constant 0 : i32
      %c0_i32_342 = arith.constant 0 : i32
      %546 = tpu.memref_slice %arg13[%542, %c0_i32_340, %c0_i32_341, %c0_i32_342] : memref<2x14x32x128xf32, #tpu.memory_space<vmem>> -> memref<1x14x32x128xf32, #tpu.memory_space<vmem>>
      %547 = tpu.memref_squeeze %546 : memref<1x14x32x128xf32, #tpu.memory_space<vmem>> -> memref<14x32x128xf32, #tpu.memory_space<vmem>>
      %548 = tpu.memref_slice %arg14[%542] : memref<2x!tpu.dma_semaphore, #tpu.memory_space<semaphore_mem>> -> memref<1x!tpu.dma_semaphore, #tpu.memory_space<semaphore_mem>>
      %549 = tpu.memref_squeeze %548 : memref<1x!tpu.dma_semaphore, #tpu.memory_space<semaphore_mem>> -> memref<!tpu.dma_semaphore, #tpu.memory_space<semaphore_mem>>
      tpu.enqueue_dma source(%545 : memref<14x32x128xf32, #tpu.memory_space<any>>) target(%547 : memref<14x32x128xf32, #tpu.memory_space<vmem>>) target_semaphore(%549 : memref<!tpu.dma_semaphore, #tpu.memory_space<semaphore_mem>>)
    } else {
    }
    %c8_i32 = arith.constant 8 : i32
    %17 = arith.muli %arg1, %c8_i32 : i32
    %c0_i32_8 = arith.constant 0 : i32
    %c0_i32_9 = arith.constant 0 : i32
    %18 = tpu.memref_slice %arg2[%arg0, %17, %c0_i32_8, %c0_i32_9] : memref<2x22x32x128xf32, #tpu.memory_space<any>> -> memref<1x14x32x128xf32, #tpu.memory_space<any>>
    %19 = tpu.memref_squeeze %18 : memref<1x14x32x128xf32, #tpu.memory_space<any>> -> memref<14x32x128xf32, #tpu.memory_space<any>>
    %c0_i32_10 = arith.constant 0 : i32
    %c0_i32_11 = arith.constant 0 : i32
    %c0_i32_12 = arith.constant 0 : i32
    %20 = tpu.memref_slice %arg13[%9, %c0_i32_10, %c0_i32_11, %c0_i32_12] : memref<2x14x32x128xf32, #tpu.memory_space<vmem>> -> memref<1x14x32x128xf32, #tpu.memory_space<vmem>>
    %21 = tpu.memref_squeeze %20 : memref<1x14x32x128xf32, #tpu.memory_space<vmem>> -> memref<14x32x128xf32, #tpu.memory_space<vmem>>
    %22 = tpu.memref_slice %arg14[%9] : memref<2x!tpu.dma_semaphore, #tpu.memory_space<semaphore_mem>> -> memref<1x!tpu.dma_semaphore, #tpu.memory_space<semaphore_mem>>
    %23 = tpu.memref_squeeze %22 : memref<1x!tpu.dma_semaphore, #tpu.memory_space<semaphore_mem>> -> memref<!tpu.dma_semaphore, #tpu.memory_space<semaphore_mem>>
    tpu.wait_dma2 semaphore(%23 : memref<!tpu.dma_semaphore, #tpu.memory_space<semaphore_mem>>) src(%19 : memref<14x32x128xf32, #tpu.memory_space<any>>) dst(%21 : memref<14x32x128xf32, #tpu.memory_space<vmem>>)
    %c0 = arith.constant 0 : index
    %c0_13 = arith.constant 0 : index
    %c0_14 = arith.constant 0 : index
    %24 = vector.load %arg3[%c0, %c0_13, %c0_14] : memref<7x7x128xf32, #tpu.memory_space<vmem>>, vector<7x7x128xf32>
    %cst = arith.constant 0.000000e+00 : f32
    %25 = vector.broadcast %cst : f32 to vector<8x16x128xf32>
    %c0_i32_15 = arith.constant 0 : i32
    %c0_i32_16 = arith.constant 0 : i32
    %c0_i32_17 = arith.constant 0 : i32
    %26 = tpu.memref_slice %arg13[%9, %c0_i32_15, %c0_i32_16, %c0_i32_17] : memref<2x14x32x128xf32, #tpu.memory_space<vmem>> -> memref<1x14x32x128xf32, #tpu.memory_space<vmem>>
    %27 = tpu.memref_squeeze %26 : memref<1x14x32x128xf32, #tpu.memory_space<vmem>> -> memref<14x32x128xf32, #tpu.memory_space<vmem>>
    %c0_18 = arith.constant 0 : index
    %c5 = arith.constant 5 : index
    %c0_19 = arith.constant 0 : index
    %28 = vector.load %27[%c0_18, %c5, %c0_19] : memref<14x32x128xf32, #tpu.memory_space<vmem>>, vector<8x16x128xf32>
    %29 = vector.extract_strided_slice %24 {offsets = [0, 0, 0], sizes = [1, 1, 128], strides = [1, 1, 1]} : vector<7x7x128xf32> to vector<1x1x128xf32>
    %30 = vector.shape_cast %29 : vector<1x1x128xf32> to vector<128xf32>
    %31 = vector.shape_cast %30 : vector<128xf32> to vector<1x1x128xf32>
    %32 = vector.broadcast %31 : vector<1x1x128xf32> to vector<8x16x128xf32>
    %33 = arith.mulf %28, %32 : vector<8x16x128xf32>
    %34 = arith.addf %25, %33 : vector<8x16x128xf32>
    %c0_i32_20 = arith.constant 0 : i32
    %c0_i32_21 = arith.constant 0 : i32
    %c0_i32_22 = arith.constant 0 : i32
    %35 = tpu.memref_slice %arg13[%9, %c0_i32_20, %c0_i32_21, %c0_i32_22] : memref<2x14x32x128xf32, #tpu.memory_space<vmem>> -> memref<1x14x32x128xf32, #tpu.memory_space<vmem>>
    %36 = tpu.memref_squeeze %35 : memref<1x14x32x128xf32, #tpu.memory_space<vmem>> -> memref<14x32x128xf32, #tpu.memory_space<vmem>>
    %c0_23 = arith.constant 0 : index
    %c6 = arith.constant 6 : index
    %c0_24 = arith.constant 0 : index
    %37 = vector.load %36[%c0_23, %c6, %c0_24] : memref<14x32x128xf32, #tpu.memory_space<vmem>>, vector<8x16x128xf32>
    %38 = vector.extract_strided_slice %24 {offsets = [0, 1, 0], sizes = [1, 1, 128], strides = [1, 1, 1]} : vector<7x7x128xf32> to vector<1x1x128xf32>
    %39 = vector.shape_cast %38 : vector<1x1x128xf32> to vector<128xf32>
    %40 = vector.shape_cast %39 : vector<128xf32> to vector<1x1x128xf32>
    %41 = vector.broadcast %40 : vector<1x1x128xf32> to vector<8x16x128xf32>
    %42 = arith.mulf %37, %41 : vector<8x16x128xf32>
    %43 = arith.addf %34, %42 : vector<8x16x128xf32>
    %c0_i32_25 = arith.constant 0 : i32
    %c0_i32_26 = arith.constant 0 : i32
    %c0_i32_27 = arith.constant 0 : i32
    %44 = tpu.memref_slice %arg13[%9, %c0_i32_25, %c0_i32_26, %c0_i32_27] : memref<2x14x32x128xf32, #tpu.memory_space<vmem>> -> memref<1x14x32x128xf32, #tpu.memory_space<vmem>>
    %45 = tpu.memref_squeeze %44 : memref<1x14x32x128xf32, #tpu.memory_space<vmem>> -> memref<14x32x128xf32, #tpu.memory_space<vmem>>
    %c0_28 = arith.constant 0 : index
    %c7 = arith.constant 7 : index
    %c0_29 = arith.constant 0 : index
    %46 = vector.load %45[%c0_28, %c7, %c0_29] : memref<14x32x128xf32, #tpu.memory_space<vmem>>, vector<8x16x128xf32>
    %47 = vector.extract_strided_slice %24 {offsets = [0, 2, 0], sizes = [1, 1, 128], strides = [1, 1, 1]} : vector<7x7x128xf32> to vector<1x1x128xf32>
    %48 = vector.shape_cast %47 : vector<1x1x128xf32> to vector<128xf32>
    %49 = vector.shape_cast %48 : vector<128xf32> to vector<1x1x128xf32>
    %50 = vector.broadcast %49 : vector<1x1x128xf32> to vector<8x16x128xf32>
    %51 = arith.mulf %46, %50 : vector<8x16x128xf32>
    %52 = arith.addf %43, %51 : vector<8x16x128xf32>
    %c0_i32_30 = arith.constant 0 : i32
    %c0_i32_31 = arith.constant 0 : i32
    %c0_i32_32 = arith.constant 0 : i32
    %53 = tpu.memref_slice %arg13[%9, %c0_i32_30, %c0_i32_31, %c0_i32_32] : memref<2x14x32x128xf32, #tpu.memory_space<vmem>> -> memref<1x14x32x128xf32, #tpu.memory_space<vmem>>
    %54 = tpu.memref_squeeze %53 : memref<1x14x32x128xf32, #tpu.memory_space<vmem>> -> memref<14x32x128xf32, #tpu.memory_space<vmem>>
    %c0_33 = arith.constant 0 : index
    %c8 = arith.constant 8 : index
    %c0_34 = arith.constant 0 : index
    %55 = vector.load %54[%c0_33, %c8, %c0_34] : memref<14x32x128xf32, #tpu.memory_space<vmem>>, vector<8x16x128xf32>
    %56 = vector.extract_strided_slice %24 {offsets = [0, 3, 0], sizes = [1, 1, 128], strides = [1, 1, 1]} : vector<7x7x128xf32> to vector<1x1x128xf32>
    %57 = vector.shape_cast %56 : vector<1x1x128xf32> to vector<128xf32>
    %58 = vector.shape_cast %57 : vector<128xf32> to vector<1x1x128xf32>
    %59 = vector.broadcast %58 : vector<1x1x128xf32> to vector<8x16x128xf32>
    %60 = arith.mulf %55, %59 : vector<8x16x128xf32>
    %61 = arith.addf %52, %60 : vector<8x16x128xf32>
    %c0_i32_35 = arith.constant 0 : i32
    %c0_i32_36 = arith.constant 0 : i32
    %c0_i32_37 = arith.constant 0 : i32
    %62 = tpu.memref_slice %arg13[%9, %c0_i32_35, %c0_i32_36, %c0_i32_37] : memref<2x14x32x128xf32, #tpu.memory_space<vmem>> -> memref<1x14x32x128xf32, #tpu.memory_space<vmem>>
    %63 = tpu.memref_squeeze %62 : memref<1x14x32x128xf32, #tpu.memory_space<vmem>> -> memref<14x32x128xf32, #tpu.memory_space<vmem>>
    %c0_38 = arith.constant 0 : index
    %c9 = arith.constant 9 : index
    %c0_39 = arith.constant 0 : index
    %64 = vector.load %63[%c0_38, %c9, %c0_39] : memref<14x32x128xf32, #tpu.memory_space<vmem>>, vector<8x16x128xf32>
    %65 = vector.extract_strided_slice %24 {offsets = [0, 4, 0], sizes = [1, 1, 128], strides = [1, 1, 1]} : vector<7x7x128xf32> to vector<1x1x128xf32>
    %66 = vector.shape_cast %65 : vector<1x1x128xf32> to vector<128xf32>
    %67 = vector.shape_cast %66 : vector<128xf32> to vector<1x1x128xf32>
    %68 = vector.broadcast %67 : vector<1x1x128xf32> to vector<8x16x128xf32>
    %69 = arith.mulf %64, %68 : vector<8x16x128xf32>
    %70 = arith.addf %61, %69 : vector<8x16x128xf32>
    %c0_i32_40 = arith.constant 0 : i32
    %c0_i32_41 = arith.constant 0 : i32
    %c0_i32_42 = arith.constant 0 : i32
    %71 = tpu.memref_slice %arg13[%9, %c0_i32_40, %c0_i32_41, %c0_i32_42] : memref<2x14x32x128xf32, #tpu.memory_space<vmem>> -> memref<1x14x32x128xf32, #tpu.memory_space<vmem>>
    %72 = tpu.memref_squeeze %71 : memref<1x14x32x128xf32, #tpu.memory_space<vmem>> -> memref<14x32x128xf32, #tpu.memory_space<vmem>>
    %c0_43 = arith.constant 0 : index
    %c10 = arith.constant 10 : index
    %c0_44 = arith.constant 0 : index
    %73 = vector.load %72[%c0_43, %c10, %c0_44] : memref<14x32x128xf32, #tpu.memory_space<vmem>>, vector<8x16x128xf32>
    %74 = vector.extract_strided_slice %24 {offsets = [0, 5, 0], sizes = [1, 1, 128], strides = [1, 1, 1]} : vector<7x7x128xf32> to vector<1x1x128xf32>
    %75 = vector.shape_cast %74 : vector<1x1x128xf32> to vector<128xf32>
    %76 = vector.shape_cast %75 : vector<128xf32> to vector<1x1x128xf32>
    %77 = vector.broadcast %76 : vector<1x1x128xf32> to vector<8x16x128xf32>
    %78 = arith.mulf %73, %77 : vector<8x16x128xf32>
    %79 = arith.addf %70, %78 : vector<8x16x128xf32>
    %c0_i32_45 = arith.constant 0 : i32
    %c0_i32_46 = arith.constant 0 : i32
    %c0_i32_47 = arith.constant 0 : i32
    %80 = tpu.memref_slice %arg13[%9, %c0_i32_45, %c0_i32_46, %c0_i32_47] : memref<2x14x32x128xf32, #tpu.memory_space<vmem>> -> memref<1x14x32x128xf32, #tpu.memory_space<vmem>>
    %81 = tpu.memref_squeeze %80 : memref<1x14x32x128xf32, #tpu.memory_space<vmem>> -> memref<14x32x128xf32, #tpu.memory_space<vmem>>
    %c0_48 = arith.constant 0 : index
    %c11 = arith.constant 11 : index
    %c0_49 = arith.constant 0 : index
    %82 = vector.load %81[%c0_48, %c11, %c0_49] : memref<14x32x128xf32, #tpu.memory_space<vmem>>, vector<8x16x128xf32>
    %83 = vector.extract_strided_slice %24 {offsets = [0, 6, 0], sizes = [1, 1, 128], strides = [1, 1, 1]} : vector<7x7x128xf32> to vector<1x1x128xf32>
    %84 = vector.shape_cast %83 : vector<1x1x128xf32> to vector<128xf32>
    %85 = vector.shape_cast %84 : vector<128xf32> to vector<1x1x128xf32>
    %86 = vector.broadcast %85 : vector<1x1x128xf32> to vector<8x16x128xf32>
    %87 = arith.mulf %82, %86 : vector<8x16x128xf32>
    %88 = arith.addf %79, %87 : vector<8x16x128xf32>
    %c0_i32_50 = arith.constant 0 : i32
    %c0_i32_51 = arith.constant 0 : i32
    %c0_i32_52 = arith.constant 0 : i32
    %89 = tpu.memref_slice %arg13[%9, %c0_i32_50, %c0_i32_51, %c0_i32_52] : memref<2x14x32x128xf32, #tpu.memory_space<vmem>> -> memref<1x14x32x128xf32, #tpu.memory_space<vmem>>
    %90 = tpu.memref_squeeze %89 : memref<1x14x32x128xf32, #tpu.memory_space<vmem>> -> memref<14x32x128xf32, #tpu.memory_space<vmem>>
    %c1 = arith.constant 1 : index
    %c5_53 = arith.constant 5 : index
    %c0_54 = arith.constant 0 : index
    %91 = vector.load %90[%c1, %c5_53, %c0_54] : memref<14x32x128xf32, #tpu.memory_space<vmem>>, vector<8x16x128xf32>
    %92 = vector.extract_strided_slice %24 {offsets = [1, 0, 0], sizes = [1, 1, 128], strides = [1, 1, 1]} : vector<7x7x128xf32> to vector<1x1x128xf32>
    %93 = vector.shape_cast %92 : vector<1x1x128xf32> to vector<128xf32>
    %94 = vector.shape_cast %93 : vector<128xf32> to vector<1x1x128xf32>
    %95 = vector.broadcast %94 : vector<1x1x128xf32> to vector<8x16x128xf32>
    %96 = arith.mulf %91, %95 : vector<8x16x128xf32>
    %97 = arith.addf %88, %96 : vector<8x16x128xf32>
    %c0_i32_55 = arith.constant 0 : i32
    %c0_i32_56 = arith.constant 0 : i32
    %c0_i32_57 = arith.constant 0 : i32
    %98 = tpu.memref_slice %arg13[%9, %c0_i32_55, %c0_i32_56, %c0_i32_57] : memref<2x14x32x128xf32, #tpu.memory_space<vmem>> -> memref<1x14x32x128xf32, #tpu.memory_space<vmem>>
    %99 = tpu.memref_squeeze %98 : memref<1x14x32x128xf32, #tpu.memory_space<vmem>> -> memref<14x32x128xf32, #tpu.memory_space<vmem>>
    %c1_58 = arith.constant 1 : index
    %c6_59 = arith.constant 6 : index
    %c0_60 = arith.constant 0 : index
    %100 = vector.load %99[%c1_58, %c6_59, %c0_60] : memref<14x32x128xf32, #tpu.memory_space<vmem>>, vector<8x16x128xf32>
    %101 = vector.extract_strided_slice %24 {offsets = [1, 1, 0], sizes = [1, 1, 128], strides = [1, 1, 1]} : vector<7x7x128xf32> to vector<1x1x128xf32>
    %102 = vector.shape_cast %101 : vector<1x1x128xf32> to vector<128xf32>
    %103 = vector.shape_cast %102 : vector<128xf32> to vector<1x1x128xf32>
    %104 = vector.broadcast %103 : vector<1x1x128xf32> to vector<8x16x128xf32>
    %105 = arith.mulf %100, %104 : vector<8x16x128xf32>
    %106 = arith.addf %97, %105 : vector<8x16x128xf32>
    %c0_i32_61 = arith.constant 0 : i32
    %c0_i32_62 = arith.constant 0 : i32
    %c0_i32_63 = arith.constant 0 : i32
    %107 = tpu.memref_slice %arg13[%9, %c0_i32_61, %c0_i32_62, %c0_i32_63] : memref<2x14x32x128xf32, #tpu.memory_space<vmem>> -> memref<1x14x32x128xf32, #tpu.memory_space<vmem>>
    %108 = tpu.memref_squeeze %107 : memref<1x14x32x128xf32, #tpu.memory_space<vmem>> -> memref<14x32x128xf32, #tpu.memory_space<vmem>>
    %c1_64 = arith.constant 1 : index
    %c7_65 = arith.constant 7 : index
    %c0_66 = arith.constant 0 : index
    %109 = vector.load %108[%c1_64, %c7_65, %c0_66] : memref<14x32x128xf32, #tpu.memory_space<vmem>>, vector<8x16x128xf32>
    %110 = vector.extract_strided_slice %24 {offsets = [1, 2, 0], sizes = [1, 1, 128], strides = [1, 1, 1]} : vector<7x7x128xf32> to vector<1x1x128xf32>
    %111 = vector.shape_cast %110 : vector<1x1x128xf32> to vector<128xf32>
    %112 = vector.shape_cast %111 : vector<128xf32> to vector<1x1x128xf32>
    %113 = vector.broadcast %112 : vector<1x1x128xf32> to vector<8x16x128xf32>
    %114 = arith.mulf %109, %113 : vector<8x16x128xf32>
    %115 = arith.addf %106, %114 : vector<8x16x128xf32>
    %c0_i32_67 = arith.constant 0 : i32
    %c0_i32_68 = arith.constant 0 : i32
    %c0_i32_69 = arith.constant 0 : i32
    %116 = tpu.memref_slice %arg13[%9, %c0_i32_67, %c0_i32_68, %c0_i32_69] : memref<2x14x32x128xf32, #tpu.memory_space<vmem>> -> memref<1x14x32x128xf32, #tpu.memory_space<vmem>>
    %117 = tpu.memref_squeeze %116 : memref<1x14x32x128xf32, #tpu.memory_space<vmem>> -> memref<14x32x128xf32, #tpu.memory_space<vmem>>
    %c1_70 = arith.constant 1 : index
    %c8_71 = arith.constant 8 : index
    %c0_72 = arith.constant 0 : index
    %118 = vector.load %117[%c1_70, %c8_71, %c0_72] : memref<14x32x128xf32, #tpu.memory_space<vmem>>, vector<8x16x128xf32>
    %119 = vector.extract_strided_slice %24 {offsets = [1, 3, 0], sizes = [1, 1, 128], strides = [1, 1, 1]} : vector<7x7x128xf32> to vector<1x1x128xf32>
    %120 = vector.shape_cast %119 : vector<1x1x128xf32> to vector<128xf32>
    %121 = vector.shape_cast %120 : vector<128xf32> to vector<1x1x128xf32>
    %122 = vector.broadcast %121 : vector<1x1x128xf32> to vector<8x16x128xf32>
    %123 = arith.mulf %118, %122 : vector<8x16x128xf32>
    %124 = arith.addf %115, %123 : vector<8x16x128xf32>
    %c0_i32_73 = arith.constant 0 : i32
    %c0_i32_74 = arith.constant 0 : i32
    %c0_i32_75 = arith.constant 0 : i32
    %125 = tpu.memref_slice %arg13[%9, %c0_i32_73, %c0_i32_74, %c0_i32_75] : memref<2x14x32x128xf32, #tpu.memory_space<vmem>> -> memref<1x14x32x128xf32, #tpu.memory_space<vmem>>
    %126 = tpu.memref_squeeze %125 : memref<1x14x32x128xf32, #tpu.memory_space<vmem>> -> memref<14x32x128xf32, #tpu.memory_space<vmem>>
    %c1_76 = arith.constant 1 : index
    %c9_77 = arith.constant 9 : index
    %c0_78 = arith.constant 0 : index
    %127 = vector.load %126[%c1_76, %c9_77, %c0_78] : memref<14x32x128xf32, #tpu.memory_space<vmem>>, vector<8x16x128xf32>
    %128 = vector.extract_strided_slice %24 {offsets = [1, 4, 0], sizes = [1, 1, 128], strides = [1, 1, 1]} : vector<7x7x128xf32> to vector<1x1x128xf32>
    %129 = vector.shape_cast %128 : vector<1x1x128xf32> to vector<128xf32>
    %130 = vector.shape_cast %129 : vector<128xf32> to vector<1x1x128xf32>
    %131 = vector.broadcast %130 : vector<1x1x128xf32> to vector<8x16x128xf32>
    %132 = arith.mulf %127, %131 : vector<8x16x128xf32>
    %133 = arith.addf %124, %132 : vector<8x16x128xf32>
    %c0_i32_79 = arith.constant 0 : i32
    %c0_i32_80 = arith.constant 0 : i32
    %c0_i32_81 = arith.constant 0 : i32
    %134 = tpu.memref_slice %arg13[%9, %c0_i32_79, %c0_i32_80, %c0_i32_81] : memref<2x14x32x128xf32, #tpu.memory_space<vmem>> -> memref<1x14x32x128xf32, #tpu.memory_space<vmem>>
    %135 = tpu.memref_squeeze %134 : memref<1x14x32x128xf32, #tpu.memory_space<vmem>> -> memref<14x32x128xf32, #tpu.memory_space<vmem>>
    %c1_82 = arith.constant 1 : index
    %c10_83 = arith.constant 10 : index
    %c0_84 = arith.constant 0 : index
    %136 = vector.load %135[%c1_82, %c10_83, %c0_84] : memref<14x32x128xf32, #tpu.memory_space<vmem>>, vector<8x16x128xf32>
    %137 = vector.extract_strided_slice %24 {offsets = [1, 5, 0], sizes = [1, 1, 128], strides = [1, 1, 1]} : vector<7x7x128xf32> to vector<1x1x128xf32>
    %138 = vector.shape_cast %137 : vector<1x1x128xf32> to vector<128xf32>
    %139 = vector.shape_cast %138 : vector<128xf32> to vector<1x1x128xf32>
    %140 = vector.broadcast %139 : vector<1x1x128xf32> to vector<8x16x128xf32>
    %141 = arith.mulf %136, %140 : vector<8x16x128xf32>
    %142 = arith.addf %133, %141 : vector<8x16x128xf32>
    %c0_i32_85 = arith.constant 0 : i32
    %c0_i32_86 = arith.constant 0 : i32
    %c0_i32_87 = arith.constant 0 : i32
    %143 = tpu.memref_slice %arg13[%9, %c0_i32_85, %c0_i32_86, %c0_i32_87] : memref<2x14x32x128xf32, #tpu.memory_space<vmem>> -> memref<1x14x32x128xf32, #tpu.memory_space<vmem>>
    %144 = tpu.memref_squeeze %143 : memref<1x14x32x128xf32, #tpu.memory_space<vmem>> -> memref<14x32x128xf32, #tpu.memory_space<vmem>>
    %c1_88 = arith.constant 1 : index
    %c11_89 = arith.constant 11 : index
    %c0_90 = arith.constant 0 : index
    %145 = vector.load %144[%c1_88, %c11_89, %c0_90] : memref<14x32x128xf32, #tpu.memory_space<vmem>>, vector<8x16x128xf32>
    %146 = vector.extract_strided_slice %24 {offsets = [1, 6, 0], sizes = [1, 1, 128], strides = [1, 1, 1]} : vector<7x7x128xf32> to vector<1x1x128xf32>
    %147 = vector.shape_cast %146 : vector<1x1x128xf32> to vector<128xf32>
    %148 = vector.shape_cast %147 : vector<128xf32> to vector<1x1x128xf32>
    %149 = vector.broadcast %148 : vector<1x1x128xf32> to vector<8x16x128xf32>
    %150 = arith.mulf %145, %149 : vector<8x16x128xf32>
    %151 = arith.addf %142, %150 : vector<8x16x128xf32>
    %c0_i32_91 = arith.constant 0 : i32
    %c0_i32_92 = arith.constant 0 : i32
    %c0_i32_93 = arith.constant 0 : i32
    %152 = tpu.memref_slice %arg13[%9, %c0_i32_91, %c0_i32_92, %c0_i32_93] : memref<2x14x32x128xf32, #tpu.memory_space<vmem>> -> memref<1x14x32x128xf32, #tpu.memory_space<vmem>>
    %153 = tpu.memref_squeeze %152 : memref<1x14x32x128xf32, #tpu.memory_space<vmem>> -> memref<14x32x128xf32, #tpu.memory_space<vmem>>
    %c2 = arith.constant 2 : index
    %c5_94 = arith.constant 5 : index
    %c0_95 = arith.constant 0 : index
    %154 = vector.load %153[%c2, %c5_94, %c0_95] : memref<14x32x128xf32, #tpu.memory_space<vmem>>, vector<8x16x128xf32>
    %155 = vector.extract_strided_slice %24 {offsets = [2, 0, 0], sizes = [1, 1, 128], strides = [1, 1, 1]} : vector<7x7x128xf32> to vector<1x1x128xf32>
    %156 = vector.shape_cast %155 : vector<1x1x128xf32> to vector<128xf32>
    %157 = vector.shape_cast %156 : vector<128xf32> to vector<1x1x128xf32>
    %158 = vector.broadcast %157 : vector<1x1x128xf32> to vector<8x16x128xf32>
    %159 = arith.mulf %154, %158 : vector<8x16x128xf32>
    %160 = arith.addf %151, %159 : vector<8x16x128xf32>
    %c0_i32_96 = arith.constant 0 : i32
    %c0_i32_97 = arith.constant 0 : i32
    %c0_i32_98 = arith.constant 0 : i32
    %161 = tpu.memref_slice %arg13[%9, %c0_i32_96, %c0_i32_97, %c0_i32_98] : memref<2x14x32x128xf32, #tpu.memory_space<vmem>> -> memref<1x14x32x128xf32, #tpu.memory_space<vmem>>
    %162 = tpu.memref_squeeze %161 : memref<1x14x32x128xf32, #tpu.memory_space<vmem>> -> memref<14x32x128xf32, #tpu.memory_space<vmem>>
    %c2_99 = arith.constant 2 : index
    %c6_100 = arith.constant 6 : index
    %c0_101 = arith.constant 0 : index
    %163 = vector.load %162[%c2_99, %c6_100, %c0_101] : memref<14x32x128xf32, #tpu.memory_space<vmem>>, vector<8x16x128xf32>
    %164 = vector.extract_strided_slice %24 {offsets = [2, 1, 0], sizes = [1, 1, 128], strides = [1, 1, 1]} : vector<7x7x128xf32> to vector<1x1x128xf32>
    %165 = vector.shape_cast %164 : vector<1x1x128xf32> to vector<128xf32>
    %166 = vector.shape_cast %165 : vector<128xf32> to vector<1x1x128xf32>
    %167 = vector.broadcast %166 : vector<1x1x128xf32> to vector<8x16x128xf32>
    %168 = arith.mulf %163, %167 : vector<8x16x128xf32>
    %169 = arith.addf %160, %168 : vector<8x16x128xf32>
    %c0_i32_102 = arith.constant 0 : i32
    %c0_i32_103 = arith.constant 0 : i32
    %c0_i32_104 = arith.constant 0 : i32
    %170 = tpu.memref_slice %arg13[%9, %c0_i32_102, %c0_i32_103, %c0_i32_104] : memref<2x14x32x128xf32, #tpu.memory_space<vmem>> -> memref<1x14x32x128xf32, #tpu.memory_space<vmem>>
    %171 = tpu.memref_squeeze %170 : memref<1x14x32x128xf32, #tpu.memory_space<vmem>> -> memref<14x32x128xf32, #tpu.memory_space<vmem>>
    %c2_105 = arith.constant 2 : index
    %c7_106 = arith.constant 7 : index
    %c0_107 = arith.constant 0 : index
    %172 = vector.load %171[%c2_105, %c7_106, %c0_107] : memref<14x32x128xf32, #tpu.memory_space<vmem>>, vector<8x16x128xf32>
    %173 = vector.extract_strided_slice %24 {offsets = [2, 2, 0], sizes = [1, 1, 128], strides = [1, 1, 1]} : vector<7x7x128xf32> to vector<1x1x128xf32>
    %174 = vector.shape_cast %173 : vector<1x1x128xf32> to vector<128xf32>
    %175 = vector.shape_cast %174 : vector<128xf32> to vector<1x1x128xf32>
    %176 = vector.broadcast %175 : vector<1x1x128xf32> to vector<8x16x128xf32>
    %177 = arith.mulf %172, %176 : vector<8x16x128xf32>
    %178 = arith.addf %169, %177 : vector<8x16x128xf32>
    %c0_i32_108 = arith.constant 0 : i32
    %c0_i32_109 = arith.constant 0 : i32
    %c0_i32_110 = arith.constant 0 : i32
    %179 = tpu.memref_slice %arg13[%9, %c0_i32_108, %c0_i32_109, %c0_i32_110] : memref<2x14x32x128xf32, #tpu.memory_space<vmem>> -> memref<1x14x32x128xf32, #tpu.memory_space<vmem>>
    %180 = tpu.memref_squeeze %179 : memref<1x14x32x128xf32, #tpu.memory_space<vmem>> -> memref<14x32x128xf32, #tpu.memory_space<vmem>>
    %c2_111 = arith.constant 2 : index
    %c8_112 = arith.constant 8 : index
    %c0_113 = arith.constant 0 : index
    %181 = vector.load %180[%c2_111, %c8_112, %c0_113] : memref<14x32x128xf32, #tpu.memory_space<vmem>>, vector<8x16x128xf32>
    %182 = vector.extract_strided_slice %24 {offsets = [2, 3, 0], sizes = [1, 1, 128], strides = [1, 1, 1]} : vector<7x7x128xf32> to vector<1x1x128xf32>
    %183 = vector.shape_cast %182 : vector<1x1x128xf32> to vector<128xf32>
    %184 = vector.shape_cast %183 : vector<128xf32> to vector<1x1x128xf32>
    %185 = vector.broadcast %184 : vector<1x1x128xf32> to vector<8x16x128xf32>
    %186 = arith.mulf %181, %185 : vector<8x16x128xf32>
    %187 = arith.addf %178, %186 : vector<8x16x128xf32>
    %c0_i32_114 = arith.constant 0 : i32
    %c0_i32_115 = arith.constant 0 : i32
    %c0_i32_116 = arith.constant 0 : i32
    %188 = tpu.memref_slice %arg13[%9, %c0_i32_114, %c0_i32_115, %c0_i32_116] : memref<2x14x32x128xf32, #tpu.memory_space<vmem>> -> memref<1x14x32x128xf32, #tpu.memory_space<vmem>>
    %189 = tpu.memref_squeeze %188 : memref<1x14x32x128xf32, #tpu.memory_space<vmem>> -> memref<14x32x128xf32, #tpu.memory_space<vmem>>
    %c2_117 = arith.constant 2 : index
    %c9_118 = arith.constant 9 : index
    %c0_119 = arith.constant 0 : index
    %190 = vector.load %189[%c2_117, %c9_118, %c0_119] : memref<14x32x128xf32, #tpu.memory_space<vmem>>, vector<8x16x128xf32>
    %191 = vector.extract_strided_slice %24 {offsets = [2, 4, 0], sizes = [1, 1, 128], strides = [1, 1, 1]} : vector<7x7x128xf32> to vector<1x1x128xf32>
    %192 = vector.shape_cast %191 : vector<1x1x128xf32> to vector<128xf32>
    %193 = vector.shape_cast %192 : vector<128xf32> to vector<1x1x128xf32>
    %194 = vector.broadcast %193 : vector<1x1x128xf32> to vector<8x16x128xf32>
    %195 = arith.mulf %190, %194 : vector<8x16x128xf32>
    %196 = arith.addf %187, %195 : vector<8x16x128xf32>
    %c0_i32_120 = arith.constant 0 : i32
    %c0_i32_121 = arith.constant 0 : i32
    %c0_i32_122 = arith.constant 0 : i32
    %197 = tpu.memref_slice %arg13[%9, %c0_i32_120, %c0_i32_121, %c0_i32_122] : memref<2x14x32x128xf32, #tpu.memory_space<vmem>> -> memref<1x14x32x128xf32, #tpu.memory_space<vmem>>
    %198 = tpu.memref_squeeze %197 : memref<1x14x32x128xf32, #tpu.memory_space<vmem>> -> memref<14x32x128xf32, #tpu.memory_space<vmem>>
    %c2_123 = arith.constant 2 : index
    %c10_124 = arith.constant 10 : index
    %c0_125 = arith.constant 0 : index
    %199 = vector.load %198[%c2_123, %c10_124, %c0_125] : memref<14x32x128xf32, #tpu.memory_space<vmem>>, vector<8x16x128xf32>
    %200 = vector.extract_strided_slice %24 {offsets = [2, 5, 0], sizes = [1, 1, 128], strides = [1, 1, 1]} : vector<7x7x128xf32> to vector<1x1x128xf32>
    %201 = vector.shape_cast %200 : vector<1x1x128xf32> to vector<128xf32>
    %202 = vector.shape_cast %201 : vector<128xf32> to vector<1x1x128xf32>
    %203 = vector.broadcast %202 : vector<1x1x128xf32> to vector<8x16x128xf32>
    %204 = arith.mulf %199, %203 : vector<8x16x128xf32>
    %205 = arith.addf %196, %204 : vector<8x16x128xf32>
    %c0_i32_126 = arith.constant 0 : i32
    %c0_i32_127 = arith.constant 0 : i32
    %c0_i32_128 = arith.constant 0 : i32
    %206 = tpu.memref_slice %arg13[%9, %c0_i32_126, %c0_i32_127, %c0_i32_128] : memref<2x14x32x128xf32, #tpu.memory_space<vmem>> -> memref<1x14x32x128xf32, #tpu.memory_space<vmem>>
    %207 = tpu.memref_squeeze %206 : memref<1x14x32x128xf32, #tpu.memory_space<vmem>> -> memref<14x32x128xf32, #tpu.memory_space<vmem>>
    %c2_129 = arith.constant 2 : index
    %c11_130 = arith.constant 11 : index
    %c0_131 = arith.constant 0 : index
    %208 = vector.load %207[%c2_129, %c11_130, %c0_131] : memref<14x32x128xf32, #tpu.memory_space<vmem>>, vector<8x16x128xf32>
    %209 = vector.extract_strided_slice %24 {offsets = [2, 6, 0], sizes = [1, 1, 128], strides = [1, 1, 1]} : vector<7x7x128xf32> to vector<1x1x128xf32>
    %210 = vector.shape_cast %209 : vector<1x1x128xf32> to vector<128xf32>
    %211 = vector.shape_cast %210 : vector<128xf32> to vector<1x1x128xf32>
    %212 = vector.broadcast %211 : vector<1x1x128xf32> to vector<8x16x128xf32>
    %213 = arith.mulf %208, %212 : vector<8x16x128xf32>
    %214 = arith.addf %205, %213 : vector<8x16x128xf32>
    %c0_i32_132 = arith.constant 0 : i32
    %c0_i32_133 = arith.constant 0 : i32
    %c0_i32_134 = arith.constant 0 : i32
    %215 = tpu.memref_slice %arg13[%9, %c0_i32_132, %c0_i32_133, %c0_i32_134] : memref<2x14x32x128xf32, #tpu.memory_space<vmem>> -> memref<1x14x32x128xf32, #tpu.memory_space<vmem>>
    %216 = tpu.memref_squeeze %215 : memref<1x14x32x128xf32, #tpu.memory_space<vmem>> -> memref<14x32x128xf32, #tpu.memory_space<vmem>>
    %c3 = arith.constant 3 : index
    %c5_135 = arith.constant 5 : index
    %c0_136 = arith.constant 0 : index
    %217 = vector.load %216[%c3, %c5_135, %c0_136] : memref<14x32x128xf32, #tpu.memory_space<vmem>>, vector<8x16x128xf32>
    %218 = vector.extract_strided_slice %24 {offsets = [3, 0, 0], sizes = [1, 1, 128], strides = [1, 1, 1]} : vector<7x7x128xf32> to vector<1x1x128xf32>
    %219 = vector.shape_cast %218 : vector<1x1x128xf32> to vector<128xf32>
    %220 = vector.shape_cast %219 : vector<128xf32> to vector<1x1x128xf32>
    %221 = vector.broadcast %220 : vector<1x1x128xf32> to vector<8x16x128xf32>
    %222 = arith.mulf %217, %221 : vector<8x16x128xf32>
    %223 = arith.addf %214, %222 : vector<8x16x128xf32>
    %c0_i32_137 = arith.constant 0 : i32
    %c0_i32_138 = arith.constant 0 : i32
    %c0_i32_139 = arith.constant 0 : i32
    %224 = tpu.memref_slice %arg13[%9, %c0_i32_137, %c0_i32_138, %c0_i32_139] : memref<2x14x32x128xf32, #tpu.memory_space<vmem>> -> memref<1x14x32x128xf32, #tpu.memory_space<vmem>>
    %225 = tpu.memref_squeeze %224 : memref<1x14x32x128xf32, #tpu.memory_space<vmem>> -> memref<14x32x128xf32, #tpu.memory_space<vmem>>
    %c3_140 = arith.constant 3 : index
    %c6_141 = arith.constant 6 : index
    %c0_142 = arith.constant 0 : index
    %226 = vector.load %225[%c3_140, %c6_141, %c0_142] : memref<14x32x128xf32, #tpu.memory_space<vmem>>, vector<8x16x128xf32>
    %227 = vector.extract_strided_slice %24 {offsets = [3, 1, 0], sizes = [1, 1, 128], strides = [1, 1, 1]} : vector<7x7x128xf32> to vector<1x1x128xf32>
    %228 = vector.shape_cast %227 : vector<1x1x128xf32> to vector<128xf32>
    %229 = vector.shape_cast %228 : vector<128xf32> to vector<1x1x128xf32>
    %230 = vector.broadcast %229 : vector<1x1x128xf32> to vector<8x16x128xf32>
    %231 = arith.mulf %226, %230 : vector<8x16x128xf32>
    %232 = arith.addf %223, %231 : vector<8x16x128xf32>
    %c0_i32_143 = arith.constant 0 : i32
    %c0_i32_144 = arith.constant 0 : i32
    %c0_i32_145 = arith.constant 0 : i32
    %233 = tpu.memref_slice %arg13[%9, %c0_i32_143, %c0_i32_144, %c0_i32_145] : memref<2x14x32x128xf32, #tpu.memory_space<vmem>> -> memref<1x14x32x128xf32, #tpu.memory_space<vmem>>
    %234 = tpu.memref_squeeze %233 : memref<1x14x32x128xf32, #tpu.memory_space<vmem>> -> memref<14x32x128xf32, #tpu.memory_space<vmem>>
    %c3_146 = arith.constant 3 : index
    %c7_147 = arith.constant 7 : index
    %c0_148 = arith.constant 0 : index
    %235 = vector.load %234[%c3_146, %c7_147, %c0_148] : memref<14x32x128xf32, #tpu.memory_space<vmem>>, vector<8x16x128xf32>
    %236 = vector.extract_strided_slice %24 {offsets = [3, 2, 0], sizes = [1, 1, 128], strides = [1, 1, 1]} : vector<7x7x128xf32> to vector<1x1x128xf32>
    %237 = vector.shape_cast %236 : vector<1x1x128xf32> to vector<128xf32>
    %238 = vector.shape_cast %237 : vector<128xf32> to vector<1x1x128xf32>
    %239 = vector.broadcast %238 : vector<1x1x128xf32> to vector<8x16x128xf32>
    %240 = arith.mulf %235, %239 : vector<8x16x128xf32>
    %241 = arith.addf %232, %240 : vector<8x16x128xf32>
    %c0_i32_149 = arith.constant 0 : i32
    %c0_i32_150 = arith.constant 0 : i32
    %c0_i32_151 = arith.constant 0 : i32
    %242 = tpu.memref_slice %arg13[%9, %c0_i32_149, %c0_i32_150, %c0_i32_151] : memref<2x14x32x128xf32, #tpu.memory_space<vmem>> -> memref<1x14x32x128xf32, #tpu.memory_space<vmem>>
    %243 = tpu.memref_squeeze %242 : memref<1x14x32x128xf32, #tpu.memory_space<vmem>> -> memref<14x32x128xf32, #tpu.memory_space<vmem>>
    %c3_152 = arith.constant 3 : index
    %c8_153 = arith.constant 8 : index
    %c0_154 = arith.constant 0 : index
    %244 = vector.load %243[%c3_152, %c8_153, %c0_154] : memref<14x32x128xf32, #tpu.memory_space<vmem>>, vector<8x16x128xf32>
    %245 = vector.extract_strided_slice %24 {offsets = [3, 3, 0], sizes = [1, 1, 128], strides = [1, 1, 1]} : vector<7x7x128xf32> to vector<1x1x128xf32>
    %246 = vector.shape_cast %245 : vector<1x1x128xf32> to vector<128xf32>
    %247 = vector.shape_cast %246 : vector<128xf32> to vector<1x1x128xf32>
    %248 = vector.broadcast %247 : vector<1x1x128xf32> to vector<8x16x128xf32>
    %249 = arith.mulf %244, %248 : vector<8x16x128xf32>
    %250 = arith.addf %241, %249 : vector<8x16x128xf32>
    %c0_i32_155 = arith.constant 0 : i32
    %c0_i32_156 = arith.constant 0 : i32
    %c0_i32_157 = arith.constant 0 : i32
    %251 = tpu.memref_slice %arg13[%9, %c0_i32_155, %c0_i32_156, %c0_i32_157] : memref<2x14x32x128xf32, #tpu.memory_space<vmem>> -> memref<1x14x32x128xf32, #tpu.memory_space<vmem>>
    %252 = tpu.memref_squeeze %251 : memref<1x14x32x128xf32, #tpu.memory_space<vmem>> -> memref<14x32x128xf32, #tpu.memory_space<vmem>>
    %c3_158 = arith.constant 3 : index
    %c9_159 = arith.constant 9 : index
    %c0_160 = arith.constant 0 : index
    %253 = vector.load %252[%c3_158, %c9_159, %c0_160] : memref<14x32x128xf32, #tpu.memory_space<vmem>>, vector<8x16x128xf32>
    %254 = vector.extract_strided_slice %24 {offsets = [3, 4, 0], sizes = [1, 1, 128], strides = [1, 1, 1]} : vector<7x7x128xf32> to vector<1x1x128xf32>
    %255 = vector.shape_cast %254 : vector<1x1x128xf32> to vector<128xf32>
    %256 = vector.shape_cast %255 : vector<128xf32> to vector<1x1x128xf32>
    %257 = vector.broadcast %256 : vector<1x1x128xf32> to vector<8x16x128xf32>
    %258 = arith.mulf %253, %257 : vector<8x16x128xf32>
    %259 = arith.addf %250, %258 : vector<8x16x128xf32>
    %c0_i32_161 = arith.constant 0 : i32
    %c0_i32_162 = arith.constant 0 : i32
    %c0_i32_163 = arith.constant 0 : i32
    %260 = tpu.memref_slice %arg13[%9, %c0_i32_161, %c0_i32_162, %c0_i32_163] : memref<2x14x32x128xf32, #tpu.memory_space<vmem>> -> memref<1x14x32x128xf32, #tpu.memory_space<vmem>>
    %261 = tpu.memref_squeeze %260 : memref<1x14x32x128xf32, #tpu.memory_space<vmem>> -> memref<14x32x128xf32, #tpu.memory_space<vmem>>
    %c3_164 = arith.constant 3 : index
    %c10_165 = arith.constant 10 : index
    %c0_166 = arith.constant 0 : index
    %262 = vector.load %261[%c3_164, %c10_165, %c0_166] : memref<14x32x128xf32, #tpu.memory_space<vmem>>, vector<8x16x128xf32>
    %263 = vector.extract_strided_slice %24 {offsets = [3, 5, 0], sizes = [1, 1, 128], strides = [1, 1, 1]} : vector<7x7x128xf32> to vector<1x1x128xf32>
    %264 = vector.shape_cast %263 : vector<1x1x128xf32> to vector<128xf32>
    %265 = vector.shape_cast %264 : vector<128xf32> to vector<1x1x128xf32>
    %266 = vector.broadcast %265 : vector<1x1x128xf32> to vector<8x16x128xf32>
    %267 = arith.mulf %262, %266 : vector<8x16x128xf32>
    %268 = arith.addf %259, %267 : vector<8x16x128xf32>
    %c0_i32_167 = arith.constant 0 : i32
    %c0_i32_168 = arith.constant 0 : i32
    %c0_i32_169 = arith.constant 0 : i32
    %269 = tpu.memref_slice %arg13[%9, %c0_i32_167, %c0_i32_168, %c0_i32_169] : memref<2x14x32x128xf32, #tpu.memory_space<vmem>> -> memref<1x14x32x128xf32, #tpu.memory_space<vmem>>
    %270 = tpu.memref_squeeze %269 : memref<1x14x32x128xf32, #tpu.memory_space<vmem>> -> memref<14x32x128xf32, #tpu.memory_space<vmem>>
    %c3_170 = arith.constant 3 : index
    %c11_171 = arith.constant 11 : index
    %c0_172 = arith.constant 0 : index
    %271 = vector.load %270[%c3_170, %c11_171, %c0_172] : memref<14x32x128xf32, #tpu.memory_space<vmem>>, vector<8x16x128xf32>
    %272 = vector.extract_strided_slice %24 {offsets = [3, 6, 0], sizes = [1, 1, 128], strides = [1, 1, 1]} : vector<7x7x128xf32> to vector<1x1x128xf32>
    %273 = vector.shape_cast %272 : vector<1x1x128xf32> to vector<128xf32>
    %274 = vector.shape_cast %273 : vector<128xf32> to vector<1x1x128xf32>
    %275 = vector.broadcast %274 : vector<1x1x128xf32> to vector<8x16x128xf32>
    %276 = arith.mulf %271, %275 : vector<8x16x128xf32>
    %277 = arith.addf %268, %276 : vector<8x16x128xf32>
    %c0_i32_173 = arith.constant 0 : i32
    %c0_i32_174 = arith.constant 0 : i32
    %c0_i32_175 = arith.constant 0 : i32
    %278 = tpu.memref_slice %arg13[%9, %c0_i32_173, %c0_i32_174, %c0_i32_175] : memref<2x14x32x128xf32, #tpu.memory_space<vmem>> -> memref<1x14x32x128xf32, #tpu.memory_space<vmem>>
    %279 = tpu.memref_squeeze %278 : memref<1x14x32x128xf32, #tpu.memory_space<vmem>> -> memref<14x32x128xf32, #tpu.memory_space<vmem>>
    %c4 = arith.constant 4 : index
    %c5_176 = arith.constant 5 : index
    %c0_177 = arith.constant 0 : index
    %280 = vector.load %279[%c4, %c5_176, %c0_177] : memref<14x32x128xf32, #tpu.memory_space<vmem>>, vector<8x16x128xf32>
    %281 = vector.extract_strided_slice %24 {offsets = [4, 0, 0], sizes = [1, 1, 128], strides = [1, 1, 1]} : vector<7x7x128xf32> to vector<1x1x128xf32>
    %282 = vector.shape_cast %281 : vector<1x1x128xf32> to vector<128xf32>
    %283 = vector.shape_cast %282 : vector<128xf32> to vector<1x1x128xf32>
    %284 = vector.broadcast %283 : vector<1x1x128xf32> to vector<8x16x128xf32>
    %285 = arith.mulf %280, %284 : vector<8x16x128xf32>
    %286 = arith.addf %277, %285 : vector<8x16x128xf32>
    %c0_i32_178 = arith.constant 0 : i32
    %c0_i32_179 = arith.constant 0 : i32
    %c0_i32_180 = arith.constant 0 : i32
    %287 = tpu.memref_slice %arg13[%9, %c0_i32_178, %c0_i32_179, %c0_i32_180] : memref<2x14x32x128xf32, #tpu.memory_space<vmem>> -> memref<1x14x32x128xf32, #tpu.memory_space<vmem>>
    %288 = tpu.memref_squeeze %287 : memref<1x14x32x128xf32, #tpu.memory_space<vmem>> -> memref<14x32x128xf32, #tpu.memory_space<vmem>>
    %c4_181 = arith.constant 4 : index
    %c6_182 = arith.constant 6 : index
    %c0_183 = arith.constant 0 : index
    %289 = vector.load %288[%c4_181, %c6_182, %c0_183] : memref<14x32x128xf32, #tpu.memory_space<vmem>>, vector<8x16x128xf32>
    %290 = vector.extract_strided_slice %24 {offsets = [4, 1, 0], sizes = [1, 1, 128], strides = [1, 1, 1]} : vector<7x7x128xf32> to vector<1x1x128xf32>
    %291 = vector.shape_cast %290 : vector<1x1x128xf32> to vector<128xf32>
    %292 = vector.shape_cast %291 : vector<128xf32> to vector<1x1x128xf32>
    %293 = vector.broadcast %292 : vector<1x1x128xf32> to vector<8x16x128xf32>
    %294 = arith.mulf %289, %293 : vector<8x16x128xf32>
    %295 = arith.addf %286, %294 : vector<8x16x128xf32>
    %c0_i32_184 = arith.constant 0 : i32
    %c0_i32_185 = arith.constant 0 : i32
    %c0_i32_186 = arith.constant 0 : i32
    %296 = tpu.memref_slice %arg13[%9, %c0_i32_184, %c0_i32_185, %c0_i32_186] : memref<2x14x32x128xf32, #tpu.memory_space<vmem>> -> memref<1x14x32x128xf32, #tpu.memory_space<vmem>>
    %297 = tpu.memref_squeeze %296 : memref<1x14x32x128xf32, #tpu.memory_space<vmem>> -> memref<14x32x128xf32, #tpu.memory_space<vmem>>
    %c4_187 = arith.constant 4 : index
    %c7_188 = arith.constant 7 : index
    %c0_189 = arith.constant 0 : index
    %298 = vector.load %297[%c4_187, %c7_188, %c0_189] : memref<14x32x128xf32, #tpu.memory_space<vmem>>, vector<8x16x128xf32>
    %299 = vector.extract_strided_slice %24 {offsets = [4, 2, 0], sizes = [1, 1, 128], strides = [1, 1, 1]} : vector<7x7x128xf32> to vector<1x1x128xf32>
    %300 = vector.shape_cast %299 : vector<1x1x128xf32> to vector<128xf32>
    %301 = vector.shape_cast %300 : vector<128xf32> to vector<1x1x128xf32>
    %302 = vector.broadcast %301 : vector<1x1x128xf32> to vector<8x16x128xf32>
    %303 = arith.mulf %298, %302 : vector<8x16x128xf32>
    %304 = arith.addf %295, %303 : vector<8x16x128xf32>
    %c0_i32_190 = arith.constant 0 : i32
    %c0_i32_191 = arith.constant 0 : i32
    %c0_i32_192 = arith.constant 0 : i32
    %305 = tpu.memref_slice %arg13[%9, %c0_i32_190, %c0_i32_191, %c0_i32_192] : memref<2x14x32x128xf32, #tpu.memory_space<vmem>> -> memref<1x14x32x128xf32, #tpu.memory_space<vmem>>
    %306 = tpu.memref_squeeze %305 : memref<1x14x32x128xf32, #tpu.memory_space<vmem>> -> memref<14x32x128xf32, #tpu.memory_space<vmem>>
    %c4_193 = arith.constant 4 : index
    %c8_194 = arith.constant 8 : index
    %c0_195 = arith.constant 0 : index
    %307 = vector.load %306[%c4_193, %c8_194, %c0_195] : memref<14x32x128xf32, #tpu.memory_space<vmem>>, vector<8x16x128xf32>
    %308 = vector.extract_strided_slice %24 {offsets = [4, 3, 0], sizes = [1, 1, 128], strides = [1, 1, 1]} : vector<7x7x128xf32> to vector<1x1x128xf32>
    %309 = vector.shape_cast %308 : vector<1x1x128xf32> to vector<128xf32>
    %310 = vector.shape_cast %309 : vector<128xf32> to vector<1x1x128xf32>
    %311 = vector.broadcast %310 : vector<1x1x128xf32> to vector<8x16x128xf32>
    %312 = arith.mulf %307, %311 : vector<8x16x128xf32>
    %313 = arith.addf %304, %312 : vector<8x16x128xf32>
    %c0_i32_196 = arith.constant 0 : i32
    %c0_i32_197 = arith.constant 0 : i32
    %c0_i32_198 = arith.constant 0 : i32
    %314 = tpu.memref_slice %arg13[%9, %c0_i32_196, %c0_i32_197, %c0_i32_198] : memref<2x14x32x128xf32, #tpu.memory_space<vmem>> -> memref<1x14x32x128xf32, #tpu.memory_space<vmem>>
    %315 = tpu.memref_squeeze %314 : memref<1x14x32x128xf32, #tpu.memory_space<vmem>> -> memref<14x32x128xf32, #tpu.memory_space<vmem>>
    %c4_199 = arith.constant 4 : index
    %c9_200 = arith.constant 9 : index
    %c0_201 = arith.constant 0 : index
    %316 = vector.load %315[%c4_199, %c9_200, %c0_201] : memref<14x32x128xf32, #tpu.memory_space<vmem>>, vector<8x16x128xf32>
    %317 = vector.extract_strided_slice %24 {offsets = [4, 4, 0], sizes = [1, 1, 128], strides = [1, 1, 1]} : vector<7x7x128xf32> to vector<1x1x128xf32>
    %318 = vector.shape_cast %317 : vector<1x1x128xf32> to vector<128xf32>
    %319 = vector.shape_cast %318 : vector<128xf32> to vector<1x1x128xf32>
    %320 = vector.broadcast %319 : vector<1x1x128xf32> to vector<8x16x128xf32>
    %321 = arith.mulf %316, %320 : vector<8x16x128xf32>
    %322 = arith.addf %313, %321 : vector<8x16x128xf32>
    %c0_i32_202 = arith.constant 0 : i32
    %c0_i32_203 = arith.constant 0 : i32
    %c0_i32_204 = arith.constant 0 : i32
    %323 = tpu.memref_slice %arg13[%9, %c0_i32_202, %c0_i32_203, %c0_i32_204] : memref<2x14x32x128xf32, #tpu.memory_space<vmem>> -> memref<1x14x32x128xf32, #tpu.memory_space<vmem>>
    %324 = tpu.memref_squeeze %323 : memref<1x14x32x128xf32, #tpu.memory_space<vmem>> -> memref<14x32x128xf32, #tpu.memory_space<vmem>>
    %c4_205 = arith.constant 4 : index
    %c10_206 = arith.constant 10 : index
    %c0_207 = arith.constant 0 : index
    %325 = vector.load %324[%c4_205, %c10_206, %c0_207] : memref<14x32x128xf32, #tpu.memory_space<vmem>>, vector<8x16x128xf32>
    %326 = vector.extract_strided_slice %24 {offsets = [4, 5, 0], sizes = [1, 1, 128], strides = [1, 1, 1]} : vector<7x7x128xf32> to vector<1x1x128xf32>
    %327 = vector.shape_cast %326 : vector<1x1x128xf32> to vector<128xf32>
    %328 = vector.shape_cast %327 : vector<128xf32> to vector<1x1x128xf32>
    %329 = vector.broadcast %328 : vector<1x1x128xf32> to vector<8x16x128xf32>
    %330 = arith.mulf %325, %329 : vector<8x16x128xf32>
    %331 = arith.addf %322, %330 : vector<8x16x128xf32>
    %c0_i32_208 = arith.constant 0 : i32
    %c0_i32_209 = arith.constant 0 : i32
    %c0_i32_210 = arith.constant 0 : i32
    %332 = tpu.memref_slice %arg13[%9, %c0_i32_208, %c0_i32_209, %c0_i32_210] : memref<2x14x32x128xf32, #tpu.memory_space<vmem>> -> memref<1x14x32x128xf32, #tpu.memory_space<vmem>>
    %333 = tpu.memref_squeeze %332 : memref<1x14x32x128xf32, #tpu.memory_space<vmem>> -> memref<14x32x128xf32, #tpu.memory_space<vmem>>
    %c4_211 = arith.constant 4 : index
    %c11_212 = arith.constant 11 : index
    %c0_213 = arith.constant 0 : index
    %334 = vector.load %333[%c4_211, %c11_212, %c0_213] : memref<14x32x128xf32, #tpu.memory_space<vmem>>, vector<8x16x128xf32>
    %335 = vector.extract_strided_slice %24 {offsets = [4, 6, 0], sizes = [1, 1, 128], strides = [1, 1, 1]} : vector<7x7x128xf32> to vector<1x1x128xf32>
    %336 = vector.shape_cast %335 : vector<1x1x128xf32> to vector<128xf32>
    %337 = vector.shape_cast %336 : vector<128xf32> to vector<1x1x128xf32>
    %338 = vector.broadcast %337 : vector<1x1x128xf32> to vector<8x16x128xf32>
    %339 = arith.mulf %334, %338 : vector<8x16x128xf32>
    %340 = arith.addf %331, %339 : vector<8x16x128xf32>
    %c0_i32_214 = arith.constant 0 : i32
    %c0_i32_215 = arith.constant 0 : i32
    %c0_i32_216 = arith.constant 0 : i32
    %341 = tpu.memref_slice %arg13[%9, %c0_i32_214, %c0_i32_215, %c0_i32_216] : memref<2x14x32x128xf32, #tpu.memory_space<vmem>> -> memref<1x14x32x128xf32, #tpu.memory_space<vmem>>
    %342 = tpu.memref_squeeze %341 : memref<1x14x32x128xf32, #tpu.memory_space<vmem>> -> memref<14x32x128xf32, #tpu.memory_space<vmem>>
    %c5_217 = arith.constant 5 : index
    %c5_218 = arith.constant 5 : index
    %c0_219 = arith.constant 0 : index
    %343 = vector.load %342[%c5_217, %c5_218, %c0_219] : memref<14x32x128xf32, #tpu.memory_space<vmem>>, vector<8x16x128xf32>
    %344 = vector.extract_strided_slice %24 {offsets = [5, 0, 0], sizes = [1, 1, 128], strides = [1, 1, 1]} : vector<7x7x128xf32> to vector<1x1x128xf32>
    %345 = vector.shape_cast %344 : vector<1x1x128xf32> to vector<128xf32>
    %346 = vector.shape_cast %345 : vector<128xf32> to vector<1x1x128xf32>
    %347 = vector.broadcast %346 : vector<1x1x128xf32> to vector<8x16x128xf32>
    %348 = arith.mulf %343, %347 : vector<8x16x128xf32>
    %349 = arith.addf %340, %348 : vector<8x16x128xf32>
    %c0_i32_220 = arith.constant 0 : i32
    %c0_i32_221 = arith.constant 0 : i32
    %c0_i32_222 = arith.constant 0 : i32
    %350 = tpu.memref_slice %arg13[%9, %c0_i32_220, %c0_i32_221, %c0_i32_222] : memref<2x14x32x128xf32, #tpu.memory_space<vmem>> -> memref<1x14x32x128xf32, #tpu.memory_space<vmem>>
    %351 = tpu.memref_squeeze %350 : memref<1x14x32x128xf32, #tpu.memory_space<vmem>> -> memref<14x32x128xf32, #tpu.memory_space<vmem>>
    %c5_223 = arith.constant 5 : index
    %c6_224 = arith.constant 6 : index
    %c0_225 = arith.constant 0 : index
    %352 = vector.load %351[%c5_223, %c6_224, %c0_225] : memref<14x32x128xf32, #tpu.memory_space<vmem>>, vector<8x16x128xf32>
    %353 = vector.extract_strided_slice %24 {offsets = [5, 1, 0], sizes = [1, 1, 128], strides = [1, 1, 1]} : vector<7x7x128xf32> to vector<1x1x128xf32>
    %354 = vector.shape_cast %353 : vector<1x1x128xf32> to vector<128xf32>
    %355 = vector.shape_cast %354 : vector<128xf32> to vector<1x1x128xf32>
    %356 = vector.broadcast %355 : vector<1x1x128xf32> to vector<8x16x128xf32>
    %357 = arith.mulf %352, %356 : vector<8x16x128xf32>
    %358 = arith.addf %349, %357 : vector<8x16x128xf32>
    %c0_i32_226 = arith.constant 0 : i32
    %c0_i32_227 = arith.constant 0 : i32
    %c0_i32_228 = arith.constant 0 : i32
    %359 = tpu.memref_slice %arg13[%9, %c0_i32_226, %c0_i32_227, %c0_i32_228] : memref<2x14x32x128xf32, #tpu.memory_space<vmem>> -> memref<1x14x32x128xf32, #tpu.memory_space<vmem>>
    %360 = tpu.memref_squeeze %359 : memref<1x14x32x128xf32, #tpu.memory_space<vmem>> -> memref<14x32x128xf32, #tpu.memory_space<vmem>>
    %c5_229 = arith.constant 5 : index
    %c7_230 = arith.constant 7 : index
    %c0_231 = arith.constant 0 : index
    %361 = vector.load %360[%c5_229, %c7_230, %c0_231] : memref<14x32x128xf32, #tpu.memory_space<vmem>>, vector<8x16x128xf32>
    %362 = vector.extract_strided_slice %24 {offsets = [5, 2, 0], sizes = [1, 1, 128], strides = [1, 1, 1]} : vector<7x7x128xf32> to vector<1x1x128xf32>
    %363 = vector.shape_cast %362 : vector<1x1x128xf32> to vector<128xf32>
    %364 = vector.shape_cast %363 : vector<128xf32> to vector<1x1x128xf32>
    %365 = vector.broadcast %364 : vector<1x1x128xf32> to vector<8x16x128xf32>
    %366 = arith.mulf %361, %365 : vector<8x16x128xf32>
    %367 = arith.addf %358, %366 : vector<8x16x128xf32>
    %c0_i32_232 = arith.constant 0 : i32
    %c0_i32_233 = arith.constant 0 : i32
    %c0_i32_234 = arith.constant 0 : i32
    %368 = tpu.memref_slice %arg13[%9, %c0_i32_232, %c0_i32_233, %c0_i32_234] : memref<2x14x32x128xf32, #tpu.memory_space<vmem>> -> memref<1x14x32x128xf32, #tpu.memory_space<vmem>>
    %369 = tpu.memref_squeeze %368 : memref<1x14x32x128xf32, #tpu.memory_space<vmem>> -> memref<14x32x128xf32, #tpu.memory_space<vmem>>
    %c5_235 = arith.constant 5 : index
    %c8_236 = arith.constant 8 : index
    %c0_237 = arith.constant 0 : index
    %370 = vector.load %369[%c5_235, %c8_236, %c0_237] : memref<14x32x128xf32, #tpu.memory_space<vmem>>, vector<8x16x128xf32>
    %371 = vector.extract_strided_slice %24 {offsets = [5, 3, 0], sizes = [1, 1, 128], strides = [1, 1, 1]} : vector<7x7x128xf32> to vector<1x1x128xf32>
    %372 = vector.shape_cast %371 : vector<1x1x128xf32> to vector<128xf32>
    %373 = vector.shape_cast %372 : vector<128xf32> to vector<1x1x128xf32>
    %374 = vector.broadcast %373 : vector<1x1x128xf32> to vector<8x16x128xf32>
    %375 = arith.mulf %370, %374 : vector<8x16x128xf32>
    %376 = arith.addf %367, %375 : vector<8x16x128xf32>
    %c0_i32_238 = arith.constant 0 : i32
    %c0_i32_239 = arith.constant 0 : i32
    %c0_i32_240 = arith.constant 0 : i32
    %377 = tpu.memref_slice %arg13[%9, %c0_i32_238, %c0_i32_239, %c0_i32_240] : memref<2x14x32x128xf32, #tpu.memory_space<vmem>> -> memref<1x14x32x128xf32, #tpu.memory_space<vmem>>
    %378 = tpu.memref_squeeze %377 : memref<1x14x32x128xf32, #tpu.memory_space<vmem>> -> memref<14x32x128xf32, #tpu.memory_space<vmem>>
    %c5_241 = arith.constant 5 : index
    %c9_242 = arith.constant 9 : index
    %c0_243 = arith.constant 0 : index
    %379 = vector.load %378[%c5_241, %c9_242, %c0_243] : memref<14x32x128xf32, #tpu.memory_space<vmem>>, vector<8x16x128xf32>
    %380 = vector.extract_strided_slice %24 {offsets = [5, 4, 0], sizes = [1, 1, 128], strides = [1, 1, 1]} : vector<7x7x128xf32> to vector<1x1x128xf32>
    %381 = vector.shape_cast %380 : vector<1x1x128xf32> to vector<128xf32>
    %382 = vector.shape_cast %381 : vector<128xf32> to vector<1x1x128xf32>
    %383 = vector.broadcast %382 : vector<1x1x128xf32> to vector<8x16x128xf32>
    %384 = arith.mulf %379, %383 : vector<8x16x128xf32>
    %385 = arith.addf %376, %384 : vector<8x16x128xf32>
    %c0_i32_244 = arith.constant 0 : i32
    %c0_i32_245 = arith.constant 0 : i32
    %c0_i32_246 = arith.constant 0 : i32
    %386 = tpu.memref_slice %arg13[%9, %c0_i32_244, %c0_i32_245, %c0_i32_246] : memref<2x14x32x128xf32, #tpu.memory_space<vmem>> -> memref<1x14x32x128xf32, #tpu.memory_space<vmem>>
    %387 = tpu.memref_squeeze %386 : memref<1x14x32x128xf32, #tpu.memory_space<vmem>> -> memref<14x32x128xf32, #tpu.memory_space<vmem>>
    %c5_247 = arith.constant 5 : index
    %c10_248 = arith.constant 10 : index
    %c0_249 = arith.constant 0 : index
    %388 = vector.load %387[%c5_247, %c10_248, %c0_249] : memref<14x32x128xf32, #tpu.memory_space<vmem>>, vector<8x16x128xf32>
    %389 = vector.extract_strided_slice %24 {offsets = [5, 5, 0], sizes = [1, 1, 128], strides = [1, 1, 1]} : vector<7x7x128xf32> to vector<1x1x128xf32>
    %390 = vector.shape_cast %389 : vector<1x1x128xf32> to vector<128xf32>
    %391 = vector.shape_cast %390 : vector<128xf32> to vector<1x1x128xf32>
    %392 = vector.broadcast %391 : vector<1x1x128xf32> to vector<8x16x128xf32>
    %393 = arith.mulf %388, %392 : vector<8x16x128xf32>
    %394 = arith.addf %385, %393 : vector<8x16x128xf32>
    %c0_i32_250 = arith.constant 0 : i32
    %c0_i32_251 = arith.constant 0 : i32
    %c0_i32_252 = arith.constant 0 : i32
    %395 = tpu.memref_slice %arg13[%9, %c0_i32_250, %c0_i32_251, %c0_i32_252] : memref<2x14x32x128xf32, #tpu.memory_space<vmem>> -> memref<1x14x32x128xf32, #tpu.memory_space<vmem>>
    %396 = tpu.memref_squeeze %395 : memref<1x14x32x128xf32, #tpu.memory_space<vmem>> -> memref<14x32x128xf32, #tpu.memory_space<vmem>>
    %c5_253 = arith.constant 5 : index
    %c11_254 = arith.constant 11 : index
    %c0_255 = arith.constant 0 : index
    %397 = vector.load %396[%c5_253, %c11_254, %c0_255] : memref<14x32x128xf32, #tpu.memory_space<vmem>>, vector<8x16x128xf32>
    %398 = vector.extract_strided_slice %24 {offsets = [5, 6, 0], sizes = [1, 1, 128], strides = [1, 1, 1]} : vector<7x7x128xf32> to vector<1x1x128xf32>
    %399 = vector.shape_cast %398 : vector<1x1x128xf32> to vector<128xf32>
    %400 = vector.shape_cast %399 : vector<128xf32> to vector<1x1x128xf32>
    %401 = vector.broadcast %400 : vector<1x1x128xf32> to vector<8x16x128xf32>
    %402 = arith.mulf %397, %401 : vector<8x16x128xf32>
    %403 = arith.addf %394, %402 : vector<8x16x128xf32>
    %c0_i32_256 = arith.constant 0 : i32
    %c0_i32_257 = arith.constant 0 : i32
    %c0_i32_258 = arith.constant 0 : i32
    %404 = tpu.memref_slice %arg13[%9, %c0_i32_256, %c0_i32_257, %c0_i32_258] : memref<2x14x32x128xf32, #tpu.memory_space<vmem>> -> memref<1x14x32x128xf32, #tpu.memory_space<vmem>>
    %405 = tpu.memref_squeeze %404 : memref<1x14x32x128xf32, #tpu.memory_space<vmem>> -> memref<14x32x128xf32, #tpu.memory_space<vmem>>
    %c6_259 = arith.constant 6 : index
    %c5_260 = arith.constant 5 : index
    %c0_261 = arith.constant 0 : index
    %406 = vector.load %405[%c6_259, %c5_260, %c0_261] : memref<14x32x128xf32, #tpu.memory_space<vmem>>, vector<8x16x128xf32>
    %407 = vector.extract_strided_slice %24 {offsets = [6, 0, 0], sizes = [1, 1, 128], strides = [1, 1, 1]} : vector<7x7x128xf32> to vector<1x1x128xf32>
    %408 = vector.shape_cast %407 : vector<1x1x128xf32> to vector<128xf32>
    %409 = vector.shape_cast %408 : vector<128xf32> to vector<1x1x128xf32>
    %410 = vector.broadcast %409 : vector<1x1x128xf32> to vector<8x16x128xf32>
    %411 = arith.mulf %406, %410 : vector<8x16x128xf32>
    %412 = arith.addf %403, %411 : vector<8x16x128xf32>
    %c0_i32_262 = arith.constant 0 : i32
    %c0_i32_263 = arith.constant 0 : i32
    %c0_i32_264 = arith.constant 0 : i32
    %413 = tpu.memref_slice %arg13[%9, %c0_i32_262, %c0_i32_263, %c0_i32_264] : memref<2x14x32x128xf32, #tpu.memory_space<vmem>> -> memref<1x14x32x128xf32, #tpu.memory_space<vmem>>
    %414 = tpu.memref_squeeze %413 : memref<1x14x32x128xf32, #tpu.memory_space<vmem>> -> memref<14x32x128xf32, #tpu.memory_space<vmem>>
    %c6_265 = arith.constant 6 : index
    %c6_266 = arith.constant 6 : index
    %c0_267 = arith.constant 0 : index
    %415 = vector.load %414[%c6_265, %c6_266, %c0_267] : memref<14x32x128xf32, #tpu.memory_space<vmem>>, vector<8x16x128xf32>
    %416 = vector.extract_strided_slice %24 {offsets = [6, 1, 0], sizes = [1, 1, 128], strides = [1, 1, 1]} : vector<7x7x128xf32> to vector<1x1x128xf32>
    %417 = vector.shape_cast %416 : vector<1x1x128xf32> to vector<128xf32>
    %418 = vector.shape_cast %417 : vector<128xf32> to vector<1x1x128xf32>
    %419 = vector.broadcast %418 : vector<1x1x128xf32> to vector<8x16x128xf32>
    %420 = arith.mulf %415, %419 : vector<8x16x128xf32>
    %421 = arith.addf %412, %420 : vector<8x16x128xf32>
    %c0_i32_268 = arith.constant 0 : i32
    %c0_i32_269 = arith.constant 0 : i32
    %c0_i32_270 = arith.constant 0 : i32
    %422 = tpu.memref_slice %arg13[%9, %c0_i32_268, %c0_i32_269, %c0_i32_270] : memref<2x14x32x128xf32, #tpu.memory_space<vmem>> -> memref<1x14x32x128xf32, #tpu.memory_space<vmem>>
    %423 = tpu.memref_squeeze %422 : memref<1x14x32x128xf32, #tpu.memory_space<vmem>> -> memref<14x32x128xf32, #tpu.memory_space<vmem>>
    %c6_271 = arith.constant 6 : index
    %c7_272 = arith.constant 7 : index
    %c0_273 = arith.constant 0 : index
    %424 = vector.load %423[%c6_271, %c7_272, %c0_273] : memref<14x32x128xf32, #tpu.memory_space<vmem>>, vector<8x16x128xf32>
    %425 = vector.extract_strided_slice %24 {offsets = [6, 2, 0], sizes = [1, 1, 128], strides = [1, 1, 1]} : vector<7x7x128xf32> to vector<1x1x128xf32>
    %426 = vector.shape_cast %425 : vector<1x1x128xf32> to vector<128xf32>
    %427 = vector.shape_cast %426 : vector<128xf32> to vector<1x1x128xf32>
    %428 = vector.broadcast %427 : vector<1x1x128xf32> to vector<8x16x128xf32>
    %429 = arith.mulf %424, %428 : vector<8x16x128xf32>
    %430 = arith.addf %421, %429 : vector<8x16x128xf32>
    %c0_i32_274 = arith.constant 0 : i32
    %c0_i32_275 = arith.constant 0 : i32
    %c0_i32_276 = arith.constant 0 : i32
    %431 = tpu.memref_slice %arg13[%9, %c0_i32_274, %c0_i32_275, %c0_i32_276] : memref<2x14x32x128xf32, #tpu.memory_space<vmem>> -> memref<1x14x32x128xf32, #tpu.memory_space<vmem>>
    %432 = tpu.memref_squeeze %431 : memref<1x14x32x128xf32, #tpu.memory_space<vmem>> -> memref<14x32x128xf32, #tpu.memory_space<vmem>>
    %c6_277 = arith.constant 6 : index
    %c8_278 = arith.constant 8 : index
    %c0_279 = arith.constant 0 : index
    %433 = vector.load %432[%c6_277, %c8_278, %c0_279] : memref<14x32x128xf32, #tpu.memory_space<vmem>>, vector<8x16x128xf32>
    %434 = vector.extract_strided_slice %24 {offsets = [6, 3, 0], sizes = [1, 1, 128], strides = [1, 1, 1]} : vector<7x7x128xf32> to vector<1x1x128xf32>
    %435 = vector.shape_cast %434 : vector<1x1x128xf32> to vector<128xf32>
    %436 = vector.shape_cast %435 : vector<128xf32> to vector<1x1x128xf32>
    %437 = vector.broadcast %436 : vector<1x1x128xf32> to vector<8x16x128xf32>
    %438 = arith.mulf %433, %437 : vector<8x16x128xf32>
    %439 = arith.addf %430, %438 : vector<8x16x128xf32>
    %c0_i32_280 = arith.constant 0 : i32
    %c0_i32_281 = arith.constant 0 : i32
    %c0_i32_282 = arith.constant 0 : i32
    %440 = tpu.memref_slice %arg13[%9, %c0_i32_280, %c0_i32_281, %c0_i32_282] : memref<2x14x32x128xf32, #tpu.memory_space<vmem>> -> memref<1x14x32x128xf32, #tpu.memory_space<vmem>>
    %441 = tpu.memref_squeeze %440 : memref<1x14x32x128xf32, #tpu.memory_space<vmem>> -> memref<14x32x128xf32, #tpu.memory_space<vmem>>
    %c6_283 = arith.constant 6 : index
    %c9_284 = arith.constant 9 : index
    %c0_285 = arith.constant 0 : index
    %442 = vector.load %441[%c6_283, %c9_284, %c0_285] : memref<14x32x128xf32, #tpu.memory_space<vmem>>, vector<8x16x128xf32>
    %443 = vector.extract_strided_slice %24 {offsets = [6, 4, 0], sizes = [1, 1, 128], strides = [1, 1, 1]} : vector<7x7x128xf32> to vector<1x1x128xf32>
    %444 = vector.shape_cast %443 : vector<1x1x128xf32> to vector<128xf32>
    %445 = vector.shape_cast %444 : vector<128xf32> to vector<1x1x128xf32>
    %446 = vector.broadcast %445 : vector<1x1x128xf32> to vector<8x16x128xf32>
    %447 = arith.mulf %442, %446 : vector<8x16x128xf32>
    %448 = arith.addf %439, %447 : vector<8x16x128xf32>
    %c0_i32_286 = arith.constant 0 : i32
    %c0_i32_287 = arith.constant 0 : i32
    %c0_i32_288 = arith.constant 0 : i32
    %449 = tpu.memref_slice %arg13[%9, %c0_i32_286, %c0_i32_287, %c0_i32_288] : memref<2x14x32x128xf32, #tpu.memory_space<vmem>> -> memref<1x14x32x128xf32, #tpu.memory_space<vmem>>
    %450 = tpu.memref_squeeze %449 : memref<1x14x32x128xf32, #tpu.memory_space<vmem>> -> memref<14x32x128xf32, #tpu.memory_space<vmem>>
    %c6_289 = arith.constant 6 : index
    %c10_290 = arith.constant 10 : index
    %c0_291 = arith.constant 0 : index
    %451 = vector.load %450[%c6_289, %c10_290, %c0_291] : memref<14x32x128xf32, #tpu.memory_space<vmem>>, vector<8x16x128xf32>
    %452 = vector.extract_strided_slice %24 {offsets = [6, 5, 0], sizes = [1, 1, 128], strides = [1, 1, 1]} : vector<7x7x128xf32> to vector<1x1x128xf32>
    %453 = vector.shape_cast %452 : vector<1x1x128xf32> to vector<128xf32>
    %454 = vector.shape_cast %453 : vector<128xf32> to vector<1x1x128xf32>
    %455 = vector.broadcast %454 : vector<1x1x128xf32> to vector<8x16x128xf32>
    %456 = arith.mulf %451, %455 : vector<8x16x128xf32>
    %457 = arith.addf %448, %456 : vector<8x16x128xf32>
    %c0_i32_292 = arith.constant 0 : i32
    %c0_i32_293 = arith.constant 0 : i32
    %c0_i32_294 = arith.constant 0 : i32
    %458 = tpu.memref_slice %arg13[%9, %c0_i32_292, %c0_i32_293, %c0_i32_294] : memref<2x14x32x128xf32, #tpu.memory_space<vmem>> -> memref<1x14x32x128xf32, #tpu.memory_space<vmem>>
    %459 = tpu.memref_squeeze %458 : memref<1x14x32x128xf32, #tpu.memory_space<vmem>> -> memref<14x32x128xf32, #tpu.memory_space<vmem>>
    %c6_295 = arith.constant 6 : index
    %c11_296 = arith.constant 11 : index
    %c0_297 = arith.constant 0 : index
    %460 = vector.load %459[%c6_295, %c11_296, %c0_297] : memref<14x32x128xf32, #tpu.memory_space<vmem>>, vector<8x16x128xf32>
    %461 = vector.extract_strided_slice %24 {offsets = [6, 6, 0], sizes = [1, 1, 128], strides = [1, 1, 1]} : vector<7x7x128xf32> to vector<1x1x128xf32>
    %462 = vector.shape_cast %461 : vector<1x1x128xf32> to vector<128xf32>
    %463 = vector.shape_cast %462 : vector<128xf32> to vector<1x1x128xf32>
    %464 = vector.broadcast %463 : vector<1x1x128xf32> to vector<8x16x128xf32>
    %465 = arith.mulf %460, %464 : vector<8x16x128xf32>
    %466 = arith.addf %457, %465 : vector<8x16x128xf32>
    %c0_298 = arith.constant 0 : index
    %c0_299 = arith.constant 0 : index
    %467 = vector.load %arg4[%c0_298, %c0_299] : memref<1x128xf32, #tpu.memory_space<vmem>>, vector<1x128xf32>
    %468 = vector.shape_cast %467 : vector<1x128xf32> to vector<128xf32>
    %469 = vector.shape_cast %468 : vector<128xf32> to vector<1x1x128xf32>
    %470 = vector.broadcast %469 : vector<1x1x128xf32> to vector<8x16x128xf32>
    %471 = arith.addf %466, %470 : vector<8x16x128xf32>
    %cst_300 = arith.constant dense<0.000000e+00> : vector<8x16xf32>
    %472 = vector.multi_reduction <add>, %471, %cst_300 [2] : vector<8x16x128xf32> to vector<8x16xf32>
    %473 = vector.shape_cast %472 : vector<8x16xf32> to vector<8x16x1xf32>
    %cst_301 = arith.constant 2.500000e-01 : f32
    %474 = vector.broadcast %cst_301 : f32 to vector<8x16x1xf32>
    %475 = arith.mulf %473, %474 : vector<8x16x1xf32>
    %476 = vector.broadcast %475 : vector<8x16x1xf32> to vector<8x16x128xf32>
    %477 = arith.subf %471, %476 : vector<8x16x128xf32>
    %478 = tpu.iota {dimensions = array<i32: 2>} : vector<1x1x128xi32>
    %c4_i32 = arith.constant 4 : i32
    %479 = vector.broadcast %c4_i32 : i32 to vector<1x1x128xi32>
    %480 = arith.cmpi slt, %478, %479 : vector<1x1x128xi32>
    %cst_302 = arith.constant 0.000000e+00 : f32
    %481 = vector.shape_cast %480 : vector<1x1x128xi1> to vector<1x1x128xi1>
    %482 = vector.broadcast %481 : vector<1x1x128xi1> to vector<8x16x128xi1>
    %483 = vector.broadcast %cst_302 : f32 to vector<8x16x128xf32>
    %484 = arith.select %482, %477, %483 : vector<8x16x128xi1>, vector<8x16x128xf32>
    %485 = arith.mulf %484, %484 : vector<8x16x128xf32>
    %cst_303 = arith.constant dense<0.000000e+00> : vector<8x16xf32>
    %486 = vector.multi_reduction <add>, %485, %cst_303 [2] : vector<8x16x128xf32> to vector<8x16xf32>
    %487 = vector.shape_cast %486 : vector<8x16xf32> to vector<8x16x1xf32>
    %cst_304 = arith.constant 2.500000e-01 : f32
    %488 = vector.broadcast %cst_304 : f32 to vector<8x16x1xf32>
    %489 = arith.mulf %487, %488 : vector<8x16x1xf32>
    %cst_305 = arith.constant 9.99999997E-7 : f32
    %490 = vector.broadcast %cst_305 : f32 to vector<8x16x1xf32>
    %491 = arith.addf %489, %490 : vector<8x16x1xf32>
    %492 = math.rsqrt %491 : vector<8x16x1xf32>
    %493 = vector.broadcast %492 : vector<8x16x1xf32> to vector<8x16x128xf32>
    %494 = arith.mulf %484, %493 : vector<8x16x128xf32>
    %c0_306 = arith.constant 0 : index
    %c0_307 = arith.constant 0 : index
    %495 = vector.load %arg5[%c0_306, %c0_307] : memref<1x128xf32, #tpu.memory_space<vmem>>, vector<1x128xf32>
    %496 = vector.shape_cast %495 : vector<1x128xf32> to vector<128xf32>
    %497 = vector.shape_cast %496 : vector<128xf32> to vector<1x1x128xf32>
    %498 = vector.broadcast %497 : vector<1x1x128xf32> to vector<8x16x128xf32>
    %499 = arith.mulf %494, %498 : vector<8x16x128xf32>
    %c0_308 = arith.constant 0 : index
    %c0_309 = arith.constant 0 : index
    %500 = vector.load %arg6[%c0_308, %c0_309] : memref<1x128xf32, #tpu.memory_space<vmem>>, vector<1x128xf32>
    %501 = vector.shape_cast %500 : vector<1x128xf32> to vector<128xf32>
    %502 = vector.shape_cast %501 : vector<128xf32> to vector<1x1x128xf32>
    %503 = vector.broadcast %502 : vector<1x1x128xf32> to vector<8x16x128xf32>
    %504 = arith.addf %499, %503 : vector<8x16x128xf32>
    %505 = vector.shape_cast %504 : vector<8x16x128xf32> to vector<128x128xf32>
    %c0_310 = arith.constant 0 : index
    %c0_311 = arith.constant 0 : index
    %506 = vector.load %arg7[%c0_310, %c0_311] : memref<128x128xf32, #tpu.memory_space<vmem>>, vector<128x128xf32>
    %cst_312 = arith.constant dense<0.000000e+00> : vector<128x128xf32>
    %507 = tpu.matmul %505, %506, %cst_312 {dimension_numbers = #tpu.dot_dimension_numbers<[1], [0], [0], [1], [0, 0, 1, 1], [], []>} : vector<128x128xf32>, vector<128x128xf32>, vector<128x128xf32> -> vector<128x128xf32>
    %c0_313 = arith.constant 0 : index
    %c0_314 = arith.constant 0 : index
    %508 = vector.load %arg8[%c0_313, %c0_314] : memref<1x128xf32, #tpu.memory_space<vmem>>, vector<1x128xf32>
    %509 = vector.shape_cast %508 : vector<1x128xf32> to vector<128xf32>
    %510 = vector.shape_cast %509 : vector<128xf32> to vector<1x128xf32>
    %511 = vector.broadcast %510 : vector<1x128xf32> to vector<128x128xf32>
    %512 = arith.addf %507, %511 : vector<128x128xf32>
    %cst_315 = arith.constant 5.000000e-01 : f32
    %513 = vector.broadcast %cst_315 : f32 to vector<128x128xf32>
    %514 = arith.mulf %513, %512 : vector<128x128xf32>
    %cst_316 = arith.constant 0.707106769 : f32
    %515 = vector.broadcast %cst_316 : f32 to vector<128x128xf32>
    %516 = arith.mulf %512, %515 : vector<128x128xf32>
    %517 = math.erf %516 : vector<128x128xf32>
    %cst_317 = arith.constant 1.000000e+00 : f32
    %518 = vector.broadcast %cst_317 : f32 to vector<128x128xf32>
    %519 = arith.addf %518, %517 : vector<128x128xf32>
    %520 = arith.mulf %514, %519 : vector<128x128xf32>
    %c0_318 = arith.constant 0 : index
    %c0_319 = arith.constant 0 : index
    %521 = vector.load %arg9[%c0_318, %c0_319] : memref<128x128xf32, #tpu.memory_space<vmem>>, vector<128x128xf32>
    %cst_320 = arith.constant dense<0.000000e+00> : vector<128x128xf32>
    %522 = tpu.matmul %520, %521, %cst_320 {dimension_numbers = #tpu.dot_dimension_numbers<[1], [0], [0], [1], [0, 0, 1, 1], [], []>} : vector<128x128xf32>, vector<128x128xf32>, vector<128x128xf32> -> vector<128x128xf32>
    %c0_321 = arith.constant 0 : index
    %c0_322 = arith.constant 0 : index
    %523 = vector.load %arg10[%c0_321, %c0_322] : memref<1x128xf32, #tpu.memory_space<vmem>>, vector<1x128xf32>
    %524 = vector.shape_cast %523 : vector<1x128xf32> to vector<128xf32>
    %525 = vector.shape_cast %524 : vector<128xf32> to vector<1x128xf32>
    %526 = vector.broadcast %525 : vector<1x128xf32> to vector<128x128xf32>
    %527 = arith.addf %522, %526 : vector<128x128xf32>
    %c0_323 = arith.constant 0 : index
    %c0_324 = arith.constant 0 : index
    %528 = vector.load %arg11[%c0_323, %c0_324] : memref<1x128xf32, #tpu.memory_space<vmem>>, vector<1x128xf32>
    %529 = vector.shape_cast %528 : vector<1x128xf32> to vector<128xf32>
    %530 = vector.shape_cast %529 : vector<128xf32> to vector<1x128xf32>
    %531 = vector.broadcast %530 : vector<1x128xf32> to vector<128x128xf32>
    %532 = arith.mulf %527, %531 : vector<128x128xf32>
    %533 = vector.shape_cast %532 : vector<128x128xf32> to vector<8x16x128xf32>
    %c0_i32_325 = arith.constant 0 : i32
    %c0_i32_326 = arith.constant 0 : i32
    %c0_i32_327 = arith.constant 0 : i32
    %534 = tpu.memref_slice %arg13[%9, %c0_i32_325, %c0_i32_326, %c0_i32_327] : memref<2x14x32x128xf32, #tpu.memory_space<vmem>> -> memref<1x14x32x128xf32, #tpu.memory_space<vmem>>
    %535 = tpu.memref_squeeze %534 : memref<1x14x32x128xf32, #tpu.memory_space<vmem>> -> memref<14x32x128xf32, #tpu.memory_space<vmem>>
    %c3_328 = arith.constant 3 : index
    %c8_329 = arith.constant 8 : index
    %c0_330 = arith.constant 0 : index
    %536 = vector.load %535[%c3_328, %c8_329, %c0_330] : memref<14x32x128xf32, #tpu.memory_space<vmem>>, vector<8x16x128xf32>
    %537 = arith.addf %536, %533 : vector<8x16x128xf32>
    %c0_331 = arith.constant 0 : index
    %c0_332 = arith.constant 0 : index
    %c0_333 = arith.constant 0 : index
    %c0_334 = arith.constant 0 : index
    %538 = vector.load %arg12[%c0_331, %c0_332, %c0_333, %c0_334] : memref<1x8x16x128xf32, #tpu.memory_space<vmem>>, vector<1x8x16x128xf32>
    %539 = vector.shape_cast %538 : vector<1x8x16x128xf32> to vector<8x16x128xf32>
    %540 = vector.shape_cast %537 : vector<8x16x128xf32> to vector<1x8x16x128xf32>
    tpu.vector_store %arg12[%c0_331, %c0_332, %c0_333, %c0_334], %540 {strides = array<i32>} : memref<1x8x16x128xf32, #tpu.memory_space<vmem>>, vector<1x8x16x128xf32>,
    return
  }
  func.func @transform_1(%arg0: i32, %arg1: i32) -> (i32, i32, i32) {
    %c0_i32 = arith.constant 0 : i32
    %c0_i32_0 = arith.constant 0 : i32
    %c0_i32_1 = arith.constant 0 : i32
    %c0_i32_2 = arith.constant 0 : i32
    return %c0_i32, %c0_i32_0, %c0_i32_1 : i32, i32, i32
  }
  func.func @transform_2(%arg0: i32, %arg1: i32) -> (i32, i32) {
    %c0_i32 = arith.constant 0 : i32
    %c0_i32_0 = arith.constant 0 : i32
    %c0_i32_1 = arith.constant 0 : i32
    return %c0_i32, %c0_i32_0 : i32, i32
  }
  func.func @transform_3(%arg0: i32, %arg1: i32) -> (i32, i32) {
    %c0_i32 = arith.constant 0 : i32
    %c0_i32_0 = arith.constant 0 : i32
    %c0_i32_1 = arith.constant 0 : i32
    return %c0_i32, %c0_i32_0 : i32, i32
  }
  func.func @transform_4(%arg0: i32, %arg1: i32) -> (i32, i32) {
    %c0_i32 = arith.constant 0 : i32
    %c0_i32_0 = arith.constant 0 : i32
    %c0_i32_1 = arith.constant 0 : i32
    return %c0_i32, %c0_i32_0 : i32, i32
  }
  func.func @transform_5(%arg0: i32, %arg1: i32) -> (i32, i32) {
    %c0_i32 = arith.constant 0 : i32
    %c0_i32_0 = arith.constant 0 : i32
    %c0_i32_1 = arith.constant 0 : i32
    return %c0_i32, %c0_i32_0 : i32, i32
  }
  func.func @transform_6(%arg0: i32, %arg1: i32) -> (i32, i32) {
    %c0_i32 = arith.constant 0 : i32
    %c0_i32_0 = arith.constant 0 : i32
    %c0_i32_1 = arith.constant 0 : i32
    return %c0_i32, %c0_i32_0 : i32, i32
  }
  func.func @transform_7(%arg0: i32, %arg1: i32) -> (i32, i32) {
    %c0_i32 = arith.constant 0 : i32
    %c0_i32_0 = arith.constant 0 : i32
    %c0_i32_1 = arith.constant 0 : i32
    return %c0_i32, %c0_i32_0 : i32, i32
  }
  func.func @transform_8(%arg0: i32, %arg1: i32) -> (i32, i32) {
    %c0_i32 = arith.constant 0 : i32
    %c0_i32_0 = arith.constant 0 : i32
    %c0_i32_1 = arith.constant 0 : i32
    return %c0_i32, %c0_i32_0 : i32, i32
  }
  func.func @transform_9(%arg0: i32, %arg1: i32) -> (i32, i32) {
    %c0_i32 = arith.constant 0 : i32
    %c0_i32_0 = arith.constant 0 : i32
    %c0_i32_1 = arith.constant 0 : i32
    return %c0_i32, %c0_i32_0 : i32, i32
  }
  func.func @transform_10(%arg0: i32, %arg1: i32) -> (i32, i32, i32, i32) {
    %c0_i32 = arith.constant 0 : i32
    %c0_i32_0 = arith.constant 0 : i32
    %c0_i32_1 = arith.constant 0 : i32
    return %arg0, %arg1, %c0_i32, %c0_i32_0 : i32, i32, i32, i32
  }
}

</mosaic_0001>

<llo_original>
// kernel: acl_forward.1
$region0: #{acl_forward.1}
  #allocation0 [shape = 'u32[]', space=smem, size = 0x4, offset = 0x4, fixed_abs, tag = 'smem constant byte address 0x4 - core index']
  #allocation1 [shape = 'u32[144,128]{1,0:T(1,128)}', space=vmem, size = 0x12000, scoped, tag = 'internal scratch']
  #allocation2 [shape = 'f32[2,14,32,128]{3,2,1,0:T(8,128)}', space=vmem, size = 0x70000, scoped, tag = 'scratch operand']
  #allocation3 [shape = 's32[2]{0}', space=sflag, size = 0x8, scoped, tag = 'scratch operand']
  #allocation4 [shape = 's32[]', space=sflag, size = 0x4, offset = 0, fixed_abs, tag = 'sflag constant byte address 0x0 - dummy sync flag']
  #allocation5 [shape = 's32[]', space=sflag, size = 0x4, offset = 0, fixed_abs, tag = 'sflag constant byte address 0x0 - dummy sync flag']
  %s0 = inlined_call_operand.vmem [shape: f32[2,22,32,128], index: 0, kind: input, shape index: {}]
  %s1 = inlined_call_operand.vmem [shape: f32[7,7,128], index: 1, kind: input, shape index: {}]
  %s2 = inlined_call_operand.vmem [shape: f32[1,128], index: 2, kind: input, shape index: {}]
  %s3 = inlined_call_operand.vmem [shape: f32[1,128], index: 3, kind: input, shape index: {}]
  %s4 = inlined_call_operand.vmem [shape: f32[1,128], index: 4, kind: input, shape index: {}]
  %s5 = inlined_call_operand.vmem [shape: f32[128,128], index: 5, kind: input, shape index: {}]
  %s6 = inlined_call_operand.vmem [shape: f32[1,128], index: 6, kind: input, shape index: {}]
  %s7 = inlined_call_operand.vmem [shape: f32[128,128], index: 7, kind: input, shape index: {}]
  %s8 = inlined_call_operand.vmem [shape: f32[1,128], index: 8, kind: input, shape index: {}]
  %s9 = inlined_call_operand.vmem [shape: f32[1,128], index: 9, kind: input, shape index: {}]
  %s10 = inlined_call_operand.vmem [shape: f32[2,16,16,128], index: 10, kind: output, shape index: {}]
  %s11 = sld [smem:[#allocation0]]
  $region145: #{acl_forward.1} parent=0
    _
  %s13 = ssub.s32 1, %s11
  %s14 = scalar_select 0, %s13, %s11
  loop: start=0, step=1, limit=6
  $region2: #{acl_forward.1} parent=0 // loop_pre_header
    _
  $region3: #{acl_forward.1} parent=0 // loop_header
    %s16 = sphi 0, %s20
    %p17 = scmp.ge.s32.totalorder %s16, 6
    %s23 = sphi 0, %s35
    %s24 = sphi 0, %s31
    %s25 = sphi 0, %s23
    %s26 = sphi 0, %s24
    %s27 = sphi 0, %s25
    %s28 = sphi 0, %s26
    %s36 = sphi 0, %s36
    %s38 = sphi 0, %s36
    %s39 = sphi 0, %s38
    %s53 = sphi 0, %s39
    %s57 = sphi 0, %s57
    %s59 = sphi 0, %s57
    %s60 = sphi 0, %s59
    %s74 = sphi 0, %s60
    %s78 = sphi 0, %s78
    %s80 = sphi 0, %s78
    %s81 = sphi 0, %s80
    %s95 = sphi 0, %s81
    %s99 = sphi 0, %s99
    %s101 = sphi 0, %s99
    %s102 = sphi 0, %s101
    %s116 = sphi 0, %s102
    %s120 = sphi 0, %s120
    %s122 = sphi 0, %s120
    %s123 = sphi 0, %s122
    %s137 = sphi 0, %s123
    %s141 = sphi 0, %s141
    %s143 = sphi 0, %s141
    %s144 = sphi 0, %s143
    %s158 = sphi 0, %s144
    %s162 = sphi 0, %s162
    %s164 = sphi 0, %s162
    %s165 = sphi 0, %s164
    %s179 = sphi 0, %s165
    %s183 = sphi 0, %s183
    %s185 = sphi 0, %s183
    %s186 = sphi 0, %s185
    %s200 = sphi 0, %s186
    %s204 = sphi 0, %s204
    %s206 = sphi 0, %s204
    %s207 = sphi 0, %s206
    %s221 = sphi 0, %s207
    %s229 = sphi 0, %s231
    %s232 = sphi 0, %s229
    %s233 = sphi 0, %s232
    %s249 = sphi 0, %s233
  $region4: #{acl_forward.1} parent=0 // loop_header_branch
    %19 = sbr.rel (%p17) target = $region8
  $region5: #{acl_forward.1} parent=0 // loop_body
    %s21 = ssub.s32 %s16, 1
    %s22 = ssub.s32 %s16, 2
    %s29 = sadd.s32 1, %s24
    %p30 = scmp.ge.s32.totalorder %s29, 2
    %s31 = scalar_select %p30, 0, %s29
    %s32 = sadd.s32 1, %s23
    %s33 = scalar_select %p30, %s32, %s23
    %p34 = scmp.ge.s32.totalorder %s33, 2
    %s35 = scalar_select %p34, 0, %s33
    %s37 = sadd.s32 %s36, 1
    %p40 = scmp.eq.s32.totalorder %s16, 3
    %p41 = scmp.ne.s32.totalorder %s36, %s38
    %p42 = scmp.eq.s32.totalorder %s16, 0
    %p43 = por %p41, %p42
    %p44 = scmp.ne.s32.totalorder %s36, %s38
    %p45 = scmp.eq.s32.totalorder %s21, 3
    %p46 = por %p44, %p45
    %p47 = scmp.ne.s32.totalorder %s38, %s39
    %p48 = scmp.eq.s32.totalorder %s21, 0
    %p49 = por %p47, %p48
    %p50 = scmp.ne.s32.totalorder %s38, %s39
    %p51 = scmp.eq.s32.totalorder %s22, 3
    %p52 = por %p50, %p51
    %p54 = scmp.ne.s32.totalorder %s39, %s53
    %p55 = scmp.eq.s32.totalorder %s22, 0
    %p56 = por %p54, %p55
    %s58 = sadd.s32 %s57, 1
    %p61 = scmp.eq.s32.totalorder %s16, 3
    %p62 = scmp.ne.s32.totalorder %s57, %s59
    %p63 = scmp.eq.s32.totalorder %s16, 0
    %p64 = por %p62, %p63
    %p65 = scmp.ne.s32.totalorder %s57, %s59
    %p66 = scmp.eq.s32.totalorder %s21, 3
    %p67 = por %p65, %p66
    %p68 = scmp.ne.s32.totalorder %s59, %s60
    %p69 = scmp.eq.s32.totalorder %s21, 0
    %p70 = por %p68, %p69
    %p71 = scmp.ne.s32.totalorder %s59, %s60
    %p72 = scmp.eq.s32.totalorder %s22, 3
    %p73 = por %p71, %p72
    %p75 = scmp.ne.s32.totalorder %s60, %s74
    %p76 = scmp.eq.s32.totalorder %s22, 0
    %p77 = por %p75, %p76
    %s79 = sadd.s32 %s78, 1
    %p82 = scmp.eq.s32.totalorder %s16, 3
    %p83 = scmp.ne.s32.totalorder %s78, %s80
    %p84 = scmp.eq.s32.totalorder %s16, 0
    %p85 = por %p83, %p84
    %p86 = scmp.ne.s32.totalorder %s78, %s80
    %p87 = scmp.eq.s32.totalorder %s21, 3
    %p88 = por %p86, %p87
    %p89 = scmp.ne.s32.totalorder %s80, %s81
    %p90 = scmp.eq.s32.totalorder %s21, 0
    %p91 = por %p89, %p90
    %p92 = scmp.ne.s32.totalorder %s80, %s81
    %p93 = scmp.eq.s32.totalorder %s22, 3
    %p94 = por %p92, %p93
    %p96 = scmp.ne.s32.totalorder %s81, %s95
    %p97 = scmp.eq.s32.totalorder %s22, 0
    %p98 = por %p96, %p97
    %s100 = sadd.s32 %s99, 1
    %p103 = scmp.eq.s32.totalorder %s16, 3
    %p104 = scmp.ne.s32.totalorder %s99, %s101
    %p105 = scmp.eq.s32.totalorder %s16, 0
    %p106 = por %p104, %p105
    %p107 = scmp.ne.s32.totalorder %s99, %s101
    %p108 = scmp.eq.s32.totalorder %s21, 3
    %p109 = por %p107, %p108
    %p110 = scmp.ne.s32.totalorder %s101, %s102
    %p111 = scmp.eq.s32.totalorder %s21, 0
    %p112 = por %p110, %p111
    %p113 = scmp.ne.s32.totalorder %s101, %s102
    %p114 = scmp.eq.s32.totalorder %s22, 3
    %p115 = por %p113, %p114
    %p117 = scmp.ne.s32.totalorder %s102, %s116
    %p118 = scmp.eq.s32.totalorder %s22, 0
    %p119 = por %p117, %p118
    %s121 = sadd.s32 %s120, 1
    %p124 = scmp.eq.s32.totalorder %s16, 3
    %p125 = scmp.ne.s32.totalorder %s120, %s122
    %p126 = scmp.eq.s32.totalorder %s16, 0
    %p127 = por %p125, %p126
    %p128 = scmp.ne.s32.totalorder %s120, %s122
    %p129 = scmp.eq.s32.totalorder %s21, 3
    %p130 = por %p128, %p129
    %p131 = scmp.ne.s32.totalorder %s122, %s123
    %p132 = scmp.eq.s32.totalorder %s21, 0
    %p133 = por %p131, %p132
    %p134 = scmp.ne.s32.totalorder %s122, %s123
    %p135 = scmp.eq.s32.totalorder %s22, 3
    %p136 = por %p134, %p135
    %p138 = scmp.ne.s32.totalorder %s123, %s137
    %p139 = scmp.eq.s32.totalorder %s22, 0
    %p140 = por %p138, %p139
    %s142 = sadd.s32 %s141, 1
    %p145 = scmp.eq.s32.totalorder %s16, 3
    %p146 = scmp.ne.s32.totalorder %s141, %s143
    %p147 = scmp.eq.s32.totalorder %s16, 0
    %p148 = por %p146, %p147
    %p149 = scmp.ne.s32.totalorder %s141, %s143
    %p150 = scmp.eq.s32.totalorder %s21, 3
    %p151 = por %p149, %p150
    %p152 = scmp.ne.s32.totalorder %s143, %s144
    %p153 = scmp.eq.s32.totalorder %s21, 0
    %p154 = por %p152, %p153
    %p155 = scmp.ne.s32.totalorder %s143, %s144
    %p156 = scmp.eq.s32.totalorder %s22, 3
    %p157 = por %p155, %p156
    %p159 = scmp.ne.s32.totalorder %s144, %s158
    %p160 = scmp.eq.s32.totalorder %s22, 0
    %p161 = por %p159, %p160
    %s163 = sadd.s32 %s162, 1
    %p166 = scmp.eq.s32.totalorder %s16, 3
    %p167 = scmp.ne.s32.totalorder %s162, %s164
    %p168 = scmp.eq.s32.totalorder %s16, 0
    %p169 = por %p167, %p168
    %p170 = scmp.ne.s32.totalorder %s162, %s164
    %p171 = scmp.eq.s32.totalorder %s21, 3
    %p172 = por %p170, %p171
    %p173 = scmp.ne.s32.totalorder %s164, %s165
    %p174 = scmp.eq.s32.totalorder %s21, 0
    %p175 = por %p173, %p174
    %p176 = scmp.ne.s32.totalorder %s164, %s165
    %p177 = scmp.eq.s32.totalorder %s22, 3
    %p178 = por %p176, %p177
    %p180 = scmp.ne.s32.totalorder %s165, %s179
    %p181 = scmp.eq.s32.totalorder %s22, 0
    %p182 = por %p180, %p181
    %s184 = sadd.s32 %s183, 1
    %p187 = scmp.eq.s32.totalorder %s16, 3
    %p188 = scmp.ne.s32.totalorder %s183, %s185
    %p189 = scmp.eq.s32.totalorder %s16, 0
    %p190 = por %p188, %p189
    %p191 = scmp.ne.s32.totalorder %s183, %s185
    %p192 = scmp.eq.s32.totalorder %s21, 3
    %p193 = por %p191, %p192
    %p194 = scmp.ne.s32.totalorder %s185, %s186
    %p195 = scmp.eq.s32.totalorder %s21, 0
    %p196 = por %p194, %p195
    %p197 = scmp.ne.s32.totalorder %s185, %s186
    %p198 = scmp.eq.s32.totalorder %s22, 3
    %p199 = por %p197, %p198
    %p201 = scmp.ne.s32.totalorder %s186, %s200
    %p202 = scmp.eq.s32.totalorder %s22, 0
    %p203 = por %p201, %p202
    %s205 = sadd.s32 %s204, 1
    %p208 = scmp.eq.s32.totalorder %s16, 3
    %p209 = scmp.ne.s32.totalorder %s204, %s206
    %p210 = scmp.eq.s32.totalorder %s16, 0
    %p211 = por %p209, %p210
    %p212 = scmp.ne.s32.totalorder %s204, %s206
    %p213 = scmp.eq.s32.totalorder %s21, 3
    %p214 = por %p212, %p213
    %p215 = scmp.ne.s32.totalorder %s206, %s207
    %p216 = scmp.eq.s32.totalorder %s21, 0
    %p217 = por %p215, %p216
    %p218 = scmp.ne.s32.totalorder %s206, %s207
    %p219 = scmp.eq.s32.totalorder %s22, 3
    %p220 = por %p218, %p219
    %p222 = scmp.ne.s32.totalorder %s207, %s221
    %p223 = scmp.eq.s32.totalorder %s22, 0
    %p224 = por %p222, %p223
    %s225 = ssub.s32 %s23, %s35
    %s226 = ssub.s32 %s24, %s31
    %s227 = sor.u32 %s225, %s226
    %p228 = scmp.eq.s32.totalorder %s227, 0
    %s230 = sadd.s32 %s229, 1
    %s231 = scalar_select %p228, %s229, %s230
    %p234 = pneg %p228
    %p235 = scmp.eq.s32.totalorder %s16, 3
    %p236 = por %p234, %p235
    %p237 = scmp.ne.s32.totalorder %s229, %s232
    %p238 = scmp.eq.s32.totalorder %s16, 0
    %p239 = por %p237, %p238
    %p240 = scmp.ne.s32.totalorder %s229, %s232
    %p241 = scmp.eq.s32.totalorder %s21, 3
    %p242 = por %p240, %p241
    %p243 = scmp.ne.s32.totalorder %s232, %s233
    %p244 = scmp.eq.s32.totalorder %s21, 0
    %p245 = por %p243, %p244
    %p246 = scmp.ne.s32.totalorder %s232, %s233
    %p247 = scmp.eq.s32.totalorder %s22, 3
    %p248 = por %p246, %p247
    %p250 = scmp.ne.s32.totalorder %s233, %s249
    %p251 = scmp.eq.s32.totalorder %s22, 0
    %p252 = por %p250, %p251
    %p253 = scmp.le.s32.totalorder 1, %s16
    %p254 = scmp.lt.s32.totalorder %s16, 5
    %p255 = pnand %p253, %p254
    %p256 = pneg %p255
    // Predicated region
    $region9: #{acl_forward.1} parent=5 // pred_check
      _
    $region10: #{acl_forward.1} parent=5 // pred_check_branch
      %258 = sbr.rel (%p255) target = $region12
    $region11: #{acl_forward.1} parent=5 // pred_region
      %s259 = ssub.s32 %s16, 1
      // Predicated region
      $region13: #{acl_forward.1} parent=11 // pred_check
        %p260 = pneg %p49
      $region14: #{acl_forward.1} parent=11 // pred_check_branch
        %262 = sbr.rel (%p260) target = $region16
      $region15: #{acl_forward.1} parent=11 // pred_region
        _
      $region16: #{acl_forward.1} parent=11 // pred_fallthru
        _
      // Predicated region
      $region17: #{acl_forward.1} parent=11 // pred_check
        %p263 = pneg %p70
      $region18: #{acl_forward.1} parent=11 // pred_check_branch
        %265 = sbr.rel (%p263) target = $region20
      $region19: #{acl_forward.1} parent=11 // pred_region
        _
      $region20: #{acl_forward.1} parent=11 // pred_fallthru
        _
      // Predicated region
      $region21: #{acl_forward.1} parent=11 // pred_check
        %p266 = pneg %p91
      $region22: #{acl_forward.1} parent=11 // pred_check_branch
        %268 = sbr.rel (%p266) target = $region24
      $region23: #{acl_forward.1} parent=11 // pred_region
        _
      $region24: #{acl_forward.1} parent=11 // pred_fallthru
        _
      // Predicated region
      $region25: #{acl_forward.1} parent=11 // pred_check
        %p269 = pneg %p112
      $region26: #{acl_forward.1} parent=11 // pred_check_branch
        %271 = sbr.rel (%p269) target = $region28
      $region27: #{acl_forward.1} parent=11 // pred_region
        _
      $region28: #{acl_forward.1} parent=11 // pred_fallthru
        _
      // Predicated region
      $region29: #{acl_forward.1} parent=11 // pred_check
        %p272 = pneg %p133
      $region30: #{acl_forward.1} parent=11 // pred_check_branch
        %274 = sbr.rel (%p272) target = $region32
      $region31: #{acl_forward.1} parent=11 // pred_region
        _
      $region32: #{acl_forward.1} parent=11 // pred_fallthru
        _
      // Predicated region
      $region33: #{acl_forward.1} parent=11 // pred_check
        %p275 = pneg %p154
      $region34: #{acl_forward.1} parent=11 // pred_check_branch
        %277 = sbr.rel (%p275) target = $region36
      $region35: #{acl_forward.1} parent=11 // pred_region
        _
      $region36: #{acl_forward.1} parent=11 // pred_fallthru
        _
      // Predicated region
      $region37: #{acl_forward.1} parent=11 // pred_check
        %p278 = pneg %p175
      $region38: #{acl_forward.1} parent=11 // pred_check_branch
        %280 = sbr.rel (%p278) target = $region40
      $region39: #{acl_forward.1} parent=11 // pred_region
        _
      $region40: #{acl_forward.1} parent=11 // pred_fallthru
        _
      // Predicated region
      $region41: #{acl_forward.1} parent=11 // pred_check
        %p281 = pneg %p196
      $region42: #{acl_forward.1} parent=11 // pred_check_branch
        %283 = sbr.rel (%p281) target = $region44
      $region43: #{acl_forward.1} parent=11 // pred_region
        _
      $region44: #{acl_forward.1} parent=11 // pred_fallthru
        _
      // Predicated region
      $region45: #{acl_forward.1} parent=11 // pred_check
        %p284 = pneg %p217
      $region46: #{acl_forward.1} parent=11 // pred_check_branch
        %286 = sbr.rel (%p284) target = $region48
      $region47: #{acl_forward.1} parent=11 // pred_region
        _
      $region48: #{acl_forward.1} parent=11 // pred_fallthru
        _
    $region12: #{acl_forward.1} parent=5 // pred_fallthru
      _
    %p287 = scmp.lt.s32.totalorder %s16, 4
    // Predicated region
    $region49: #{acl_forward.1} parent=5 // pred_check
      %p288 = pneg %p287
    $region50: #{acl_forward.1} parent=5 // pred_check_branch
      %290 = sbr.rel (%p288) target = $region52
    $region51: #{acl_forward.1} parent=5 // pred_region
      _
    $region52: #{acl_forward.1} parent=5 // pred_fallthru
      _
    %p291 = scmp.le.s32.totalorder 1, %s16
    %p292 = scmp.lt.s32.totalorder %s16, 5
    %p293 = pnand %p291, %p292
    %p294 = pneg %p293
    // Predicated region
    $region53: #{acl_forward.1} parent=5 // pred_check
      _
    $region54: #{acl_forward.1} parent=5 // pred_check_branch
      %296 = sbr.rel (%p293) target = $region56
    $region55: #{acl_forward.1} parent=5 // pred_region
      %s297 = ssub.s32 %s16, 1
      %p298 = pneg %p49
      %p299 = pneg %p46
      %p300 = pneg %p70
      %p301 = pneg %p67
      %p302 = pneg %p91
      %p303 = pneg %p88
      %p304 = pneg %p112
      %p305 = pneg %p109
      %p306 = pneg %p133
      %p307 = pneg %p130
      %p308 = pneg %p154
      %p309 = pneg %p151
      %p310 = pneg %p175
      %p311 = pneg %p172
      %p312 = pneg %p196
      %p313 = pneg %p193
      %p314 = pneg %p217
      %p315 = pneg %p214
      %p316 = pneg %p245
      %p317 = pneg %p242
      %s318 = smul.u32 8, %s26
      %p319 = scmp.lt.s32.totalorder %s25, 1
      %s320 = scalar_select %p319, %s25, 1
      %p321 = scmp.lt.s32.totalorder %s318, 15
      %s322 = scalar_select %p321, %s318, 15
      %s323 = smul.addr %s322, 2
      %s324 = smul.addr %s320, 32
      %s325 = sadd.s32 %s323, %s324
      %s326 = smul.addr %s325, 8
      %s327 = scalar_lea.vmem %s10, %s326
      %s328 = smul.u32 8, %s26
      %p329 = scmp.lt.s32.totalorder %s25, 1
      %s330 = scalar_select %p329, %s25, 1
      %p331 = scmp.lt.s32.totalorder %s328, 15
      %s332 = scalar_select %p331, %s328, 15
      %s333 = smul.addr %s332, 2
      %s334 = smul.addr %s330, 32
      %s335 = sadd.s32 %s333, %s334
      %s336 = smul.addr %s335, 8
      %s337 = scalar_lea.vmem %s10, %s336
      %s338 = smul.u32 8, %s26
      %p339 = scmp.lt.s32.totalorder %s26, 0
      %s340 = ssub.s32 0, %s26
      %s341 = scalar_select %p339, %s340, %s26
      %s342 = sand.u32 %s341, 1
      %s343 = ssub.s32 0, %s342
      %s344 = scalar_select %p339, %s343, %s342
      %p345 = scmp.ne.s32.totalorder %s344, 0
      %p346 = scmp.lt.s32.totalorder %s344, 0
      %p347 = pnand %p346, %p345
      %p348 = pneg %p347
      %s349 = sadd.s32 %s344, 2
      %s350 = scalar_select %p348, %s349, %s344
      %p351 = scmp.eq.s32.totalorder %s26, 0
      // Predicated region
      $region57: #{acl_forward.1} parent=55 // pred_check
        %p352 = pneg %p351
      $region58: #{acl_forward.1} parent=55 // pred_check_branch
        %354 = sbr.rel (%p352) target = $region60
      $region59: #{acl_forward.1} parent=55 // pred_region
        %s355 = smul.u32 %s26, 8
        %s356 = smul.u32 %s355, 32
        %s357 = smul.u32 %s25, 704
        %s358 = sadd.s32 %s356, %s357
        %s359 = scalar_lea.vmem %s0, %s358
        %s360 = smul.u32 %s350, 448
        %s361 = scalar_lea.vmem [#allocation2], %s360
        %s362 = scalar_lea.sflag [#allocation3], %s350
        %p364 = scmp.lt.u32.totalorder 448, 8
        %p365 = pneg %p364
        // Predicated region
        $region61: #{acl_forward.1} parent=59 // pred_check
          _
        $region62: #{acl_forward.1} parent=59 // pred_check_branch
          %367 = sbr.rel (%p364) target = $region64
        $region63: #{acl_forward.1} parent=59 // pred_region
          %s382 = sand.u32 448, 7
          %p383 = scmp.eq.s32.totalorder %s382, 0
          // Predicated region
          $region76: #{acl_forward.1} parent=63 // pred_check
            %p384 = pneg %p383
          $region77: #{acl_forward.1} parent=63 // pred_check_branch
            %386 = sbr.rel (%p384) target = $region79
          $region78: #{acl_forward.1} parent=63 // pred_region
            loop: start=0, step=1, limit=1
            $region80: #{acl_forward.1} parent=78 // loop_pre_header
              _
            $region81: #{acl_forward.1} parent=78 // loop_header
              %s388 = sphi 0, %s392
              %p389 = scmp.ge.s32.totalorder %s388, 1
              %s393 = sphi %s359, %s359
              %s394 = sphi %s361, %s361
            $region82: #{acl_forward.1} parent=78 // loop_header_branch
              %391 = sbr.rel (%p389) target = $region86
            $region83: #{acl_forward.1} parent=78 // loop_body
              %v395 = vld [vmem:[%s393] sm:$0xff]
              %396 = vst [vmem:[%s394] sm:$0xff] %v395
              %v397 = vld [vmem:[%s393 + $0x8] sm:$0xff]
              %398 = vst [vmem:[%s394 + $0x8] sm:$0xff] %v397
              %v399 = vld [vmem:[%s393 + $0x10] sm:$0xff]
              %400 = vst [vmem:[%s394 + $0x10] sm:$0xff] %v399
              %v401 = vld [vmem:[%s393 + $0x18] sm:$0xff]
              %402 = vst [vmem:[%s394 + $0x18] sm:$0xff] %v401
              %v403 = vld [vmem:[%s393 + $0x20] sm:$0xff]
              %404 = vst [vmem:[%s394 + $0x20] sm:$0xff] %v403
              %v405 = vld [vmem:[%s393 + $0x28] sm:$0xff]
              %406 = vst [vmem:[%s394 + $0x28] sm:$0xff] %v405
              %v407 = vld [vmem:[%s393 + $0x30] sm:$0xff]
              %408 = vst [vmem:[%s394 + $0x30] sm:$0xff] %v407
              %v409 = vld [vmem:[%s393 + $0x38] sm:$0xff]
              %410 = vst [vmem:[%s394 + $0x38] sm:$0xff] %v409
              %v411 = vld [vmem:[%s393 + $0x40] sm:$0xff]
              %412 = vst [vmem:[%s394 + $0x40] sm:$0xff] %v411
              %v413 = vld [vmem:[%s393 + $0x48] sm:$0xff]
              %414 = vst [vmem:[%s394 + $0x48] sm:$0xff] %v413
              %v415 = vld [vmem:[%s393 + $0x50] sm:$0xff]
              %416 = vst [vmem:[%s394 + $0x50] sm:$0xff] %v415
              %v417 = vld [vmem:[%s393 + $0x58] sm:$0xff]
              %418 = vst [vmem:[%s394 + $0x58] sm:$0xff] %v417
              %v419 = vld [vmem:[%s393 + $0x60] sm:$0xff]
              %420 = vst [vmem:[%s394 + $0x60] sm:$0xff] %v419
              %v421 = vld [vmem:[%s393 + $0x68] sm:$0xff]
              %422 = vst [vmem:[%s394 + $0x68] sm:$0xff] %v421
              %v423 = vld [vmem:[%s393 + $0x70] sm:$0xff]
              %424 = vst [vmem:[%s394 + $0x70] sm:$0xff] %v423
              %v425 = vld [vmem:[%s393 + $0x78] sm:$0xff]
              %426 = vst [vmem:[%s394 + $0x78] sm:$0xff] %v425
              %v427 = vld [vmem:[%s393 + $0x80] sm:$0xff]
              %428 = vst [vmem:[%s394 + $0x80] sm:$0xff] %v427
              %v429 = vld [vmem:[%s393 + $0x88] sm:$0xff]
              %430 = vst [vmem:[%s394 + $0x88] sm:$0xff] %v429
              %v431 = vld [vmem:[%s393 + $0x90] sm:$0xff]
              %432 = vst [vmem:[%s394 + $0x90] sm:$0xff] %v431
              %v433 = vld [vmem:[%s393 + $0x98] sm:$0xff]
              %434 = vst [vmem:[%s394 + $0x98] sm:$0xff] %v433
              %v435 = vld [vmem:[%s393 + $0xa0] sm:$0xff]
              %436 = vst [vmem:[%s394 + $0xa0] sm:$0xff] %v435
              %v437 = vld [vmem:[%s393 + $0xa8] sm:$0xff]
              %438 = vst [vmem:[%s394 + $0xa8] sm:$0xff] %v437
              %v439 = vld [vmem:[%s393 + $0xb0] sm:$0xff]
              %440 = vst [vmem:[%s394 + $0xb0] sm:$0xff] %v439
              %v441 = vld [vmem:[%s393 + $0xb8] sm:$0xff]
              %442 = vst [vmem:[%s394 + $0xb8] sm:$0xff] %v441
              %v443 = vld [vmem:[%s393 + $0xc0] sm:$0xff]
              %444 = vst [vmem:[%s394 + $0xc0] sm:$0xff] %v443
              %v445 = vld [vmem:[%s393 + $0xc8] sm:$0xff]
              %446 = vst [vmem:[%s394 + $0xc8] sm:$0xff] %v445
              %v447 = vld [vmem:[%s393 + $0xd0] sm:$0xff]
              %448 = vst [vmem:[%s394 + $0xd0] sm:$0xff] %v447
              %v449 = vld [vmem:[%s393 + $0xd8] sm:$0xff]
              %450 = vst [vmem:[%s394 + $0xd8] sm:$0xff] %v449
              %v451 = vld [vmem:[%s393 + $0xe0] sm:$0xff]
              %452 = vst [vmem:[%s394 + $0xe0] sm:$0xff] %v451
              %v453 = vld [vmem:[%s393 + $0xe8] sm:$0xff]
              %454 = vst [vmem:[%s394 + $0xe8] sm:$0xff] %v453
              %v455 = vld [vmem:[%s393 + $0xf0] sm:$0xff]
              %456 = vst [vmem:[%s394 + $0xf0] sm:$0xff] %v455
              %v457 = vld [vmem:[%s393 + $0xf8] sm:$0xff]
              %458 = vst [vmem:[%s394 + $0xf8] sm:$0xff] %v457
              %v459 = vld [vmem:[%s393 + $0x100] sm:$0xff]
              %460 = vst [vmem:[%s394 + $0x100] sm:$0xff] %v459
              %v461 = vld [vmem:[%s393 + $0x108] sm:$0xff]
              %462 = vst [vmem:[%s394 + $0x108] sm:$0xff] %v461
              %v463 = vld [vmem:[%s393 + $0x110] sm:$0xff]
              %464 = vst [vmem:[%s394 + $0x110] sm:$0xff] %v463
              %v465 = vld [vmem:[%s393 + $0x118] sm:$0xff]
              %466 = vst [vmem:[%s394 + $0x118] sm:$0xff] %v465
              %v467 = vld [vmem:[%s393 + $0x120] sm:$0xff]
              %468 = vst [vmem:[%s394 + $0x120] sm:$0xff] %v467
              %v469 = vld [vmem:[%s393 + $0x128] sm:$0xff]
              %470 = vst [vmem:[%s394 + $0x128] sm:$0xff] %v469
              %v471 = vld [vmem:[%s393 + $0x130] sm:$0xff]
              %472 = vst [vmem:[%s394 + $0x130] sm:$0xff] %v471
              %v473 = vld [vmem:[%s393 + $0x138] sm:$0xff]
              %474 = vst [vmem:[%s394 + $0x138] sm:$0xff] %v473
              %v475 = vld [vmem:[%s393 + $0x140] sm:$0xff]
              %476 = vst [vmem:[%s394 + $0x140] sm:$0xff] %v475
              %v477 = vld [vmem:[%s393 + $0x148] sm:$0xff]
              %478 = vst [vmem:[%s394 + $0x148] sm:$0xff] %v477
              %v479 = vld [vmem:[%s393 + $0x150] sm:$0xff]
              %480 = vst [vmem:[%s394 + $0x150] sm:$0xff] %v479
              %v481 = vld [vmem:[%s393 + $0x158] sm:$0xff]
              %482 = vst [vmem:[%s394 + $0x158] sm:$0xff] %v481
              %v483 = vld [vmem:[%s393 + $0x160] sm:$0xff]
              %484 = vst [vmem:[%s394 + $0x160] sm:$0xff] %v483
              %v485 = vld [vmem:[%s393 + $0x168] sm:$0xff]
              %486 = vst [vmem:[%s394 + $0x168] sm:$0xff] %v485
              %v487 = vld [vmem:[%s393 + $0x170] sm:$0xff]
              %488 = vst [vmem:[%s394 + $0x170] sm:$0xff] %v487
              %v489 = vld [vmem:[%s393 + $0x178] sm:$0xff]
              %490 = vst [vmem:[%s394 + $0x178] sm:$0xff] %v489
              %v491 = vld [vmem:[%s393 + $0x180] sm:$0xff]
              %492 = vst [vmem:[%s394 + $0x180] sm:$0xff] %v491
              %v493 = vld [vmem:[%s393 + $0x188] sm:$0xff]
              %494 = vst [vmem:[%s394 + $0x188] sm:$0xff] %v493
              %v495 = vld [vmem:[%s393 + $0x190] sm:$0xff]
              %496 = vst [vmem:[%s394 + $0x190] sm:$0xff] %v495
              %v497 = vld [vmem:[%s393 + $0x198] sm:$0xff]
              %498 = vst [vmem:[%s394 + $0x198] sm:$0xff] %v497
              %v499 = vld [vmem:[%s393 + $0x1a0] sm:$0xff]
              %500 = vst [vmem:[%s394 + $0x1a0] sm:$0xff] %v499
              %v501 = vld [vmem:[%s393 + $0x1a8] sm:$0xff]
              %502 = vst [vmem:[%s394 + $0x1a8] sm:$0xff] %v501
              %v503 = vld [vmem:[%s393 + $0x1b0] sm:$0xff]
              %504 = vst [vmem:[%s394 + $0x1b0] sm:$0xff] %v503
              %v505 = vld [vmem:[%s393 + $0x1b8] sm:$0xff]
              %506 = vst [vmem:[%s394 + $0x1b8] sm:$0xff] %v505
            $region84: #{acl_forward.1} parent=78 // loop_footer
              %s392 = sadd.s32 1, %s388
            $region85: #{acl_forward.1} parent=78 // loop_footer_branch
              %387 = sbr.rel target = $region81
            $region86: #{acl_forward.1} parent=78 // loop_exit
              _
          $region79: #{acl_forward.1} parent=63 // pred_fallthru
            _
          %p507 = pneg %p383
          // Predicated region
          $region87: #{acl_forward.1} parent=63 // pred_check
            _
          $region88: #{acl_forward.1} parent=63 // pred_check_branch
            %509 = sbr.rel (%p383) target = $region90
          $region89: #{acl_forward.1} parent=63 // pred_region
            %s510 = sand.u32 448, 7
          $region90: #{acl_forward.1} parent=63 // pred_fallthru
            _
        $region64: #{acl_forward.1} parent=59 // pred_fallthru
          _
        // Predicated region
        $region65: #{acl_forward.1} parent=59 // pred_check
          %p368 = pneg %p364
        $region66: #{acl_forward.1} parent=59 // pred_check_branch
          %370 = sbr.rel (%p368) target = $region68
        $region67: #{acl_forward.1} parent=59 // pred_region
          %s371 = sshllo.u32 0, 448
          loop: start=0, step=1, limit=1
          $region69: #{acl_forward.1} parent=67 // loop_pre_header
            _
          $region70: #{acl_forward.1} parent=67 // loop_header
            %s373 = sphi 0, %s377
            %p374 = scmp.ge.s32.totalorder %s373, 1
            %s378 = sphi %s359, %s359
            %s379 = sphi %s361, %s361
          $region71: #{acl_forward.1} parent=67 // loop_header_branch
            %376 = sbr.rel (%p374) target = $region75
          $region72: #{acl_forward.1} parent=67 // loop_body
            %v380 = vld [vmem:[%s378] sm:%s371]
            %381 = vst [vmem:[%s379] sm:%s371] %v380
          $region73: #{acl_forward.1} parent=67 // loop_footer
            %s377 = sadd.s32 1, %s373
          $region74: #{acl_forward.1} parent=67 // loop_footer_branch
            %372 = sbr.rel target = $region70
          $region75: #{acl_forward.1} parent=67 // loop_exit
            _
        $region68: #{acl_forward.1} parent=59 // pred_fallthru
          _
        // Predicated region
        $region91: #{acl_forward.1} parent=59 // pred_check
          _
        $region92: #{acl_forward.1} parent=59 // pred_check_branch
          %513 = sbr.rel (0) target = $region94
        $region93: #{acl_forward.1} parent=59 // pred_region
          %514 = vsyncadd %s362, 7168
        $region94: #{acl_forward.1} parent=59 // pred_fallthru
          _
      $region60: #{acl_forward.1} parent=55 // pred_fallthru
        _
      %s515 = sadd.s32 %s26, 1
      %p516 = scmp.lt.s32.totalorder %s515, 2
      // Predicated region
      $region95: #{acl_forward.1} parent=55 // pred_check
        %p517 = pneg %p516
      $region96: #{acl_forward.1} parent=55 // pred_check_branch
        %519 = sbr.rel (%p517) target = $region98
      $region97: #{acl_forward.1} parent=55 // pred_region
        %s520 = ssub.s32 1, %s350
        %s521 = smul.u32 %s515, 8
        %s522 = smul.u32 %s521, 32
        %s523 = smul.u32 %s25, 704
        %s524 = sadd.s32 %s522, %s523
        %s525 = scalar_lea.vmem %s0, %s524
        %s526 = smul.u32 %s520, 448
        %s527 = scalar_lea.vmem [#allocation2], %s526
        %s528 = scalar_lea.sflag [#allocation3], %s520
        %p530 = scmp.lt.u32.totalorder 448, 8
        %p531 = pneg %p530
        // Predicated region
        $region99: #{acl_forward.1} parent=97 // pred_check
          _
        $region100: #{acl_forward.1} parent=97 // pred_check_branch
          %533 = sbr.rel (%p530) target = $region102
        $region101: #{acl_forward.1} parent=97 // pred_region
          %s548 = sand.u32 448, 7
          %p549 = scmp.eq.s32.totalorder %s548, 0
          // Predicated region
          $region114: #{acl_forward.1} parent=101 // pred_check
            %p550 = pneg %p549
          $region115: #{acl_forward.1} parent=101 // pred_check_branch
            %552 = sbr.rel (%p550) target = $region117
          $region116: #{acl_forward.1} parent=101 // pred_region
            loop: start=0, step=1, limit=1
            $region118: #{acl_forward.1} parent=116 // loop_pre_header
              _
            $region119: #{acl_forward.1} parent=116 // loop_header
              %s554 = sphi 0, %s558
              %p555 = scmp.ge.s32.totalorder %s554, 1
              %s559 = sphi %s525, %s525
              %s560 = sphi %s527, %s527
            $region120: #{acl_forward.1} parent=116 // loop_header_branch
              %557 = sbr.rel (%p555) target = $region124
            $region121: #{acl_forward.1} parent=116 // loop_body
              %v561 = vld [vmem:[%s559] sm:$0xff]
              %562 = vst [vmem:[%s560] sm:$0xff] %v561
              %v563 = vld [vmem:[%s559 + $0x8] sm:$0xff]
              %564 = vst [vmem:[%s560 + $0x8] sm:$0xff] %v563
              %v565 = vld [vmem:[%s559 + $0x10] sm:$0xff]
              %566 = vst [vmem:[%s560 + $0x10] sm:$0xff] %v565
              %v567 = vld [vmem:[%s559 + $0x18] sm:$0xff]
              %568 = vst [vmem:[%s560 + $0x18] sm:$0xff] %v567
              %v569 = vld [vmem:[%s559 + $0x20] sm:$0xff]
              %570 = vst [vmem:[%s560 + $0x20] sm:$0xff] %v569
              %v571 = vld [vmem:[%s559 + $0x28] sm:$0xff]
              %572 = vst [vmem:[%s560 + $0x28] sm:$0xff] %v571
              %v573 = vld [vmem:[%s559 + $0x30] sm:$0xff]
              %574 = vst [vmem:[%s560 + $0x30] sm:$0xff] %v573
              %v575 = vld [vmem:[%s559 + $0x38] sm:$0xff]
              %576 = vst [vmem:[%s560 + $0x38] sm:$0xff] %v575
              %v577 = vld [vmem:[%s559 + $0x40] sm:$0xff]
              %578 = vst [vmem:[%s560 + $0x40] sm:$0xff] %v577
              %v579 = vld [vmem:[%s559 + $0x48] sm:$0xff]
              %580 = vst [vmem:[%s560 + $0x48] sm:$0xff] %v579
              %v581 = vld [vmem:[%s559 + $0x50] sm:$0xff]
              %582 = vst [vmem:[%s560 + $0x50] sm:$0xff] %v581
              %v583 = vld [vmem:[%s559 + $0x58] sm:$0xff]
              %584 = vst [vmem:[%s560 + $0x58] sm:$0xff] %v583
              %v585 = vld [vmem:[%s559 + $0x60] sm:$0xff]
              %586 = vst [vmem:[%s560 + $0x60] sm:$0xff] %v585
              %v587 = vld [vmem:[%s559 + $0x68] sm:$0xff]
              %588 = vst [vmem:[%s560 + $0x68] sm:$0xff] %v587
              %v589 = vld [vmem:[%s559 + $0x70] sm:$0xff]
              %590 = vst [vmem:[%s560 + $0x70] sm:$0xff] %v589
              %v591 = vld [vmem:[%s559 + $0x78] sm:$0xff]
              %592 = vst [vmem:[%s560 + $0x78] sm:$0xff] %v591
              %v593 = vld [vmem:[%s559 + $0x80] sm:$0xff]
              %594 = vst [vmem:[%s560 + $0x80] sm:$0xff] %v593
              %v595 = vld [vmem:[%s559 + $0x88] sm:$0xff]
              %596 = vst [vmem:[%s560 + $0x88] sm:$0xff] %v595
              %v597 = vld [vmem:[%s559 + $0x90] sm:$0xff]
              %598 = vst [vmem:[%s560 + $0x90] sm:$0xff] %v597
              %v599 = vld [vmem:[%s559 + $0x98] sm:$0xff]
              %600 = vst [vmem:[%s560 + $0x98] sm:$0xff] %v599
              %v601 = vld [vmem:[%s559 + $0xa0] sm:$0xff]
              %602 = vst [vmem:[%s560 + $0xa0] sm:$0xff] %v601
              %v603 = vld [vmem:[%s559 + $0xa8] sm:$0xff]
              %604 = vst [vmem:[%s560 + $0xa8] sm:$0xff] %v603
              %v605 = vld [vmem:[%s559 + $0xb0] sm:$0xff]
              %606 = vst [vmem:[%s560 + $0xb0] sm:$0xff] %v605
              %v607 = vld [vmem:[%s559 + $0xb8] sm:$0xff]
              %608 = vst [vmem:[%s560 + $0xb8] sm:$0xff] %v607
              %v609 = vld [vmem:[%s559 + $0xc0] sm:$0xff]
              %610 = vst [vmem:[%s560 + $0xc0] sm:$0xff] %v609
              %v611 = vld [vmem:[%s559 + $0xc8] sm:$0xff]
              %612 = vst [vmem:[%s560 + $0xc8] sm:$0xff] %v611
              %v613 = vld [vmem:[%s559 + $0xd0] sm:$0xff]
              %614 = vst [vmem:[%s560 + $0xd0] sm:$0xff] %v613
              %v615 = vld [vmem:[%s559 + $0xd8] sm:$0xff]
              %616 = vst [vmem:[%s560 + $0xd8] sm:$0xff] %v615
              %v617 = vld [vmem:[%s559 + $0xe0] sm:$0xff]
              %618 = vst [vmem:[%s560 + $0xe0] sm:$0xff] %v617
              %v619 = vld [vmem:[%s559 + $0xe8] sm:$0xff]
              %620 = vst [vmem:[%s560 + $0xe8] sm:$0xff] %v619
              %v621 = vld [vmem:[%s559 + $0xf0] sm:$0xff]
              %622 = vst [vmem:[%s560 + $0xf0] sm:$0xff] %v621
              %v623 = vld [vmem:[%s559 + $0xf8] sm:$0xff]
              %624 = vst [vmem:[%s560 + $0xf8] sm:$0xff] %v623
              %v625 = vld [vmem:[%s559 + $0x100] sm:$0xff]
              %626 = vst [vmem:[%s560 + $0x100] sm:$0xff] %v625
              %v627 = vld [vmem:[%s559 + $0x108] sm:$0xff]
              %628 = vst [vmem:[%s560 + $0x108] sm:$0xff] %v627
              %v629 = vld [vmem:[%s559 + $0x110] sm:$0xff]
              %630 = vst [vmem:[%s560 + $0x110] sm:$0xff] %v629
              %v631 = vld [vmem:[%s559 + $0x118] sm:$0xff]
              %632 = vst [vmem:[%s560 + $0x118] sm:$0xff] %v631
              %v633 = vld [vmem:[%s559 + $0x120] sm:$0xff]
              %634 = vst [vmem:[%s560 + $0x120] sm:$0xff] %v633
              %v635 = vld [vmem:[%s559 + $0x128] sm:$0xff]
              %636 = vst [vmem:[%s560 + $0x128] sm:$0xff] %v635
              %v637 = vld [vmem:[%s559 + $0x130] sm:$0xff]
              %638 = vst [vmem:[%s560 + $0x130] sm:$0xff] %v637
              %v639 = vld [vmem:[%s559 + $0x138] sm:$0xff]
              %640 = vst [vmem:[%s560 + $0x138] sm:$0xff] %v639
              %v641 = vld [vmem:[%s559 + $0x140] sm:$0xff]
              %642 = vst [vmem:[%s560 + $0x140] sm:$0xff] %v641
              %v643 = vld [vmem:[%s559 + $0x148] sm:$0xff]
              %644 = vst [vmem:[%s560 + $0x148] sm:$0xff] %v643
              %v645 = vld [vmem:[%s559 + $0x150] sm:$0xff]
              %646 = vst [vmem:[%s560 + $0x150] sm:$0xff] %v645
              %v647 = vld [vmem:[%s559 + $0x158] sm:$0xff]
              %648 = vst [vmem:[%s560 + $0x158] sm:$0xff] %v647
              %v649 = vld [vmem:[%s559 + $0x160] sm:$0xff]
              %650 = vst [vmem:[%s560 + $0x160] sm:$0xff] %v649
              %v651 = vld [vmem:[%s559 + $0x168] sm:$0xff]
              %652 = vst [vmem:[%s560 + $0x168] sm:$0xff] %v651
              %v653 = vld [vmem:[%s559 + $0x170] sm:$0xff]
              %654 = vst [vmem:[%s560 + $0x170] sm:$0xff] %v653
              %v655 = vld [vmem:[%s559 + $0x178] sm:$0xff]
              %656 = vst [vmem:[%s560 + $0x178] sm:$0xff] %v655
              %v657 = vld [vmem:[%s559 + $0x180] sm:$0xff]
              %658 = vst [vmem:[%s560 + $0x180] sm:$0xff] %v657
              %v659 = vld [vmem:[%s559 + $0x188] sm:$0xff]
              %660 = vst [vmem:[%s560 + $0x188] sm:$0xff] %v659
              %v661 = vld [vmem:[%s559 + $0x190] sm:$0xff]
              %662 = vst [vmem:[%s560 + $0x190] sm:$0xff] %v661
              %v663 = vld [vmem:[%s559 + $0x198] sm:$0xff]
              %664 = vst [vmem:[%s560 + $0x198] sm:$0xff] %v663
              %v665 = vld [vmem:[%s559 + $0x1a0] sm:$0xff]
              %666 = vst [vmem:[%s560 + $0x1a0] sm:$0xff] %v665
              %v667 = vld [vmem:[%s559 + $0x1a8] sm:$0xff]
              %668 = vst [vmem:[%s560 + $0x1a8] sm:$0xff] %v667
              %v669 = vld [vmem:[%s559 + $0x1b0] sm:$0xff]
              %670 = vst [vmem:[%s560 + $0x1b0] sm:$0xff] %v669
              %v671 = vld [vmem:[%s559 + $0x1b8] sm:$0xff]
              %672 = vst [vmem:[%s560 + $0x1b8] sm:$0xff] %v671
            $region122: #{acl_forward.1} parent=116 // loop_footer
              %s558 = sadd.s32 1, %s554
            $region123: #{acl_forward.1} parent=116 // loop_footer_branch
              %553 = sbr.rel target = $region119
            $region124: #{acl_forward.1} parent=116 // loop_exit
              _
          $region117: #{acl_forward.1} parent=101 // pred_fallthru
            _
          %p673 = pneg %p549
          // Predicated region
          $region125: #{acl_forward.1} parent=101 // pred_check
            _
          $region126: #{acl_forward.1} parent=101 // pred_check_branch
            %675 = sbr.rel (%p549) target = $region128
          $region127: #{acl_forward.1} parent=101 // pred_region
            %s676 = sand.u32 448, 7
          $region128: #{acl_forward.1} parent=101 // pred_fallthru
            _
        $region102: #{acl_forward.1} parent=97 // pred_fallthru
          _
        // Predicated region
        $region103: #{acl_forward.1} parent=97 // pred_check
          %p534 = pneg %p530
        $region104: #{acl_forward.1} parent=97 // pred_check_branch
          %536 = sbr.rel (%p534) target = $region106
        $region105: #{acl_forward.1} parent=97 // pred_region
          %s537 = sshllo.u32 0, 448
          loop: start=0, step=1, limit=1
          $region107: #{acl_forward.1} parent=105 // loop_pre_header
            _
          $region108: #{acl_forward.1} parent=105 // loop_header
            %s539 = sphi 0, %s543
            %p540 = scmp.ge.s32.totalorder %s539, 1
            %s544 = sphi %s525, %s525
            %s545 = sphi %s527, %s527
          $region109: #{acl_forward.1} parent=105 // loop_header_branch
            %542 = sbr.rel (%p540) target = $region113
          $region110: #{acl_forward.1} parent=105 // loop_body
            %v546 = vld [vmem:[%s544] sm:%s537]
            %547 = vst [vmem:[%s545] sm:%s537] %v546
          $region111: #{acl_forward.1} parent=105 // loop_footer
            %s543 = sadd.s32 1, %s539
          $region112: #{acl_forward.1} parent=105 // loop_footer_branch
            %538 = sbr.rel target = $region108
          $region113: #{acl_forward.1} parent=105 // loop_exit
            _
        $region106: #{acl_forward.1} parent=97 // pred_fallthru
          _
        // Predicated region
        $region129: #{acl_forward.1} parent=97 // pred_check
          _
        $region130: #{acl_forward.1} parent=97 // pred_check_branch
          %679 = sbr.rel (0) target = $region132
        $region131: #{acl_forward.1} parent=97 // pred_region
          %680 = vsyncadd %s528, 7168
        $region132: #{acl_forward.1} parent=97 // pred_fallthru
          _
      $region98: #{acl_forward.1} parent=55 // pred_fallthru
        _
      %s681 = smul.u32 %s350, 448
      %s682 = scalar_lea.vmem [#allocation2], %s681
      %s683 = scalar_lea.sflag [#allocation3], %s350
      %s684 = smul.u32 14, 32
      %s685 = smul.u32 %s684, 1
      %s686 = sshll.u32 %s685, 4
      %687 = dma.done %s683, %s686
      %v688 = vld [vmem:[%s1] sm:$0x7f]
      %v689 = vld [vmem:[%s1 + $0x8] sm:$0x7f]
      %v690 = vld [vmem:[%s1 + $0x10] sm:$0x7f]
      %v691 = vld [vmem:[%s1 + $0x18] sm:$0x7f]
      %v692 = vld [vmem:[%s1 + $0x20] sm:$0x7f]
      %v693 = vld [vmem:[%s1 + $0x28] sm:$0x7f]
      %v694 = vld [vmem:[%s1 + $0x30] sm:$0x7f]
      %v695 = vld [vmem:[%s682 + $0x5] sm:$0xff]
      %v696 = vld [vmem:[%s682 + $0xd] sm:$0xff]
      %v697 = vld [vmem:[%s682 + $0x25] sm:$0xff]
      %v698 = vld [vmem:[%s682 + $0x2d] sm:$0xff]
      %v699 = vld [vmem:[%s682 + $0x45] sm:$0xff]
      %v700 = vld [vmem:[%s682 + $0x4d] sm:$0xff]
      %v701 = vld [vmem:[%s682 + $0x65] sm:$0xff]
      %v702 = vld [vmem:[%s682 + $0x6d] sm:$0xff]
      %v703 = vld [vmem:[%s682 + $0x85] sm:$0xff]
      %v704 = vld [vmem:[%s682 + $0x8d] sm:$0xff]
      %v705 = vld [vmem:[%s682 + $0xa5] sm:$0xff]
      %v706 = vld [vmem:[%s682 + $0xad] sm:$0xff]
      %v707 = vld [vmem:[%s682 + $0xc5] sm:$0xff]
      %v708 = vld [vmem:[%s682 + $0xcd] sm:$0xff]
      %v709 = vld [vmem:[%s682 + $0xe5] sm:$0xff]
      %v710 = vld [vmem:[%s682 + $0xed] sm:$0xff]
      %v711 = vlaneseq
      %v712 = vshrl.u32 %v711, 7
      %v713 = vsub.s32 0, %v712
      %v714 = vrot.slane %v688, %v713
      %v715 = vmul.f32 %v695, %v714
      %v716 = vmul.f32 %v696, %v714
      %v717 = vmul.f32 %v697, %v714
      %v718 = vmul.f32 %v698, %v714
      %v719 = vmul.f32 %v699, %v714
      %v720 = vmul.f32 %v700, %v714
      %v721 = vmul.f32 %v701, %v714
      %v722 = vmul.f32 %v702, %v714
      %v723 = vmul.f32 %v703, %v714
      %v724 = vmul.f32 %v704, %v714
      %v725 = vmul.f32 %v705, %v714
      %v726 = vmul.f32 %v706, %v714
      %v727 = vmul.f32 %v707, %v714
      %v728 = vmul.f32 %v708, %v714
      %v729 = vmul.f32 %v709, %v714
      %v730 = vmul.f32 %v710, %v714
      %v731 = vadd.f32 %v715, 0.0
      %v732 = vadd.f32 %v716, 0.0
      %v733 = vadd.f32 %v717, 0.0
      %v734 = vadd.f32 %v718, 0.0
      %v735 = vadd.f32 %v719, 0.0
      %v736 = vadd.f32 %v720, 0.0
      %v737 = vadd.f32 %v721, 0.0
      %v738 = vadd.f32 %v722, 0.0
      %v739 = vadd.f32 %v723, 0.0
      %v740 = vadd.f32 %v724, 0.0
      %v741 = vadd.f32 %v725, 0.0
      %v742 = vadd.f32 %v726, 0.0
      %v743 = vadd.f32 %v727, 0.0
      %v744 = vadd.f32 %v728, 0.0
      %v745 = vadd.f32 %v729, 0.0
      %v746 = vadd.f32 %v730, 0.0
      %v747 = vld [vmem:[%s682 + $0x6] sm:$0xff]
      %v748 = vld [vmem:[%s682 + $0xe] sm:$0xff]
      %v749 = vld [vmem:[%s682 + $0x26] sm:$0xff]
      %v750 = vld [vmem:[%s682 + $0x2e] sm:$0xff]
      %v751 = vld [vmem:[%s682 + $0x46] sm:$0xff]
      %v752 = vld [vmem:[%s682 + $0x4e] sm:$0xff]
      %v753 = vld [vmem:[%s682 + $0x66] sm:$0xff]
      %v754 = vld [vmem:[%s682 + $0x6e] sm:$0xff]
      %v755 = vld [vmem:[%s682 + $0x86] sm:$0xff]
      %v756 = vld [vmem:[%s682 + $0x8e] sm:$0xff]
      %v757 = vld [vmem:[%s682 + $0xa6] sm:$0xff]
      %v758 = vld [vmem:[%s682 + $0xae] sm:$0xff]
      %v759 = vld [vmem:[%s682 + $0xc6] sm:$0xff]
      %v760 = vld [vmem:[%s682 + $0xce] sm:$0xff]
      %v761 = vld [vmem:[%s682 + $0xe6] sm:$0xff]
      %v762 = vld [vmem:[%s682 + $0xee] sm:$0xff]
      %v763 = vlaneseq
      %v764 = vshrl.u32 %v763, 7
      %v765 = vsub.s32 1, %v764
      %v766 = vrot.slane %v688, %v765
      %v767 = vmul.f32 %v747, %v766
      %v768 = vmul.f32 %v748, %v766
      %v769 = vmul.f32 %v749, %v766
      %v770 = vmul.f32 %v750, %v766
      %v771 = vmul.f32 %v751, %v766
      %v772 = vmul.f32 %v752, %v766
      %v773 = vmul.f32 %v753, %v766
      %v774 = vmul.f32 %v754, %v766
      %v775 = vmul.f32 %v755, %v766
      %v776 = vmul.f32 %v756, %v766
      %v777 = vmul.f32 %v757, %v766
      %v778 = vmul.f32 %v758, %v766
      %v779 = vmul.f32 %v759, %v766
      %v780 = vmul.f32 %v760, %v766
      %v781 = vmul.f32 %v761, %v766
      %v782 = vmul.f32 %v762, %v766
      %v783 = vadd.f32 %v731, %v767
      %v784 = vadd.f32 %v732, %v768
      %v785 = vadd.f32 %v733, %v769
      %v786 = vadd.f32 %v734, %v770
      %v787 = vadd.f32 %v735, %v771
      %v788 = vadd.f32 %v736, %v772
      %v789 = vadd.f32 %v737, %v773
      %v790 = vadd.f32 %v738, %v774
      %v791 = vadd.f32 %v739, %v775
      %v792 = vadd.f32 %v740, %v776
      %v793 = vadd.f32 %v741, %v777
      %v794 = vadd.f32 %v742, %v778
      %v795 = vadd.f32 %v743, %v779
      %v796 = vadd.f32 %v744, %v780
      %v797 = vadd.f32 %v745, %v781
      %v798 = vadd.f32 %v746, %v782
      %v799 = vld [vmem:[%s682 + $0x7] sm:$0xff]
      %v800 = vld [vmem:[%s682 + $0xf] sm:$0xff]
      %v801 = vld [vmem:[%s682 + $0x27] sm:$0xff]
      %v802 = vld [vmem:[%s682 + $0x2f] sm:$0xff]
      %v803 = vld [vmem:[%s682 + $0x47] sm:$0xff]
      %v804 = vld [vmem:[%s682 + $0x4f] sm:$0xff]
      %v805 = vld [vmem:[%s682 + $0x67] sm:$0xff]
      %v806 = vld [vmem:[%s682 + $0x6f] sm:$0xff]
      %v807 = vld [vmem:[%s682 + $0x87] sm:$0xff]
      %v808 = vld [vmem:[%s682 + $0x8f] sm:$0xff]
      %v809 = vld [vmem:[%s682 + $0xa7] sm:$0xff]
      %v810 = vld [vmem:[%s682 + $0xaf] sm:$0xff]
      %v811 = vld [vmem:[%s682 + $0xc7] sm:$0xff]
      %v812 = vld [vmem:[%s682 + $0xcf] sm:$0xff]
      %v813 = vld [vmem:[%s682 + $0xe7] sm:$0xff]
      %v814 = vld [vmem:[%s682 + $0xef] sm:$0xff]
      %v815 = vlaneseq
      %v816 = vshrl.u32 %v815, 7
      %v817 = vsub.s32 2, %v816
      %v818 = vrot.slane %v688, %v817
      %v819 = vmul.f32 %v799, %v818
      %v820 = vmul.f32 %v800, %v818
      %v821 = vmul.f32 %v801, %v818
      %v822 = vmul.f32 %v802, %v818
      %v823 = vmul.f32 %v803, %v818
      %v824 = vmul.f32 %v804, %v818
      %v825 = vmul.f32 %v805, %v818
      %v826 = vmul.f32 %v806, %v818
      %v827 = vmul.f32 %v807, %v818
      %v828 = vmul.f32 %v808, %v818
      %v829 = vmul.f32 %v809, %v818
      %v830 = vmul.f32 %v810, %v818
      %v831 = vmul.f32 %v811, %v818
      %v832 = vmul.f32 %v812, %v818
      %v833 = vmul.f32 %v813, %v818
      %v834 = vmul.f32 %v814, %v818
      %v835 = vadd.f32 %v783, %v819
      %v836 = vadd.f32 %v784, %v820
      %v837 = vadd.f32 %v785, %v821
      %v838 = vadd.f32 %v786, %v822
      %v839 = vadd.f32 %v787, %v823
      %v840 = vadd.f32 %v788, %v824
      %v841 = vadd.f32 %v789, %v825
      %v842 = vadd.f32 %v790, %v826
      %v843 = vadd.f32 %v791, %v827
      %v844 = vadd.f32 %v792, %v828
      %v845 = vadd.f32 %v793, %v829
      %v846 = vadd.f32 %v794, %v830
      %v847 = vadd.f32 %v795, %v831
      %v848 = vadd.f32 %v796, %v832
      %v849 = vadd.f32 %v797, %v833
      %v850 = vadd.f32 %v798, %v834
      %v851 = vld [vmem:[%s682 + $0x8] sm:$0xff]
      %v852 = vld [vmem:[%s682 + $0x10] sm:$0xff]
      %v853 = vld [vmem:[%s682 + $0x28] sm:$0xff]
      %v854 = vld [vmem:[%s682 + $0x30] sm:$0xff]
      %v855 = vld [vmem:[%s682 + $0x48] sm:$0xff]
      %v856 = vld [vmem:[%s682 + $0x50] sm:$0xff]
      %v857 = vld [vmem:[%s682 + $0x68] sm:$0xff]
      %v858 = vld [vmem:[%s682 + $0x70] sm:$0xff]
      %v859 = vld [vmem:[%s682 + $0x88] sm:$0xff]
      %v860 = vld [vmem:[%s682 + $0x90] sm:$0xff]
      %v861 = vld [vmem:[%s682 + $0xa8] sm:$0xff]
      %v862 = vld [vmem:[%s682 + $0xb0] sm:$0xff]
      %v863 = vld [vmem:[%s682 + $0xc8] sm:$0xff]
      %v864 = vld [vmem:[%s682 + $0xd0] sm:$0xff]
      %v865 = vld [vmem:[%s682 + $0xe8] sm:$0xff]
      %v866 = vld [vmem:[%s682 + $0xf0] sm:$0xff]
      %v867 = vlaneseq
      %v868 = vshrl.u32 %v867, 7
      %v869 = vsub.s32 3, %v868
      %v870 = vrot.slane %v688, %v869
      %v871 = vmul.f32 %v851, %v870
      %v872 = vmul.f32 %v852, %v870
      %v873 = vmul.f32 %v853, %v870
      %v874 = vmul.f32 %v854, %v870
      %v875 = vmul.f32 %v855, %v870
      %v876 = vmul.f32 %v856, %v870
      %v877 = vmul.f32 %v857, %v870
      %v878 = vmul.f32 %v858, %v870
      %v879 = vmul.f32 %v859, %v870
      %v880 = vmul.f32 %v860, %v870
      %v881 = vmul.f32 %v861, %v870
      %v882 = vmul.f32 %v862, %v870
      %v883 = vmul.f32 %v863, %v870
      %v884 = vmul.f32 %v864, %v870
      %v885 = vmul.f32 %v865, %v870
      %v886 = vmul.f32 %v866, %v870
      %v887 = vadd.f32 %v835, %v871
      %v888 = vadd.f32 %v836, %v872
      %v889 = vadd.f32 %v837, %v873
      %v890 = vadd.f32 %v838, %v874
      %v891 = vadd.f32 %v839, %v875
      %v892 = vadd.f32 %v840, %v876
      %v893 = vadd.f32 %v841, %v877
      %v894 = vadd.f32 %v842, %v878
      %v895 = vadd.f32 %v843, %v879
      %v896 = vadd.f32 %v844, %v880
      %v897 = vadd.f32 %v845, %v881
      %v898 = vadd.f32 %v846, %v882
      %v899 = vadd.f32 %v847, %v883
      %v900 = vadd.f32 %v848, %v884
      %v901 = vadd.f32 %v849, %v885
      %v902 = vadd.f32 %v850, %v886
      %v903 = vld [vmem:[%s682 + $0x9] sm:$0xff]
      %v904 = vld [vmem:[%s682 + $0x11] sm:$0xff]
      %v905 = vld [vmem:[%s682 + $0x29] sm:$0xff]
      %v906 = vld [vmem:[%s682 + $0x31] sm:$0xff]
      %v907 = vld [vmem:[%s682 + $0x49] sm:$0xff]
      %v908 = vld [vmem:[%s682 + $0x51] sm:$0xff]
      %v909 = vld [vmem:[%s682 + $0x69] sm:$0xff]
      %v910 = vld [vmem:[%s682 + $0x71] sm:$0xff]
      %v911 = vld [vmem:[%s682 + $0x89] sm:$0xff]
      %v912 = vld [vmem:[%s682 + $0x91] sm:$0xff]
      %v913 = vld [vmem:[%s682 + $0xa9] sm:$0xff]
      %v914 = vld [vmem:[%s682 + $0xb1] sm:$0xff]
      %v915 = vld [vmem:[%s682 + $0xc9] sm:$0xff]
      %v916 = vld [vmem:[%s682 + $0xd1] sm:$0xff]
      %v917 = vld [vmem:[%s682 + $0xe9] sm:$0xff]
      %v918 = vld [vmem:[%s682 + $0xf1] sm:$0xff]
      %v919 = vlaneseq
      %v920 = vshrl.u32 %v919, 7
      %v921 = vsub.s32 4, %v920
      %v922 = vrot.slane %v688, %v921
      %v923 = vmul.f32 %v903, %v922
      %v924 = vmul.f32 %v904, %v922
      %v925 = vmul.f32 %v905, %v922
      %v926 = vmul.f32 %v906, %v922
      %v927 = vmul.f32 %v907, %v922
      %v928 = vmul.f32 %v908, %v922
      %v929 = vmul.f32 %v909, %v922
      %v930 = vmul.f32 %v910, %v922
      %v931 = vmul.f32 %v911, %v922
      %v932 = vmul.f32 %v912, %v922
      %v933 = vmul.f32 %v913, %v922
      %v934 = vmul.f32 %v914, %v922
      %v935 = vmul.f32 %v915, %v922
      %v936 = vmul.f32 %v916, %v922
      %v937 = vmul.f32 %v917, %v922
      %v938 = vmul.f32 %v918, %v922
      %v939 = vadd.f32 %v887, %v923
      %v940 = vadd.f32 %v888, %v924
      %v941 = vadd.f32 %v889, %v925
      %v942 = vadd.f32 %v890, %v926
      %v943 = vadd.f32 %v891, %v927
      %v944 = vadd.f32 %v892, %v928
      %v945 = vadd.f32 %v893, %v929
      %v946 = vadd.f32 %v894, %v930
      %v947 = vadd.f32 %v895, %v931
      %v948 = vadd.f32 %v896, %v932
      %v949 = vadd.f32 %v897, %v933
      %v950 = vadd.f32 %v898, %v934
      %v951 = vadd.f32 %v899, %v935
      %v952 = vadd.f32 %v900, %v936
      %v953 = vadd.f32 %v901, %v937
      %v954 = vadd.f32 %v902, %v938
      %v955 = vld [vmem:[%s682 + $0xa] sm:$0xff]
      %v956 = vld [vmem:[%s682 + $0x12] sm:$0xff]
      %v957 = vld [vmem:[%s682 + $0x2a] sm:$0xff]
      %v958 = vld [vmem:[%s682 + $0x32] sm:$0xff]
      %v959 = vld [vmem:[%s682 + $0x4a] sm:$0xff]
      %v960 = vld [vmem:[%s682 + $0x52] sm:$0xff]
      %v961 = vld [vmem:[%s682 + $0x6a] sm:$0xff]
      %v962 = vld [vmem:[%s682 + $0x72] sm:$0xff]
      %v963 = vld [vmem:[%s682 + $0x8a] sm:$0xff]
      %v964 = vld [vmem:[%s682 + $0x92] sm:$0xff]
      %v965 = vld [vmem:[%s682 + $0xaa] sm:$0xff]
      %v966 = vld [vmem:[%s682 + $0xb2] sm:$0xff]
      %v967 = vld [vmem:[%s682 + $0xca] sm:$0xff]
      %v968 = vld [vmem:[%s682 + $0xd2] sm:$0xff]
      %v969 = vld [vmem:[%s682 + $0xea] sm:$0xff]
      %v970 = vld [vmem:[%s682 + $0xf2] sm:$0xff]
      %v971 = vlaneseq
      %v972 = vshrl.u32 %v971, 7
      %v973 = vsub.s32 5, %v972
      %v974 = vrot.slane %v688, %v973
      %v975 = vmul.f32 %v955, %v974
      %v976 = vmul.f32 %v956, %v974
      %v977 = vmul.f32 %v957, %v974
      %v978 = vmul.f32 %v958, %v974
      %v979 = vmul.f32 %v959, %v974
      %v980 = vmul.f32 %v960, %v974
      %v981 = vmul.f32 %v961, %v974
      %v982 = vmul.f32 %v962, %v974
      %v983 = vmul.f32 %v963, %v974
      %v984 = vmul.f32 %v964, %v974
      %v985 = vmul.f32 %v965, %v974
      %v986 = vmul.f32 %v966, %v974
      %v987 = vmul.f32 %v967, %v974
      %v988 = vmul.f32 %v968, %v974
      %v989 = vmul.f32 %v969, %v974
      %v990 = vmul.f32 %v970, %v974
      %v991 = vadd.f32 %v939, %v975
      %v992 = vadd.f32 %v940, %v976
      %v993 = vadd.f32 %v941, %v977
      %v994 = vadd.f32 %v942, %v978
      %v995 = vadd.f32 %v943, %v979
      %v996 = vadd.f32 %v944, %v980
      %v997 = vadd.f32 %v945, %v981
      %v998 = vadd.f32 %v946, %v982
      %v999 = vadd.f32 %v947, %v983
      %v1000 = vadd.f32 %v948, %v984
      %v1001 = vadd.f32 %v949, %v985
      %v1002 = vadd.f32 %v950, %v986
      %v1003 = vadd.f32 %v951, %v987
      %v1004 = vadd.f32 %v952, %v988
      %v1005 = vadd.f32 %v953, %v989
      %v1006 = vadd.f32 %v954, %v990
      %v1007 = vld [vmem:[%s682 + $0xb] sm:$0xff]
      %v1008 = vld [vmem:[%s682 + $0x13] sm:$0xff]
      %v1009 = vld [vmem:[%s682 + $0x2b] sm:$0xff]
      %v1010 = vld [vmem:[%s682 + $0x33] sm:$0xff]
      %v1011 = vld [vmem:[%s682 + $0x4b] sm:$0xff]
      %v1012 = vld [vmem:[%s682 + $0x53] sm:$0xff]
      %v1013 = vld [vmem:[%s682 + $0x6b] sm:$0xff]
      %v1014 = vld [vmem:[%s682 + $0x73] sm:$0xff]
      %v1015 = vld [vmem:[%s682 + $0x8b] sm:$0xff]
      %v1016 = vld [vmem:[%s682 + $0x93] sm:$0xff]
      %v1017 = vld [vmem:[%s682 + $0xab] sm:$0xff]
      %v1018 = vld [vmem:[%s682 + $0xb3] sm:$0xff]
      %v1019 = vld [vmem:[%s682 + $0xcb] sm:$0xff]
      %v1020 = vld [vmem:[%s682 + $0xd3] sm:$0xff]
      %v1021 = vld [vmem:[%s682 + $0xeb] sm:$0xff]
      %v1022 = vld [vmem:[%s682 + $0xf3] sm:$0xff]
      %v1023 = vlaneseq
      %v1024 = vshrl.u32 %v1023, 7
      %v1025 = vsub.s32 6, %v1024
      %v1026 = vrot.slane %v688, %v1025
      %v1027 = vmul.f32 %v1007, %v1026
      %v1028 = vmul.f32 %v1008, %v1026
      %v1029 = vmul.f32 %v1009, %v1026
      %v1030 = vmul.f32 %v1010, %v1026
      %v1031 = vmul.f32 %v1011, %v1026
      %v1032 = vmul.f32 %v1012, %v1026
      %v1033 = vmul.f32 %v1013, %v1026
      %v1034 = vmul.f32 %v1014, %v1026
      %v1035 = vmul.f32 %v1015, %v1026
      %v1036 = vmul.f32 %v1016, %v1026
      %v1037 = vmul.f32 %v1017, %v1026
      %v1038 = vmul.f32 %v1018, %v1026
      %v1039 = vmul.f32 %v1019, %v1026
      %v1040 = vmul.f32 %v1020, %v1026
      %v1041 = vmul.f32 %v1021, %v1026
      %v1042 = vmul.f32 %v1022, %v1026
      %v1043 = vadd.f32 %v991, %v1027
      %v1044 = vadd.f32 %v992, %v1028
      %v1045 = vadd.f32 %v993, %v1029
      %v1046 = vadd.f32 %v994, %v1030
      %v1047 = vadd.f32 %v995, %v1031
      %v1048 = vadd.f32 %v996, %v1032
      %v1049 = vadd.f32 %v997, %v1033
      %v1050 = vadd.f32 %v998, %v1034
      %v1051 = vadd.f32 %v999, %v1035
      %v1052 = vadd.f32 %v1000, %v1036
      %v1053 = vadd.f32 %v1001, %v1037
      %v1054 = vadd.f32 %v1002, %v1038
      %v1055 = vadd.f32 %v1003, %v1039
      %v1056 = vadd.f32 %v1004, %v1040
      %v1057 = vadd.f32 %v1005, %v1041
      %v1058 = vadd.f32 %v1006, %v1042
      %s1059 = scalar_lea.vmem %s682, 32 [#allocation2]
      %v1060 = vld [vmem:[%s1059 + $0x5] sm:$0xff]
      %v1061 = vld [vmem:[%s1059 + $0xd] sm:$0xff]
      %v1062 = vld [vmem:[%s1059 + $0x25] sm:$0xff]
      %v1063 = vld [vmem:[%s1059 + $0x2d] sm:$0xff]
      %v1064 = vld [vmem:[%s1059 + $0x45] sm:$0xff]
      %v1065 = vld [vmem:[%s1059 + $0x4d] sm:$0xff]
      %v1066 = vld [vmem:[%s1059 + $0x65] sm:$0xff]
      %v1067 = vld [vmem:[%s1059 + $0x6d] sm:$0xff]
      %v1068 = vld [vmem:[%s1059 + $0x85] sm:$0xff]
      %v1069 = vld [vmem:[%s1059 + $0x8d] sm:$0xff]
      %v1070 = vld [vmem:[%s1059 + $0xa5] sm:$0xff]
      %v1071 = vld [vmem:[%s1059 + $0xad] sm:$0xff]
      %v1072 = vld [vmem:[%s1059 + $0xc5] sm:$0xff]
      %v1073 = vld [vmem:[%s1059 + $0xcd] sm:$0xff]
      %v1074 = vld [vmem:[%s1059 + $0xe5] sm:$0xff]
      %v1075 = vld [vmem:[%s1059 + $0xed] sm:$0xff]
      %v1076 = vlaneseq
      %v1077 = vshrl.u32 %v1076, 7
      %v1078 = vsub.s32 0, %v1077
      %v1079 = vrot.slane %v689, %v1078
      %v1080 = vmul.f32 %v1060, %v1079
      %v1081 = vmul.f32 %v1061, %v1079
      %v1082 = vmul.f32 %v1062, %v1079
      %v1083 = vmul.f32 %v1063, %v1079
      %v1084 = vmul.f32 %v1064, %v1079
      %v1085 = vmul.f32 %v1065, %v1079
      %v1086 = vmul.f32 %v1066, %v1079
      %v1087 = vmul.f32 %v1067, %v1079
      %v1088 = vmul.f32 %v1068, %v1079
      %v1089 = vmul.f32 %v1069, %v1079
      %v1090 = vmul.f32 %v1070, %v1079
      %v1091 = vmul.f32 %v1071, %v1079
      %v1092 = vmul.f32 %v1072, %v1079
      %v1093 = vmul.f32 %v1073, %v1079
      %v1094 = vmul.f32 %v1074, %v1079
      %v1095 = vmul.f32 %v1075, %v1079
      %v1096 = vadd.f32 %v1043, %v1080
      %v1097 = vadd.f32 %v1044, %v1081
      %v1098 = vadd.f32 %v1045, %v1082
      %v1099 = vadd.f32 %v1046, %v1083
      %v1100 = vadd.f32 %v1047, %v1084
      %v1101 = vadd.f32 %v1048, %v1085
      %v1102 = vadd.f32 %v1049, %v1086
      %v1103 = vadd.f32 %v1050, %v1087
      %v1104 = vadd.f32 %v1051, %v1088
      %v1105 = vadd.f32 %v1052, %v1089
      %v1106 = vadd.f32 %v1053, %v1090
      %v1107 = vadd.f32 %v1054, %v1091
      %v1108 = vadd.f32 %v1055, %v1092
      %v1109 = vadd.f32 %v1056, %v1093
      %v1110 = vadd.f32 %v1057, %v1094
      %v1111 = vadd.f32 %v1058, %v1095
      %v1112 = vld [vmem:[%s1059 + $0x6] sm:$0xff]
      %v1113 = vld [vmem:[%s1059 + $0xe] sm:$0xff]
      %v1114 = vld [vmem:[%s1059 + $0x26] sm:$0xff]
      %v1115 = vld [vmem:[%s1059 + $0x2e] sm:$0xff]
      %v1116 = vld [vmem:[%s1059 + $0x46] sm:$0xff]
      %v1117 = vld [vmem:[%s1059 + $0x4e] sm:$0xff]
      %v1118 = vld [vmem:[%s1059 + $0x66] sm:$0xff]
      %v1119 = vld [vmem:[%s1059 + $0x6e] sm:$0xff]
      %v1120 = vld [vmem:[%s1059 + $0x86] sm:$0xff]
      %v1121 = vld [vmem:[%s1059 + $0x8e] sm:$0xff]
      %v1122 = vld [vmem:[%s1059 + $0xa6] sm:$0xff]
      %v1123 = vld [vmem:[%s1059 + $0xae] sm:$0xff]
      %v1124 = vld [vmem:[%s1059 + $0xc6] sm:$0xff]
      %v1125 = vld [vmem:[%s1059 + $0xce] sm:$0xff]
      %v1126 = vld [vmem:[%s1059 + $0xe6] sm:$0xff]
      %v1127 = vld [vmem:[%s1059 + $0xee] sm:$0xff]
      %v1128 = vlaneseq
      %v1129 = vshrl.u32 %v1128, 7
      %v1130 = vsub.s32 1, %v1129
      %v1131 = vrot.slane %v689, %v1130
      %v1132 = vmul.f32 %v1112, %v1131
      %v1133 = vmul.f32 %v1113, %v1131
      %v1134 = vmul.f32 %v1114, %v1131
      %v1135 = vmul.f32 %v1115, %v1131
      %v1136 = vmul.f32 %v1116, %v1131
      %v1137 = vmul.f32 %v1117, %v1131
      %v1138 = vmul.f32 %v1118, %v1131
      %v1139 = vmul.f32 %v1119, %v1131
      %v1140 = vmul.f32 %v1120, %v1131
      %v1141 = vmul.f32 %v1121, %v1131
      %v1142 = vmul.f32 %v1122, %v1131
      %v1143 = vmul.f32 %v1123, %v1131
      %v1144 = vmul.f32 %v1124, %v1131
      %v1145 = vmul.f32 %v1125, %v1131
      %v1146 = vmul.f32 %v1126, %v1131
      %v1147 = vmul.f32 %v1127, %v1131
      %v1148 = vadd.f32 %v1096, %v1132
      %v1149 = vadd.f32 %v1097, %v1133
      %v1150 = vadd.f32 %v1098, %v1134
      %v1151 = vadd.f32 %v1099, %v1135
      %v1152 = vadd.f32 %v1100, %v1136
      %v1153 = vadd.f32 %v1101, %v1137
      %v1154 = vadd.f32 %v1102, %v1138
      %v1155 = vadd.f32 %v1103, %v1139
      %v1156 = vadd.f32 %v1104, %v1140
      %v1157 = vadd.f32 %v1105, %v1141
      %v1158 = vadd.f32 %v1106, %v1142
      %v1159 = vadd.f32 %v1107, %v1143
      %v1160 = vadd.f32 %v1108, %v1144
      %v1161 = vadd.f32 %v1109, %v1145
      %v1162 = vadd.f32 %v1110, %v1146
      %v1163 = vadd.f32 %v1111, %v1147
      %v1164 = vld [vmem:[%s1059 + $0x7] sm:$0xff]
      %v1165 = vld [vmem:[%s1059 + $0xf] sm:$0xff]
      %v1166 = vld [vmem:[%s1059 + $0x27] sm:$0xff]
      %v1167 = vld [vmem:[%s1059 + $0x2f] sm:$0xff]
      %v1168 = vld [vmem:[%s1059 + $0x47] sm:$0xff]
      %v1169 = vld [vmem:[%s1059 + $0x4f] sm:$0xff]
      %v1170 = vld [vmem:[%s1059 + $0x67] sm:$0xff]
      %v1171 = vld [vmem:[%s1059 + $0x6f] sm:$0xff]
      %v1172 = vld [vmem:[%s1059 + $0x87] sm:$0xff]
      %v1173 = vld [vmem:[%s1059 + $0x8f] sm:$0xff]
      %v1174 = vld [vmem:[%s1059 + $0xa7] sm:$0xff]
      %v1175 = vld [vmem:[%s1059 + $0xaf] sm:$0xff]
      %v1176 = vld [vmem:[%s1059 + $0xc7] sm:$0xff]
      %v1177 = vld [vmem:[%s1059 + $0xcf] sm:$0xff]
      %v1178 = vld [vmem:[%s1059 + $0xe7] sm:$0xff]
      %v1179 = vld [vmem:[%s1059 + $0xef] sm:$0xff]
      %v1180 = vlaneseq
      %v1181 = vshrl.u32 %v1180, 7
      %v1182 = vsub.s32 2, %v1181
      %v1183 = vrot.slane %v689, %v1182
      %v1184 = vmul.f32 %v1164, %v1183
      %v1185 = vmul.f32 %v1165, %v1183
      %v1186 = vmul.f32 %v1166, %v1183
      %v1187 = vmul.f32 %v1167, %v1183
      %v1188 = vmul.f32 %v1168, %v1183
      %v1189 = vmul.f32 %v1169, %v1183
      %v1190 = vmul.f32 %v1170, %v1183
      %v1191 = vmul.f32 %v1171, %v1183
      %v1192 = vmul.f32 %v1172, %v1183
      %v1193 = vmul.f32 %v1173, %v1183
      %v1194 = vmul.f32 %v1174, %v1183
      %v1195 = vmul.f32 %v1175, %v1183
      %v1196 = vmul.f32 %v1176, %v1183
      %v1197 = vmul.f32 %v1177, %v1183
      %v1198 = vmul.f32 %v1178, %v1183
      %v1199 = vmul.f32 %v1179, %v1183
      %v1200 = vadd.f32 %v1148, %v1184
      %v1201 = vadd.f32 %v1149, %v1185
      %v1202 = vadd.f32 %v1150, %v1186
      %v1203 = vadd.f32 %v1151, %v1187
      %v1204 = vadd.f32 %v1152, %v1188
      %v1205 = vadd.f32 %v1153, %v1189
      %v1206 = vadd.f32 %v1154, %v1190
      %v1207 = vadd.f32 %v1155, %v1191
      %v1208 = vadd.f32 %v1156, %v1192
      %v1209 = vadd.f32 %v1157, %v1193
      %v1210 = vadd.f32 %v1158, %v1194
      %v1211 = vadd.f32 %v1159, %v1195
      %v1212 = vadd.f32 %v1160, %v1196
      %v1213 = vadd.f32 %v1161, %v1197
      %v1214 = vadd.f32 %v1162, %v1198
      %v1215 = vadd.f32 %v1163, %v1199
      %v1216 = vld [vmem:[%s1059 + $0x8] sm:$0xff]
      %v1217 = vld [vmem:[%s1059 + $0x10] sm:$0xff]
      %v1218 = vld [vmem:[%s1059 + $0x28] sm:$0xff]
      %v1219 = vld [vmem:[%s1059 + $0x30] sm:$0xff]
      %v1220 = vld [vmem:[%s1059 + $0x48] sm:$0xff]
      %v1221 = vld [vmem:[%s1059 + $0x50] sm:$0xff]
      %v1222 = vld [vmem:[%s1059 + $0x68] sm:$0xff]
      %v1223 = vld [vmem:[%s1059 + $0x70] sm:$0xff]
      %v1224 = vld [vmem:[%s1059 + $0x88] sm:$0xff]
      %v1225 = vld [vmem:[%s1059 + $0x90] sm:$0xff]
      %v1226 = vld [vmem:[%s1059 + $0xa8] sm:$0xff]
      %v1227 = vld [vmem:[%s1059 + $0xb0] sm:$0xff]
      %v1228 = vld [vmem:[%s1059 + $0xc8] sm:$0xff]
      %v1229 = vld [vmem:[%s1059 + $0xd0] sm:$0xff]
      %v1230 = vld [vmem:[%s1059 + $0xe8] sm:$0xff]
      %v1231 = vld [vmem:[%s1059 + $0xf0] sm:$0xff]
      %v1232 = vlaneseq
      %v1233 = vshrl.u32 %v1232, 7
      %v1234 = vsub.s32 3, %v1233
      %v1235 = vrot.slane %v689, %v1234
      %v1236 = vmul.f32 %v1216, %v1235
      %v1237 = vmul.f32 %v1217, %v1235
      %v1238 = vmul.f32 %v1218, %v1235
      %v1239 = vmul.f32 %v1219, %v1235
      %v1240 = vmul.f32 %v1220, %v1235
      %v1241 = vmul.f32 %v1221, %v1235
      %v1242 = vmul.f32 %v1222, %v1235
      %v1243 = vmul.f32 %v1223, %v1235
      %v1244 = vmul.f32 %v1224, %v1235
      %v1245 = vmul.f32 %v1225, %v1235
      %v1246 = vmul.f32 %v1226, %v1235
      %v1247 = vmul.f32 %v1227, %v1235
      %v1248 = vmul.f32 %v1228, %v1235
      %v1249 = vmul.f32 %v1229, %v1235
      %v1250 = vmul.f32 %v1230, %v1235
      %v1251 = vmul.f32 %v1231, %v1235
      %v1252 = vadd.f32 %v1200, %v1236
      %v1253 = vadd.f32 %v1201, %v1237
      %v1254 = vadd.f32 %v1202, %v1238
      %v1255 = vadd.f32 %v1203, %v1239
      %v1256 = vadd.f32 %v1204, %v1240
      %v1257 = vadd.f32 %v1205, %v1241
      %v1258 = vadd.f32 %v1206, %v1242
      %v1259 = vadd.f32 %v1207, %v1243
      %v1260 = vadd.f32 %v1208, %v1244
      %v1261 = vadd.f32 %v1209, %v1245
      %v1262 = vadd.f32 %v1210, %v1246
      %v1263 = vadd.f32 %v1211, %v1247
      %v1264 = vadd.f32 %v1212, %v1248
      %v1265 = vadd.f32 %v1213, %v1249
      %v1266 = vadd.f32 %v1214, %v1250
      %v1267 = vadd.f32 %v1215, %v1251
      %v1268 = vld [vmem:[%s1059 + $0x9] sm:$0xff]
      %v1269 = vld [vmem:[%s1059 + $0x11] sm:$0xff]
      %v1270 = vld [vmem:[%s1059 + $0x29] sm:$0xff]
      %v1271 = vld [vmem:[%s1059 + $0x31] sm:$0xff]
      %v1272 = vld [vmem:[%s1059 + $0x49] sm:$0xff]
      %v1273 = vld [vmem:[%s1059 + $0x51] sm:$0xff]
      %v1274 = vld [vmem:[%s1059 + $0x69] sm:$0xff]
      %v1275 = vld [vmem:[%s1059 + $0x71] sm:$0xff]
      %v1276 = vld [vmem:[%s1059 + $0x89] sm:$0xff]
      %v1277 = vld [vmem:[%s1059 + $0x91] sm:$0xff]
      %v1278 = vld [vmem:[%s1059 + $0xa9] sm:$0xff]
      %v1279 = vld [vmem:[%s1059 + $0xb1] sm:$0xff]
      %v1280 = vld [vmem:[%s1059 + $0xc9] sm:$0xff]
      %v1281 = vld [vmem:[%s1059 + $0xd1] sm:$0xff]
      %v1282 = vld [vmem:[%s1059 + $0xe9] sm:$0xff]
      %v1283 = vld [vmem:[%s1059 + $0xf1] sm:$0xff]
      %v1284 = vlaneseq
      %v1285 = vshrl.u32 %v1284, 7
      %v1286 = vsub.s32 4, %v1285
      %v1287 = vrot.slane %v689, %v1286
      %v1288 = vmul.f32 %v1268, %v1287
      %v1289 = vmul.f32 %v1269, %v1287
      %v1290 = vmul.f32 %v1270, %v1287
      %v1291 = vmul.f32 %v1271, %v1287
      %v1292 = vmul.f32 %v1272, %v1287
      %v1293 = vmul.f32 %v1273, %v1287
      %v1294 = vmul.f32 %v1274, %v1287
      %v1295 = vmul.f32 %v1275, %v1287
      %v1296 = vmul.f32 %v1276, %v1287
      %v1297 = vmul.f32 %v1277, %v1287
      %v1298 = vmul.f32 %v1278, %v1287
      %v1299 = vmul.f32 %v1279, %v1287
      %v1300 = vmul.f32 %v1280, %v1287
      %v1301 = vmul.f32 %v1281, %v1287
      %v1302 = vmul.f32 %v1282, %v1287
      %v1303 = vmul.f32 %v1283, %v1287
      %v1304 = vadd.f32 %v1252, %v1288
      %v1305 = vadd.f32 %v1253, %v1289
      %v1306 = vadd.f32 %v1254, %v1290
      %v1307 = vadd.f32 %v1255, %v1291
      %v1308 = vadd.f32 %v1256, %v1292
      %v1309 = vadd.f32 %v1257, %v1293
      %v1310 = vadd.f32 %v1258, %v1294
      %v1311 = vadd.f32 %v1259, %v1295
      %v1312 = vadd.f32 %v1260, %v1296
      %v1313 = vadd.f32 %v1261, %v1297
      %v1314 = vadd.f32 %v1262, %v1298
      %v1315 = vadd.f32 %v1263, %v1299
      %v1316 = vadd.f32 %v1264, %v1300
      %v1317 = vadd.f32 %v1265, %v1301
      %v1318 = vadd.f32 %v1266, %v1302
      %v1319 = vadd.f32 %v1267, %v1303
      %v1320 = vld [vmem:[%s1059 + $0xa] sm:$0xff]
      %v1321 = vld [vmem:[%s1059 + $0x12] sm:$0xff]
      %v1322 = vld [vmem:[%s1059 + $0x2a] sm:$0xff]
      %v1323 = vld [vmem:[%s1059 + $0x32] sm:$0xff]
      %v1324 = vld [vmem:[%s1059 + $0x4a] sm:$0xff]
      %v1325 = vld [vmem:[%s1059 + $0x52] sm:$0xff]
      %v1326 = vld [vmem:[%s1059 + $0x6a] sm:$0xff]
      %v1327 = vld [vmem:[%s1059 + $0x72] sm:$0xff]
      %v1328 = vld [vmem:[%s1059 + $0x8a] sm:$0xff]
      %v1329 = vld [vmem:[%s1059 + $0x92] sm:$0xff]
      %v1330 = vld [vmem:[%s1059 + $0xaa] sm:$0xff]
      %v1331 = vld [vmem:[%s1059 + $0xb2] sm:$0xff]
      %v1332 = vld [vmem:[%s1059 + $0xca] sm:$0xff]
      %v1333 = vld [vmem:[%s1059 + $0xd2] sm:$0xff]
      %v1334 = vld [vmem:[%s1059 + $0xea] sm:$0xff]
      %v1335 = vld [vmem:[%s1059 + $0xf2] sm:$0xff]
      %v1336 = vlaneseq
      %v1337 = vshrl.u32 %v1336, 7
      %v1338 = vsub.s32 5, %v1337
      %v1339 = vrot.slane %v689, %v1338
      %v1340 = vmul.f32 %v1320, %v1339
      %v1341 = vmul.f32 %v1321, %v1339
      %v1342 = vmul.f32 %v1322, %v1339
      %v1343 = vmul.f32 %v1323, %v1339
      %v1344 = vmul.f32 %v1324, %v1339
      %v1345 = vmul.f32 %v1325, %v1339
      %v1346 = vmul.f32 %v1326, %v1339
      %v1347 = vmul.f32 %v1327, %v1339
      %v1348 = vmul.f32 %v1328, %v1339
      %v1349 = vmul.f32 %v1329, %v1339
      %v1350 = vmul.f32 %v1330, %v1339
      %v1351 = vmul.f32 %v1331, %v1339
      %v1352 = vmul.f32 %v1332, %v1339
      %v1353 = vmul.f32 %v1333, %v1339
      %v1354 = vmul.f32 %v1334, %v1339
      %v1355 = vmul.f32 %v1335, %v1339
      %v1356 = vadd.f32 %v1304, %v1340
      %v1357 = vadd.f32 %v1305, %v1341
      %v1358 = vadd.f32 %v1306, %v1342
      %v1359 = vadd.f32 %v1307, %v1343
      %v1360 = vadd.f32 %v1308, %v1344
      %v1361 = vadd.f32 %v1309, %v1345
      %v1362 = vadd.f32 %v1310, %v1346
      %v1363 = vadd.f32 %v1311, %v1347
      %v1364 = vadd.f32 %v1312, %v1348
      %v1365 = vadd.f32 %v1313, %v1349
      %v1366 = vadd.f32 %v1314, %v1350
      %v1367 = vadd.f32 %v1315, %v1351
      %v1368 = vadd.f32 %v1316, %v1352
      %v1369 = vadd.f32 %v1317, %v1353
      %v1370 = vadd.f32 %v1318, %v1354
      %v1371 = vadd.f32 %v1319, %v1355
      %v1372 = vld [vmem:[%s1059 + $0xb] sm:$0xff]
      %v1373 = vld [vmem:[%s1059 + $0x13] sm:$0xff]
      %v1374 = vld [vmem:[%s1059 + $0x2b] sm:$0xff]
      %v1375 = vld [vmem:[%s1059 + $0x33] sm:$0xff]
      %v1376 = vld [vmem:[%s1059 + $0x4b] sm:$0xff]
      %v1377 = vld [vmem:[%s1059 + $0x53] sm:$0xff]
      %v1378 = vld [vmem:[%s1059 + $0x6b] sm:$0xff]
      %v1379 = vld [vmem:[%s1059 + $0x73] sm:$0xff]
      %v1380 = vld [vmem:[%s1059 + $0x8b] sm:$0xff]
      %v1381 = vld [vmem:[%s1059 + $0x93] sm:$0xff]
      %v1382 = vld [vmem:[%s1059 + $0xab] sm:$0xff]
      %v1383 = vld [vmem:[%s1059 + $0xb3] sm:$0xff]
      %v1384 = vld [vmem:[%s1059 + $0xcb] sm:$0xff]
      %v1385 = vld [vmem:[%s1059 + $0xd3] sm:$0xff]
      %v1386 = vld [vmem:[%s1059 + $0xeb] sm:$0xff]
      %v1387 = vld [vmem:[%s1059 + $0xf3] sm:$0xff]
      %v1388 = vlaneseq
      %v1389 = vshrl.u32 %v1388, 7
      %v1390 = vsub.s32 6, %v1389
      %v1391 = vrot.slane %v689, %v1390
      %v1392 = vmul.f32 %v1372, %v1391
      %v1393 = vmul.f32 %v1373, %v1391
      %v1394 = vmul.f32 %v1374, %v1391
      %v1395 = vmul.f32 %v1375, %v1391
      %v1396 = vmul.f32 %v1376, %v1391
      %v1397 = vmul.f32 %v1377, %v1391
      %v1398 = vmul.f32 %v1378, %v1391
      %v1399 = vmul.f32 %v1379, %v1391
      %v1400 = vmul.f32 %v1380, %v1391
      %v1401 = vmul.f32 %v1381, %v1391
      %v1402 = vmul.f32 %v1382, %v1391
      %v1403 = vmul.f32 %v1383, %v1391
      %v1404 = vmul.f32 %v1384, %v1391
      %v1405 = vmul.f32 %v1385, %v1391
      %v1406 = vmul.f32 %v1386, %v1391
      %v1407 = vmul.f32 %v1387, %v1391
      %v1408 = vadd.f32 %v1356, %v1392
      %v1409 = vadd.f32 %v1357, %v1393
      %v1410 = vadd.f32 %v1358, %v1394
      %v1411 = vadd.f32 %v1359, %v1395
      %v1412 = vadd.f32 %v1360, %v1396
      %v1413 = vadd.f32 %v1361, %v1397
      %v1414 = vadd.f32 %v1362, %v1398
      %v1415 = vadd.f32 %v1363, %v1399
      %v1416 = vadd.f32 %v1364, %v1400
      %v1417 = vadd.f32 %v1365, %v1401
      %v1418 = vadd.f32 %v1366, %v1402
      %v1419 = vadd.f32 %v1367, %v1403
      %v1420 = vadd.f32 %v1368, %v1404
      %v1421 = vadd.f32 %v1369, %v1405
      %v1422 = vadd.f32 %v1370, %v1406
      %v1423 = vadd.f32 %v1371, %v1407
      %s1424 = scalar_lea.vmem %s682, 64 [#allocation2]
      %v1425 = vld [vmem:[%s1424 + $0x5] sm:$0xff]
      %v1426 = vld [vmem:[%s1424 + $0xd] sm:$0xff]
      %v1427 = vld [vmem:[%s1424 + $0x25] sm:$0xff]
      %v1428 = vld [vmem:[%s1424 + $0x2d] sm:$0xff]
      %v1429 = vld [vmem:[%s1424 + $0x45] sm:$0xff]
      %v1430 = vld [vmem:[%s1424 + $0x4d] sm:$0xff]
      %v1431 = vld [vmem:[%s1424 + $0x65] sm:$0xff]
      %v1432 = vld [vmem:[%s1424 + $0x6d] sm:$0xff]
      %v1433 = vld [vmem:[%s1424 + $0x85] sm:$0xff]
      %v1434 = vld [vmem:[%s1424 + $0x8d] sm:$0xff]
      %v1435 = vld [vmem:[%s1424 + $0xa5] sm:$0xff]
      %v1436 = vld [vmem:[%s1424 + $0xad] sm:$0xff]
      %v1437 = vld [vmem:[%s1424 + $0xc5] sm:$0xff]
      %v1438 = vld [vmem:[%s1424 + $0xcd] sm:$0xff]
      %v1439 = vld [vmem:[%s1424 + $0xe5] sm:$0xff]
      %v1440 = vld [vmem:[%s1424 + $0xed] sm:$0xff]
      %v1441 = vlaneseq
      %v1442 = vshrl.u32 %v1441, 7
      %v1443 = vsub.s32 0, %v1442
      %v1444 = vrot.slane %v690, %v1443
      %v1445 = vmul.f32 %v1425, %v1444
      %v1446 = vmul.f32 %v1426, %v1444
      %v1447 = vmul.f32 %v1427, %v1444
      %v1448 = vmul.f32 %v1428, %v1444
      %v1449 = vmul.f32 %v1429, %v1444
      %v1450 = vmul.f32 %v1430, %v1444
      %v1451 = vmul.f32 %v1431, %v1444
      %v1452 = vmul.f32 %v1432, %v1444
      %v1453 = vmul.f32 %v1433, %v1444
      %v1454 = vmul.f32 %v1434, %v1444
      %v1455 = vmul.f32 %v1435, %v1444
      %v1456 = vmul.f32 %v1436, %v1444
      %v1457 = vmul.f32 %v1437, %v1444
      %v1458 = vmul.f32 %v1438, %v1444
      %v1459 = vmul.f32 %v1439, %v1444
      %v1460 = vmul.f32 %v1440, %v1444
      %v1461 = vadd.f32 %v1408, %v1445
      %v1462 = vadd.f32 %v1409, %v1446
      %v1463 = vadd.f32 %v1410, %v1447
      %v1464 = vadd.f32 %v1411, %v1448
      %v1465 = vadd.f32 %v1412, %v1449
      %v1466 = vadd.f32 %v1413, %v1450
      %v1467 = vadd.f32 %v1414, %v1451
      %v1468 = vadd.f32 %v1415, %v1452
      %v1469 = vadd.f32 %v1416, %v1453
      %v1470 = vadd.f32 %v1417, %v1454
      %v1471 = vadd.f32 %v1418, %v1455
      %v1472 = vadd.f32 %v1419, %v1456
      %v1473 = vadd.f32 %v1420, %v1457
      %v1474 = vadd.f32 %v1421, %v1458
      %v1475 = vadd.f32 %v1422, %v1459
      %v1476 = vadd.f32 %v1423, %v1460
      %v1477 = vld [vmem:[%s1424 + $0x6] sm:$0xff]
      %v1478 = vld [vmem:[%s1424 + $0xe] sm:$0xff]
      %v1479 = vld [vmem:[%s1424 + $0x26] sm:$0xff]
      %v1480 = vld [vmem:[%s1424 + $0x2e] sm:$0xff]
      %v1481 = vld [vmem:[%s1424 + $0x46] sm:$0xff]
      %v1482 = vld [vmem:[%s1424 + $0x4e] sm:$0xff]
      %v1483 = vld [vmem:[%s1424 + $0x66] sm:$0xff]
      %v1484 = vld [vmem:[%s1424 + $0x6e] sm:$0xff]
      %v1485 = vld [vmem:[%s1424 + $0x86] sm:$0xff]
      %v1486 = vld [vmem:[%s1424 + $0x8e] sm:$0xff]
      %v1487 = vld [vmem:[%s1424 + $0xa6] sm:$0xff]
      %v1488 = vld [vmem:[%s1424 + $0xae] sm:$0xff]
      %v1489 = vld [vmem:[%s1424 + $0xc6] sm:$0xff]
      %v1490 = vld [vmem:[%s1424 + $0xce] sm:$0xff]
      %v1491 = vld [vmem:[%s1424 + $0xe6] sm:$0xff]
      %v1492 = vld [vmem:[%s1424 + $0xee] sm:$0xff]
      %v1493 = vlaneseq
      %v1494 = vshrl.u32 %v1493, 7
      %v1495 = vsub.s32 1, %v1494
      %v1496 = vrot.slane %v690, %v1495
      %v1497 = vmul.f32 %v1477, %v1496
      %v1498 = vmul.f32 %v1478, %v1496
      %v1499 = vmul.f32 %v1479, %v1496
      %v1500 = vmul.f32 %v1480, %v1496
      %v1501 = vmul.f32 %v1481, %v1496
      %v1502 = vmul.f32 %v1482, %v1496
      %v1503 = vmul.f32 %v1483, %v1496
      %v1504 = vmul.f32 %v1484, %v1496
      %v1505 = vmul.f32 %v1485, %v1496
      %v1506 = vmul.f32 %v1486, %v1496
      %v1507 = vmul.f32 %v1487, %v1496
      %v1508 = vmul.f32 %v1488, %v1496
      %v1509 = vmul.f32 %v1489, %v1496
      %v1510 = vmul.f32 %v1490, %v1496
      %v1511 = vmul.f32 %v1491, %v1496
      %v1512 = vmul.f32 %v1492, %v1496
      %v1513 = vadd.f32 %v1461, %v1497
      %v1514 = vadd.f32 %v1462, %v1498
      %v1515 = vadd.f32 %v1463, %v1499
      %v1516 = vadd.f32 %v1464, %v1500
      %v1517 = vadd.f32 %v1465, %v1501
      %v1518 = vadd.f32 %v1466, %v1502
      %v1519 = vadd.f32 %v1467, %v1503
      %v1520 = vadd.f32 %v1468, %v1504
      %v1521 = vadd.f32 %v1469, %v1505
      %v1522 = vadd.f32 %v1470, %v1506
      %v1523 = vadd.f32 %v1471, %v1507
      %v1524 = vadd.f32 %v1472, %v1508
      %v1525 = vadd.f32 %v1473, %v1509
      %v1526 = vadd.f32 %v1474, %v1510
      %v1527 = vadd.f32 %v1475, %v1511
      %v1528 = vadd.f32 %v1476, %v1512
      %v1529 = vld [vmem:[%s1424 + $0x7] sm:$0xff]
      %v1530 = vld [vmem:[%s1424 + $0xf] sm:$0xff]
      %v1531 = vld [vmem:[%s1424 + $0x27] sm:$0xff]
      %v1532 = vld [vmem:[%s1424 + $0x2f] sm:$0xff]
      %v1533 = vld [vmem:[%s1424 + $0x47] sm:$0xff]
      %v1534 = vld [vmem:[%s1424 + $0x4f] sm:$0xff]
      %v1535 = vld [vmem:[%s1424 + $0x67] sm:$0xff]
      %v1536 = vld [vmem:[%s1424 + $0x6f] sm:$0xff]
      %v1537 = vld [vmem:[%s1424 + $0x87] sm:$0xff]
      %v1538 = vld [vmem:[%s1424 + $0x8f] sm:$0xff]
      %v1539 = vld [vmem:[%s1424 + $0xa7] sm:$0xff]
      %v1540 = vld [vmem:[%s1424 + $0xaf] sm:$0xff]
      %v1541 = vld [vmem:[%s1424 + $0xc7] sm:$0xff]
      %v1542 = vld [vmem:[%s1424 + $0xcf] sm:$0xff]
      %v1543 = vld [vmem:[%s1424 + $0xe7] sm:$0xff]
      %v1544 = vld [vmem:[%s1424 + $0xef] sm:$0xff]
      %v1545 = vlaneseq
      %v1546 = vshrl.u32 %v1545, 7
      %v1547 = vsub.s32 2, %v1546
      %v1548 = vrot.slane %v690, %v1547
      %v1549 = vmul.f32 %v1529, %v1548
      %v1550 = vmul.f32 %v1530, %v1548
      %v1551 = vmul.f32 %v1531, %v1548
      %v1552 = vmul.f32 %v1532, %v1548
      %v1553 = vmul.f32 %v1533, %v1548
      %v1554 = vmul.f32 %v1534, %v1548
      %v1555 = vmul.f32 %v1535, %v1548
      %v1556 = vmul.f32 %v1536, %v1548
      %v1557 = vmul.f32 %v1537, %v1548
      %v1558 = vmul.f32 %v1538, %v1548
      %v1559 = vmul.f32 %v1539, %v1548
      %v1560 = vmul.f32 %v1540, %v1548
      %v1561 = vmul.f32 %v1541, %v1548
      %v1562 = vmul.f32 %v1542, %v1548
      %v1563 = vmul.f32 %v1543, %v1548
      %v1564 = vmul.f32 %v1544, %v1548
      %v1565 = vadd.f32 %v1513, %v1549
      %v1566 = vadd.f32 %v1514, %v1550
      %v1567 = vadd.f32 %v1515, %v1551
      %v1568 = vadd.f32 %v1516, %v1552
      %v1569 = vadd.f32 %v1517, %v1553
      %v1570 = vadd.f32 %v1518, %v1554
      %v1571 = vadd.f32 %v1519, %v1555
      %v1572 = vadd.f32 %v1520, %v1556
      %v1573 = vadd.f32 %v1521, %v1557
      %v1574 = vadd.f32 %v1522, %v1558
      %v1575 = vadd.f32 %v1523, %v1559
      %v1576 = vadd.f32 %v1524, %v1560
      %v1577 = vadd.f32 %v1525, %v1561
      %v1578 = vadd.f32 %v1526, %v1562
      %v1579 = vadd.f32 %v1527, %v1563
      %v1580 = vadd.f32 %v1528, %v1564
      %v1581 = vld [vmem:[%s1424 + $0x8] sm:$0xff]
      %v1582 = vld [vmem:[%s1424 + $0x10] sm:$0xff]
      %v1583 = vld [vmem:[%s1424 + $0x28] sm:$0xff]
      %v1584 = vld [vmem:[%s1424 + $0x30] sm:$0xff]
      %v1585 = vld [vmem:[%s1424 + $0x48] sm:$0xff]
      %v1586 = vld [vmem:[%s1424 + $0x50] sm:$0xff]
      %v1587 = vld [vmem:[%s1424 + $0x68] sm:$0xff]
      %v1588 = vld [vmem:[%s1424 + $0x70] sm:$0xff]
      %v1589 = vld [vmem:[%s1424 + $0x88] sm:$0xff]
      %v1590 = vld [vmem:[%s1424 + $0x90] sm:$0xff]
      %v1591 = vld [vmem:[%s1424 + $0xa8] sm:$0xff]
      %v1592 = vld [vmem:[%s1424 + $0xb0] sm:$0xff]
      %v1593 = vld [vmem:[%s1424 + $0xc8] sm:$0xff]
      %v1594 = vld [vmem:[%s1424 + $0xd0] sm:$0xff]
      %v1595 = vld [vmem:[%s1424 + $0xe8] sm:$0xff]
      %v1596 = vld [vmem:[%s1424 + $0xf0] sm:$0xff]
      %v1597 = vlaneseq
      %v1598 = vshrl.u32 %v1597, 7
      %v1599 = vsub.s32 3, %v1598
      %v1600 = vrot.slane %v690, %v1599
      %v1601 = vmul.f32 %v1581, %v1600
      %v1602 = vmul.f32 %v1582, %v1600
      %v1603 = vmul.f32 %v1583, %v1600
      %v1604 = vmul.f32 %v1584, %v1600
      %v1605 = vmul.f32 %v1585, %v1600
      %v1606 = vmul.f32 %v1586, %v1600
      %v1607 = vmul.f32 %v1587, %v1600
      %v1608 = vmul.f32 %v1588, %v1600
      %v1609 = vmul.f32 %v1589, %v1600
      %v1610 = vmul.f32 %v1590, %v1600
      %v1611 = vmul.f32 %v1591, %v1600
      %v1612 = vmul.f32 %v1592, %v1600
      %v1613 = vmul.f32 %v1593, %v1600
      %v1614 = vmul.f32 %v1594, %v1600
      %v1615 = vmul.f32 %v1595, %v1600
      %v1616 = vmul.f32 %v1596, %v1600
      %v1617 = vadd.f32 %v1565, %v1601
      %v1618 = vadd.f32 %v1566, %v1602
      %v1619 = vadd.f32 %v1567, %v1603
      %v1620 = vadd.f32 %v1568, %v1604
      %v1621 = vadd.f32 %v1569, %v1605
      %v1622 = vadd.f32 %v1570, %v1606
      %v1623 = vadd.f32 %v1571, %v1607
      %v1624 = vadd.f32 %v1572, %v1608
      %v1625 = vadd.f32 %v1573, %v1609
      %v1626 = vadd.f32 %v1574, %v1610
      %v1627 = vadd.f32 %v1575, %v1611
      %v1628 = vadd.f32 %v1576, %v1612
      %v1629 = vadd.f32 %v1577, %v1613
      %v1630 = vadd.f32 %v1578, %v1614
      %v1631 = vadd.f32 %v1579, %v1615
      %v1632 = vadd.f32 %v1580, %v1616
      %v1633 = vld [vmem:[%s1424 + $0x9] sm:$0xff]
      %v1634 = vld [vmem:[%s1424 + $0x11] sm:$0xff]
      %v1635 = vld [vmem:[%s1424 + $0x29] sm:$0xff]
      %v1636 = vld [vmem:[%s1424 + $0x31] sm:$0xff]
      %v1637 = vld [vmem:[%s1424 + $0x49] sm:$0xff]
      %v1638 = vld [vmem:[%s1424 + $0x51] sm:$0xff]
      %v1639 = vld [vmem:[%s1424 + $0x69] sm:$0xff]
      %v1640 = vld [vmem:[%s1424 + $0x71] sm:$0xff]
      %v1641 = vld [vmem:[%s1424 + $0x89] sm:$0xff]
      %v1642 = vld [vmem:[%s1424 + $0x91] sm:$0xff]
      %v1643 = vld [vmem:[%s1424 + $0xa9] sm:$0xff]
      %v1644 = vld [vmem:[%s1424 + $0xb1] sm:$0xff]
      %v1645 = vld [vmem:[%s1424 + $0xc9] sm:$0xff]
      %v1646 = vld [vmem:[%s1424 + $0xd1] sm:$0xff]
      %v1647 = vld [vmem:[%s1424 + $0xe9] sm:$0xff]
      %v1648 = vld [vmem:[%s1424 + $0xf1] sm:$0xff]
      %v1649 = vlaneseq
      %v1650 = vshrl.u32 %v1649, 7
      %v1651 = vsub.s32 4, %v1650
      %v1652 = vrot.slane %v690, %v1651
      %v1653 = vmul.f32 %v1633, %v1652
      %v1654 = vmul.f32 %v1634, %v1652
      %v1655 = vmul.f32 %v1635, %v1652
      %v1656 = vmul.f32 %v1636, %v1652
      %v1657 = vmul.f32 %v1637, %v1652
      %v1658 = vmul.f32 %v1638, %v1652
      %v1659 = vmul.f32 %v1639, %v1652
      %v1660 = vmul.f32 %v1640, %v1652
      %v1661 = vmul.f32 %v1641, %v1652
      %v1662 = vmul.f32 %v1642, %v1652
      %v1663 = vmul.f32 %v1643, %v1652
      %v1664 = vmul.f32 %v1644, %v1652
      %v1665 = vmul.f32 %v1645, %v1652
      %v1666 = vmul.f32 %v1646, %v1652
      %v1667 = vmul.f32 %v1647, %v1652
      %v1668 = vmul.f32 %v1648, %v1652
      %v1669 = vadd.f32 %v1617, %v1653
      %v1670 = vadd.f32 %v1618, %v1654
      %v1671 = vadd.f32 %v1619, %v1655
      %v1672 = vadd.f32 %v1620, %v1656
      %v1673 = vadd.f32 %v1621, %v1657
      %v1674 = vadd.f32 %v1622, %v1658
      %v1675 = vadd.f32 %v1623, %v1659
      %v1676 = vadd.f32 %v1624, %v1660
      %v1677 = vadd.f32 %v1625, %v1661
      %v1678 = vadd.f32 %v1626, %v1662
      %v1679 = vadd.f32 %v1627, %v1663
      %v1680 = vadd.f32 %v1628, %v1664
      %v1681 = vadd.f32 %v1629, %v1665
      %v1682 = vadd.f32 %v1630, %v1666
      %v1683 = vadd.f32 %v1631, %v1667
      %v1684 = vadd.f32 %v1632, %v1668
      %v1685 = vld [vmem:[%s1424 + $0xa] sm:$0xff]
      %v1686 = vld [vmem:[%s1424 + $0x12] sm:$0xff]
      %v1687 = vld [vmem:[%s1424 + $0x2a] sm:$0xff]
      %v1688 = vld [vmem:[%s1424 + $0x32] sm:$0xff]
      %v1689 = vld [vmem:[%s1424 + $0x4a] sm:$0xff]
      %v1690 = vld [vmem:[%s1424 + $0x52] sm:$0xff]
      %v1691 = vld [vmem:[%s1424 + $0x6a] sm:$0xff]
      %v1692 = vld [vmem:[%s1424 + $0x72] sm:$0xff]
      %v1693 = vld [vmem:[%s1424 + $0x8a] sm:$0xff]
      %v1694 = vld [vmem:[%s1424 + $0x92] sm:$0xff]
      %v1695 = vld [vmem:[%s1424 + $0xaa] sm:$0xff]
      %v1696 = vld [vmem:[%s1424 + $0xb2] sm:$0xff]
      %v1697 = vld [vmem:[%s1424 + $0xca] sm:$0xff]
      %v1698 = vld [vmem:[%s1424 + $0xd2] sm:$0xff]
      %v1699 = vld [vmem:[%s1424 + $0xea] sm:$0xff]
      %v1700 = vld [vmem:[%s1424 + $0xf2] sm:$0xff]
      %v1701 = vlaneseq
      %v1702 = vshrl.u32 %v1701, 7
      %v1703 = vsub.s32 5, %v1702
      %v1704 = vrot.slane %v690, %v1703
      %v1705 = vmul.f32 %v1685, %v1704
      %v1706 = vmul.f32 %v1686, %v1704
      %v1707 = vmul.f32 %v1687, %v1704
      %v1708 = vmul.f32 %v1688, %v1704
      %v1709 = vmul.f32 %v1689, %v1704
      %v1710 = vmul.f32 %v1690, %v1704
      %v1711 = vmul.f32 %v1691, %v1704
      %v1712 = vmul.f32 %v1692, %v1704
      %v1713 = vmul.f32 %v1693, %v1704
      %v1714 = vmul.f32 %v1694, %v1704
      %v1715 = vmul.f32 %v1695, %v1704
      %v1716 = vmul.f32 %v1696, %v1704
      %v1717 = vmul.f32 %v1697, %v1704
      %v1718 = vmul.f32 %v1698, %v1704
      %v1719 = vmul.f32 %v1699, %v1704
      %v1720 = vmul.f32 %v1700, %v1704
      %v1721 = vadd.f32 %v1669, %v1705
      %v1722 = vadd.f32 %v1670, %v1706
      %v1723 = vadd.f32 %v1671, %v1707
      %v1724 = vadd.f32 %v1672, %v1708
      %v1725 = vadd.f32 %v1673, %v1709
      %v1726 = vadd.f32 %v1674, %v1710
      %v1727 = vadd.f32 %v1675, %v1711
      %v1728 = vadd.f32 %v1676, %v1712
      %v1729 = vadd.f32 %v1677, %v1713
      %v1730 = vadd.f32 %v1678, %v1714
      %v1731 = vadd.f32 %v1679, %v1715
      %v1732 = vadd.f32 %v1680, %v1716
      %v1733 = vadd.f32 %v1681, %v1717
      %v1734 = vadd.f32 %v1682, %v1718
      %v1735 = vadd.f32 %v1683, %v1719
      %v1736 = vadd.f32 %v1684, %v1720
      %v1737 = vld [vmem:[%s1424 + $0xb] sm:$0xff]
      %v1738 = vld [vmem:[%s1424 + $0x13] sm:$0xff]
      %v1739 = vld [vmem:[%s1424 + $0x2b] sm:$0xff]
      %v1740 = vld [vmem:[%s1424 + $0x33] sm:$0xff]
      %v1741 = vld [vmem:[%s1424 + $0x4b] sm:$0xff]
      %v1742 = vld [vmem:[%s1424 + $0x53] sm:$0xff]
      %v1743 = vld [vmem:[%s1424 + $0x6b] sm:$0xff]
      %v1744 = vld [vmem:[%s1424 + $0x73] sm:$0xff]
      %v1745 = vld [vmem:[%s1424 + $0x8b] sm:$0xff]
      %v1746 = vld [vmem:[%s1424 + $0x93] sm:$0xff]
      %v1747 = vld [vmem:[%s1424 + $0xab] sm:$0xff]
      %v1748 = vld [vmem:[%s1424 + $0xb3] sm:$0xff]
      %v1749 = vld [vmem:[%s1424 + $0xcb] sm:$0xff]
      %v1750 = vld [vmem:[%s1424 + $0xd3] sm:$0xff]
      %v1751 = vld [vmem:[%s1424 + $0xeb] sm:$0xff]
      %v1752 = vld [vmem:[%s1424 + $0xf3] sm:$0xff]
      %v1753 = vlaneseq
      %v1754 = vshrl.u32 %v1753, 7
      %v1755 = vsub.s32 6, %v1754
      %v1756 = vrot.slane %v690, %v1755
      %v1757 = vmul.f32 %v1737, %v1756
      %v1758 = vmul.f32 %v1738, %v1756
      %v1759 = vmul.f32 %v1739, %v1756
      %v1760 = vmul.f32 %v1740, %v1756
      %v1761 = vmul.f32 %v1741, %v1756
      %v1762 = vmul.f32 %v1742, %v1756
      %v1763 = vmul.f32 %v1743, %v1756
      %v1764 = vmul.f32 %v1744, %v1756
      %v1765 = vmul.f32 %v1745, %v1756
      %v1766 = vmul.f32 %v1746, %v1756
      %v1767 = vmul.f32 %v1747, %v1756
      %v1768 = vmul.f32 %v1748, %v1756
      %v1769 = vmul.f32 %v1749, %v1756
      %v1770 = vmul.f32 %v1750, %v1756
      %v1771 = vmul.f32 %v1751, %v1756
      %v1772 = vmul.f32 %v1752, %v1756
      %v1773 = vadd.f32 %v1721, %v1757
      %v1774 = vadd.f32 %v1722, %v1758
      %v1775 = vadd.f32 %v1723, %v1759
      %v1776 = vadd.f32 %v1724, %v1760
      %v1777 = vadd.f32 %v1725, %v1761
      %v1778 = vadd.f32 %v1726, %v1762
      %v1779 = vadd.f32 %v1727, %v1763
      %v1780 = vadd.f32 %v1728, %v1764
      %v1781 = vadd.f32 %v1729, %v1765
      %v1782 = vadd.f32 %v1730, %v1766
      %v1783 = vadd.f32 %v1731, %v1767
      %v1784 = vadd.f32 %v1732, %v1768
      %v1785 = vadd.f32 %v1733, %v1769
      %v1786 = vadd.f32 %v1734, %v1770
      %v1787 = vadd.f32 %v1735, %v1771
      %v1788 = vadd.f32 %v1736, %v1772
      %s1789 = scalar_lea.vmem %s682, 96 [#allocation2]
      %v1790 = vld [vmem:[%s1789 + $0x5] sm:$0xff]
      %v1791 = vld [vmem:[%s1789 + $0xd] sm:$0xff]
      %v1792 = vld [vmem:[%s1789 + $0x25] sm:$0xff]
      %v1793 = vld [vmem:[%s1789 + $0x2d] sm:$0xff]
      %v1794 = vld [vmem:[%s1789 + $0x45] sm:$0xff]
      %v1795 = vld [vmem:[%s1789 + $0x4d] sm:$0xff]
      %v1796 = vld [vmem:[%s1789 + $0x65] sm:$0xff]
      %v1797 = vld [vmem:[%s1789 + $0x6d] sm:$0xff]
      %v1798 = vld [vmem:[%s1789 + $0x85] sm:$0xff]
      %v1799 = vld [vmem:[%s1789 + $0x8d] sm:$0xff]
      %v1800 = vld [vmem:[%s1789 + $0xa5] sm:$0xff]
      %v1801 = vld [vmem:[%s1789 + $0xad] sm:$0xff]
      %v1802 = vld [vmem:[%s1789 + $0xc5] sm:$0xff]
      %v1803 = vld [vmem:[%s1789 + $0xcd] sm:$0xff]
      %v1804 = vld [vmem:[%s1789 + $0xe5] sm:$0xff]
      %v1805 = vld [vmem:[%s1789 + $0xed] sm:$0xff]
      %v1806 = vlaneseq
      %v1807 = vshrl.u32 %v1806, 7
      %v1808 = vsub.s32 0, %v1807
      %v1809 = vrot.slane %v691, %v1808
      %v1810 = vmul.f32 %v1790, %v1809
      %v1811 = vmul.f32 %v1791, %v1809
      %v1812 = vmul.f32 %v1792, %v1809
      %v1813 = vmul.f32 %v1793, %v1809
      %v1814 = vmul.f32 %v1794, %v1809
      %v1815 = vmul.f32 %v1795, %v1809
      %v1816 = vmul.f32 %v1796, %v1809
      %v1817 = vmul.f32 %v1797, %v1809
      %v1818 = vmul.f32 %v1798, %v1809
      %v1819 = vmul.f32 %v1799, %v1809
      %v1820 = vmul.f32 %v1800, %v1809
      %v1821 = vmul.f32 %v1801, %v1809
      %v1822 = vmul.f32 %v1802, %v1809
      %v1823 = vmul.f32 %v1803, %v1809
      %v1824 = vmul.f32 %v1804, %v1809
      %v1825 = vmul.f32 %v1805, %v1809
      %v1826 = vadd.f32 %v1773, %v1810
      %v1827 = vadd.f32 %v1774, %v1811
      %v1828 = vadd.f32 %v1775, %v1812
      %v1829 = vadd.f32 %v1776, %v1813
      %v1830 = vadd.f32 %v1777, %v1814
      %v1831 = vadd.f32 %v1778, %v1815
      %v1832 = vadd.f32 %v1779, %v1816
      %v1833 = vadd.f32 %v1780, %v1817
      %v1834 = vadd.f32 %v1781, %v1818
      %v1835 = vadd.f32 %v1782, %v1819
      %v1836 = vadd.f32 %v1783, %v1820
      %v1837 = vadd.f32 %v1784, %v1821
      %v1838 = vadd.f32 %v1785, %v1822
      %v1839 = vadd.f32 %v1786, %v1823
      %v1840 = vadd.f32 %v1787, %v1824
      %v1841 = vadd.f32 %v1788, %v1825
      %v1842 = vld [vmem:[%s1789 + $0x6] sm:$0xff]
      %v1843 = vld [vmem:[%s1789 + $0xe] sm:$0xff]
      %v1844 = vld [vmem:[%s1789 + $0x26] sm:$0xff]
      %v1845 = vld [vmem:[%s1789 + $0x2e] sm:$0xff]
      %v1846 = vld [vmem:[%s1789 + $0x46] sm:$0xff]
      %v1847 = vld [vmem:[%s1789 + $0x4e] sm:$0xff]
      %v1848 = vld [vmem:[%s1789 + $0x66] sm:$0xff]
      %v1849 = vld [vmem:[%s1789 + $0x6e] sm:$0xff]
      %v1850 = vld [vmem:[%s1789 + $0x86] sm:$0xff]
      %v1851 = vld [vmem:[%s1789 + $0x8e] sm:$0xff]
      %v1852 = vld [vmem:[%s1789 + $0xa6] sm:$0xff]
      %v1853 = vld [vmem:[%s1789 + $0xae] sm:$0xff]
      %v1854 = vld [vmem:[%s1789 + $0xc6] sm:$0xff]
      %v1855 = vld [vmem:[%s1789 + $0xce] sm:$0xff]
      %v1856 = vld [vmem:[%s1789 + $0xe6] sm:$0xff]
      %v1857 = vld [vmem:[%s1789 + $0xee] sm:$0xff]
      %v1858 = vlaneseq
      %v1859 = vshrl.u32 %v1858, 7
      %v1860 = vsub.s32 1, %v1859
      %v1861 = vrot.slane %v691, %v1860
      %v1862 = vmul.f32 %v1842, %v1861
      %v1863 = vmul.f32 %v1843, %v1861
      %v1864 = vmul.f32 %v1844, %v1861
      %v1865 = vmul.f32 %v1845, %v1861
      %v1866 = vmul.f32 %v1846, %v1861
      %v1867 = vmul.f32 %v1847, %v1861
      %v1868 = vmul.f32 %v1848, %v1861
      %v1869 = vmul.f32 %v1849, %v1861
      %v1870 = vmul.f32 %v1850, %v1861
      %v1871 = vmul.f32 %v1851, %v1861
      %v1872 = vmul.f32 %v1852, %v1861
      %v1873 = vmul.f32 %v1853, %v1861
      %v1874 = vmul.f32 %v1854, %v1861
      %v1875 = vmul.f32 %v1855, %v1861
      %v1876 = vmul.f32 %v1856, %v1861
      %v1877 = vmul.f32 %v1857, %v1861
      %v1878 = vadd.f32 %v1826, %v1862
      %v1879 = vadd.f32 %v1827, %v1863
      %v1880 = vadd.f32 %v1828, %v1864
      %v1881 = vadd.f32 %v1829, %v1865
      %v1882 = vadd.f32 %v1830, %v1866
      %v1883 = vadd.f32 %v1831, %v1867
      %v1884 = vadd.f32 %v1832, %v1868
      %v1885 = vadd.f32 %v1833, %v1869
      %v1886 = vadd.f32 %v1834, %v1870
      %v1887 = vadd.f32 %v1835, %v1871
      %v1888 = vadd.f32 %v1836, %v1872
      %v1889 = vadd.f32 %v1837, %v1873
      %v1890 = vadd.f32 %v1838, %v1874
      %v1891 = vadd.f32 %v1839, %v1875
      %v1892 = vadd.f32 %v1840, %v1876
      %v1893 = vadd.f32 %v1841, %v1877
      %v1894 = vld [vmem:[%s1789 + $0x7] sm:$0xff]
      %v1895 = vld [vmem:[%s1789 + $0xf] sm:$0xff]
      %v1896 = vld [vmem:[%s1789 + $0x27] sm:$0xff]
      %v1897 = vld [vmem:[%s1789 + $0x2f] sm:$0xff]
      %v1898 = vld [vmem:[%s1789 + $0x47] sm:$0xff]
      %v1899 = vld [vmem:[%s1789 + $0x4f] sm:$0xff]
      %v1900 = vld [vmem:[%s1789 + $0x67] sm:$0xff]
      %v1901 = vld [vmem:[%s1789 + $0x6f] sm:$0xff]
      %v1902 = vld [vmem:[%s1789 + $0x87] sm:$0xff]
      %v1903 = vld [vmem:[%s1789 + $0x8f] sm:$0xff]
      %v1904 = vld [vmem:[%s1789 + $0xa7] sm:$0xff]
      %v1905 = vld [vmem:[%s1789 + $0xaf] sm:$0xff]
      %v1906 = vld [vmem:[%s1789 + $0xc7] sm:$0xff]
      %v1907 = vld [vmem:[%s1789 + $0xcf] sm:$0xff]
      %v1908 = vld [vmem:[%s1789 + $0xe7] sm:$0xff]
      %v1909 = vld [vmem:[%s1789 + $0xef] sm:$0xff]
      %v1910 = vlaneseq
      %v1911 = vshrl.u32 %v1910, 7
      %v1912 = vsub.s32 2, %v1911
      %v1913 = vrot.slane %v691, %v1912
      %v1914 = vmul.f32 %v1894, %v1913
      %v1915 = vmul.f32 %v1895, %v1913
      %v1916 = vmul.f32 %v1896, %v1913
      %v1917 = vmul.f32 %v1897, %v1913
      %v1918 = vmul.f32 %v1898, %v1913
      %v1919 = vmul.f32 %v1899, %v1913
      %v1920 = vmul.f32 %v1900, %v1913
      %v1921 = vmul.f32 %v1901, %v1913
      %v1922 = vmul.f32 %v1902, %v1913
      %v1923 = vmul.f32 %v1903, %v1913
      %v1924 = vmul.f32 %v1904, %v1913
      %v1925 = vmul.f32 %v1905, %v1913
      %v1926 = vmul.f32 %v1906, %v1913
      %v1927 = vmul.f32 %v1907, %v1913
      %v1928 = vmul.f32 %v1908, %v1913
      %v1929 = vmul.f32 %v1909, %v1913
      %v1930 = vadd.f32 %v1878, %v1914
      %v1931 = vadd.f32 %v1879, %v1915
      %v1932 = vadd.f32 %v1880, %v1916
      %v1933 = vadd.f32 %v1881, %v1917
      %v1934 = vadd.f32 %v1882, %v1918
      %v1935 = vadd.f32 %v1883, %v1919
      %v1936 = vadd.f32 %v1884, %v1920
      %v1937 = vadd.f32 %v1885, %v1921
      %v1938 = vadd.f32 %v1886, %v1922
      %v1939 = vadd.f32 %v1887, %v1923
      %v1940 = vadd.f32 %v1888, %v1924
      %v1941 = vadd.f32 %v1889, %v1925
      %v1942 = vadd.f32 %v1890, %v1926
      %v1943 = vadd.f32 %v1891, %v1927
      %v1944 = vadd.f32 %v1892, %v1928
      %v1945 = vadd.f32 %v1893, %v1929
      %v1946 = vld [vmem:[%s1789 + $0x8] sm:$0xff]
      %v1947 = vld [vmem:[%s1789 + $0x10] sm:$0xff]
      %v1948 = vld [vmem:[%s1789 + $0x28] sm:$0xff]
      %v1949 = vld [vmem:[%s1789 + $0x30] sm:$0xff]
      %v1950 = vld [vmem:[%s1789 + $0x48] sm:$0xff]
      %v1951 = vld [vmem:[%s1789 + $0x50] sm:$0xff]
      %v1952 = vld [vmem:[%s1789 + $0x68] sm:$0xff]
      %v1953 = vld [vmem:[%s1789 + $0x70] sm:$0xff]
      %v1954 = vld [vmem:[%s1789 + $0x88] sm:$0xff]
      %v1955 = vld [vmem:[%s1789 + $0x90] sm:$0xff]
      %v1956 = vld [vmem:[%s1789 + $0xa8] sm:$0xff]
      %v1957 = vld [vmem:[%s1789 + $0xb0] sm:$0xff]
      %v1958 = vld [vmem:[%s1789 + $0xc8] sm:$0xff]
      %v1959 = vld [vmem:[%s1789 + $0xd0] sm:$0xff]
      %v1960 = vld [vmem:[%s1789 + $0xe8] sm:$0xff]
      %v1961 = vld [vmem:[%s1789 + $0xf0] sm:$0xff]
      %v1962 = vlaneseq
      %v1963 = vshrl.u32 %v1962, 7
      %v1964 = vsub.s32 3, %v1963
      %v1965 = vrot.slane %v691, %v1964
      %v1966 = vmul.f32 %v1946, %v1965
      %v1967 = vmul.f32 %v1947, %v1965
      %v1968 = vmul.f32 %v1948, %v1965
      %v1969 = vmul.f32 %v1949, %v1965
      %v1970 = vmul.f32 %v1950, %v1965
      %v1971 = vmul.f32 %v1951, %v1965
      %v1972 = vmul.f32 %v1952, %v1965
      %v1973 = vmul.f32 %v1953, %v1965
      %v1974 = vmul.f32 %v1954, %v1965
      %v1975 = vmul.f32 %v1955, %v1965
      %v1976 = vmul.f32 %v1956, %v1965
      %v1977 = vmul.f32 %v1957, %v1965
      %v1978 = vmul.f32 %v1958, %v1965
      %v1979 = vmul.f32 %v1959, %v1965
      %v1980 = vmul.f32 %v1960, %v1965
      %v1981 = vmul.f32 %v1961, %v1965
      %v1982 = vadd.f32 %v1930, %v1966
      %v1983 = vadd.f32 %v1931, %v1967
      %v1984 = vadd.f32 %v1932, %v1968
      %v1985 = vadd.f32 %v1933, %v1969
      %v1986 = vadd.f32 %v1934, %v1970
      %v1987 = vadd.f32 %v1935, %v1971
      %v1988 = vadd.f32 %v1936, %v1972
      %v1989 = vadd.f32 %v1937, %v1973
      %v1990 = vadd.f32 %v1938, %v1974
      %v1991 = vadd.f32 %v1939, %v1975
      %v1992 = vadd.f32 %v1940, %v1976
      %v1993 = vadd.f32 %v1941, %v1977
      %v1994 = vadd.f32 %v1942, %v1978
      %v1995 = vadd.f32 %v1943, %v1979
      %v1996 = vadd.f32 %v1944, %v1980
      %v1997 = vadd.f32 %v1945, %v1981
      %v1998 = vld [vmem:[%s1789 + $0x9] sm:$0xff]
      %v1999 = vld [vmem:[%s1789 + $0x11] sm:$0xff]
      %v2000 = vld [vmem:[%s1789 + $0x29] sm:$0xff]
      %v2001 = vld [vmem:[%s1789 + $0x31] sm:$0xff]
      %v2002 = vld [vmem:[%s1789 + $0x49] sm:$0xff]
      %v2003 = vld [vmem:[%s1789 + $0x51] sm:$0xff]
      %v2004 = vld [vmem:[%s1789 + $0x69] sm:$0xff]
      %v2005 = vld [vmem:[%s1789 + $0x71] sm:$0xff]
      %v2006 = vld [vmem:[%s1789 + $0x89] sm:$0xff]
      %v2007 = vld [vmem:[%s1789 + $0x91] sm:$0xff]
      %v2008 = vld [vmem:[%s1789 + $0xa9] sm:$0xff]
      %v2009 = vld [vmem:[%s1789 + $0xb1] sm:$0xff]
      %v2010 = vld [vmem:[%s1789 + $0xc9] sm:$0xff]
      %v2011 = vld [vmem:[%s1789 + $0xd1] sm:$0xff]
      %v2012 = vld [vmem:[%s1789 + $0xe9] sm:$0xff]
      %v2013 = vld [vmem:[%s1789 + $0xf1] sm:$0xff]
      %v2014 = vlaneseq
      %v2015 = vshrl.u32 %v2014, 7
      %v2016 = vsub.s32 4, %v2015
      %v2017 = vrot.slane %v691, %v2016
      %v2018 = vmul.f32 %v1998, %v2017
      %v2019 = vmul.f32 %v1999, %v2017
      %v2020 = vmul.f32 %v2000, %v2017
      %v2021 = vmul.f32 %v2001, %v2017
      %v2022 = vmul.f32 %v2002, %v2017
      %v2023 = vmul.f32 %v2003, %v2017
      %v2024 = vmul.f32 %v2004, %v2017
      %v2025 = vmul.f32 %v2005, %v2017
      %v2026 = vmul.f32 %v2006, %v2017
      %v2027 = vmul.f32 %v2007, %v2017
      %v2028 = vmul.f32 %v2008, %v2017
      %v2029 = vmul.f32 %v2009, %v2017
      %v2030 = vmul.f32 %v2010, %v2017
      %v2031 = vmul.f32 %v2011, %v2017
      %v2032 = vmul.f32 %v2012, %v2017
      %v2033 = vmul.f32 %v2013, %v2017
      %v2034 = vadd.f32 %v1982, %v2018
      %v2035 = vadd.f32 %v1983, %v2019
      %v2036 = vadd.f32 %v1984, %v2020
      %v2037 = vadd.f32 %v1985, %v2021
      %v2038 = vadd.f32 %v1986, %v2022
      %v2039 = vadd.f32 %v1987, %v2023
      %v2040 = vadd.f32 %v1988, %v2024
      %v2041 = vadd.f32 %v1989, %v2025
      %v2042 = vadd.f32 %v1990, %v2026
      %v2043 = vadd.f32 %v1991, %v2027
      %v2044 = vadd.f32 %v1992, %v2028
      %v2045 = vadd.f32 %v1993, %v2029
      %v2046 = vadd.f32 %v1994, %v2030
      %v2047 = vadd.f32 %v1995, %v2031
      %v2048 = vadd.f32 %v1996, %v2032
      %v2049 = vadd.f32 %v1997, %v2033
      %v2050 = vld [vmem:[%s1789 + $0xa] sm:$0xff]
      %v2051 = vld [vmem:[%s1789 + $0x12] sm:$0xff]
      %v2052 = vld [vmem:[%s1789 + $0x2a] sm:$0xff]
      %v2053 = vld [vmem:[%s1789 + $0x32] sm:$0xff]
      %v2054 = vld [vmem:[%s1789 + $0x4a] sm:$0xff]
      %v2055 = vld [vmem:[%s1789 + $0x52] sm:$0xff]
      %v2056 = vld [vmem:[%s1789 + $0x6a] sm:$0xff]
      %v2057 = vld [vmem:[%s1789 + $0x72] sm:$0xff]
      %v2058 = vld [vmem:[%s1789 + $0x8a] sm:$0xff]
      %v2059 = vld [vmem:[%s1789 + $0x92] sm:$0xff]
      %v2060 = vld [vmem:[%s1789 + $0xaa] sm:$0xff]
      %v2061 = vld [vmem:[%s1789 + $0xb2] sm:$0xff]
      %v2062 = vld [vmem:[%s1789 + $0xca] sm:$0xff]
      %v2063 = vld [vmem:[%s1789 + $0xd2] sm:$0xff]
      %v2064 = vld [vmem:[%s1789 + $0xea] sm:$0xff]
      %v2065 = vld [vmem:[%s1789 + $0xf2] sm:$0xff]
      %v2066 = vlaneseq
      %v2067 = vshrl.u32 %v2066, 7
      %v2068 = vsub.s32 5, %v2067
      %v2069 = vrot.slane %v691, %v2068
      %v2070 = vmul.f32 %v2050, %v2069
      %v2071 = vmul.f32 %v2051, %v2069
      %v2072 = vmul.f32 %v2052, %v2069
      %v2073 = vmul.f32 %v2053, %v2069
      %v2074 = vmul.f32 %v2054, %v2069
      %v2075 = vmul.f32 %v2055, %v2069
      %v2076 = vmul.f32 %v2056, %v2069
      %v2077 = vmul.f32 %v2057, %v2069
      %v2078 = vmul.f32 %v2058, %v2069
      %v2079 = vmul.f32 %v2059, %v2069
      %v2080 = vmul.f32 %v2060, %v2069
      %v2081 = vmul.f32 %v2061, %v2069
      %v2082 = vmul.f32 %v2062, %v2069
      %v2083 = vmul.f32 %v2063, %v2069
      %v2084 = vmul.f32 %v2064, %v2069
      %v2085 = vmul.f32 %v2065, %v2069
      %v2086 = vadd.f32 %v2034, %v2070
      %v2087 = vadd.f32 %v2035, %v2071
      %v2088 = vadd.f32 %v2036, %v2072
      %v2089 = vadd.f32 %v2037, %v2073
      %v2090 = vadd.f32 %v2038, %v2074
      %v2091 = vadd.f32 %v2039, %v2075
      %v2092 = vadd.f32 %v2040, %v2076
      %v2093 = vadd.f32 %v2041, %v2077
      %v2094 = vadd.f32 %v2042, %v2078
      %v2095 = vadd.f32 %v2043, %v2079
      %v2096 = vadd.f32 %v2044, %v2080
      %v2097 = vadd.f32 %v2045, %v2081
      %v2098 = vadd.f32 %v2046, %v2082
      %v2099 = vadd.f32 %v2047, %v2083
      %v2100 = vadd.f32 %v2048, %v2084
      %v2101 = vadd.f32 %v2049, %v2085
      %v2102 = vld [vmem:[%s1789 + $0xb] sm:$0xff]
      %v2103 = vld [vmem:[%s1789 + $0x13] sm:$0xff]
      %v2104 = vld [vmem:[%s1789 + $0x2b] sm:$0xff]
      %v2105 = vld [vmem:[%s1789 + $0x33] sm:$0xff]
      %v2106 = vld [vmem:[%s1789 + $0x4b] sm:$0xff]
      %v2107 = vld [vmem:[%s1789 + $0x53] sm:$0xff]
      %v2108 = vld [vmem:[%s1789 + $0x6b] sm:$0xff]
      %v2109 = vld [vmem:[%s1789 + $0x73] sm:$0xff]
      %v2110 = vld [vmem:[%s1789 + $0x8b] sm:$0xff]
      %v2111 = vld [vmem:[%s1789 + $0x93] sm:$0xff]
      %v2112 = vld [vmem:[%s1789 + $0xab] sm:$0xff]
      %v2113 = vld [vmem:[%s1789 + $0xb3] sm:$0xff]
      %v2114 = vld [vmem:[%s1789 + $0xcb] sm:$0xff]
      %v2115 = vld [vmem:[%s1789 + $0xd3] sm:$0xff]
      %v2116 = vld [vmem:[%s1789 + $0xeb] sm:$0xff]
      %v2117 = vld [vmem:[%s1789 + $0xf3] sm:$0xff]
      %v2118 = vlaneseq
      %v2119 = vshrl.u32 %v2118, 7
      %v2120 = vsub.s32 6, %v2119
      %v2121 = vrot.slane %v691, %v2120
      %v2122 = vmul.f32 %v2102, %v2121
      %v2123 = vmul.f32 %v2103, %v2121
      %v2124 = vmul.f32 %v2104, %v2121
      %v2125 = vmul.f32 %v2105, %v2121
      %v2126 = vmul.f32 %v2106, %v2121
      %v2127 = vmul.f32 %v2107, %v2121
      %v2128 = vmul.f32 %v2108, %v2121
      %v2129 = vmul.f32 %v2109, %v2121
      %v2130 = vmul.f32 %v2110, %v2121
      %v2131 = vmul.f32 %v2111, %v2121
      %v2132 = vmul.f32 %v2112, %v2121
      %v2133 = vmul.f32 %v2113, %v2121
      %v2134 = vmul.f32 %v2114, %v2121
      %v2135 = vmul.f32 %v2115, %v2121
      %v2136 = vmul.f32 %v2116, %v2121
      %v2137 = vmul.f32 %v2117, %v2121
      %v2138 = vadd.f32 %v2086, %v2122
      %v2139 = vadd.f32 %v2087, %v2123
      %v2140 = vadd.f32 %v2088, %v2124
      %v2141 = vadd.f32 %v2089, %v2125
      %v2142 = vadd.f32 %v2090, %v2126
      %v2143 = vadd.f32 %v2091, %v2127
      %v2144 = vadd.f32 %v2092, %v2128
      %v2145 = vadd.f32 %v2093, %v2129
      %v2146 = vadd.f32 %v2094, %v2130
      %v2147 = vadd.f32 %v2095, %v2131
      %v2148 = vadd.f32 %v2096, %v2132
      %v2149 = vadd.f32 %v2097, %v2133
      %v2150 = vadd.f32 %v2098, %v2134
      %v2151 = vadd.f32 %v2099, %v2135
      %v2152 = vadd.f32 %v2100, %v2136
      %v2153 = vadd.f32 %v2101, %v2137
      %s2154 = scalar_lea.vmem %s682, 128 [#allocation2]
      %v2155 = vld [vmem:[%s2154 + $0x5] sm:$0xff]
      %v2156 = vld [vmem:[%s2154 + $0xd] sm:$0xff]
      %v2157 = vld [vmem:[%s2154 + $0x25] sm:$0xff]
      %v2158 = vld [vmem:[%s2154 + $0x2d] sm:$0xff]
      %v2159 = vld [vmem:[%s2154 + $0x45] sm:$0xff]
      %v2160 = vld [vmem:[%s2154 + $0x4d] sm:$0xff]
      %v2161 = vld [vmem:[%s2154 + $0x65] sm:$0xff]
      %v2162 = vld [vmem:[%s2154 + $0x6d] sm:$0xff]
      %v2163 = vld [vmem:[%s2154 + $0x85] sm:$0xff]
      %v2164 = vld [vmem:[%s2154 + $0x8d] sm:$0xff]
      %v2165 = vld [vmem:[%s2154 + $0xa5] sm:$0xff]
      %v2166 = vld [vmem:[%s2154 + $0xad] sm:$0xff]
      %v2167 = vld [vmem:[%s2154 + $0xc5] sm:$0xff]
      %v2168 = vld [vmem:[%s2154 + $0xcd] sm:$0xff]
      %v2169 = vld [vmem:[%s2154 + $0xe5] sm:$0xff]
      %v2170 = vld [vmem:[%s2154 + $0xed] sm:$0xff]
      %v2171 = vlaneseq
      %v2172 = vshrl.u32 %v2171, 7
      %v2173 = vsub.s32 0, %v2172
      %v2174 = vrot.slane %v692, %v2173
      %v2175 = vmul.f32 %v2155, %v2174
      %v2176 = vmul.f32 %v2156, %v2174
      %v2177 = vmul.f32 %v2157, %v2174
      %v2178 = vmul.f32 %v2158, %v2174
      %v2179 = vmul.f32 %v2159, %v2174
      %v2180 = vmul.f32 %v2160, %v2174
      %v2181 = vmul.f32 %v2161, %v2174
      %v2182 = vmul.f32 %v2162, %v2174
      %v2183 = vmul.f32 %v2163, %v2174
      %v2184 = vmul.f32 %v2164, %v2174
      %v2185 = vmul.f32 %v2165, %v2174
      %v2186 = vmul.f32 %v2166, %v2174
      %v2187 = vmul.f32 %v2167, %v2174
      %v2188 = vmul.f32 %v2168, %v2174
      %v2189 = vmul.f32 %v2169, %v2174
      %v2190 = vmul.f32 %v2170, %v2174
      %v2191 = vadd.f32 %v2138, %v2175
      %v2192 = vadd.f32 %v2139, %v2176
      %v2193 = vadd.f32 %v2140, %v2177
      %v2194 = vadd.f32 %v2141, %v2178
      %v2195 = vadd.f32 %v2142, %v2179
      %v2196 = vadd.f32 %v2143, %v2180
      %v2197 = vadd.f32 %v2144, %v2181
      %v2198 = vadd.f32 %v2145, %v2182
      %v2199 = vadd.f32 %v2146, %v2183
      %v2200 = vadd.f32 %v2147, %v2184
      %v2201 = vadd.f32 %v2148, %v2185
      %v2202 = vadd.f32 %v2149, %v2186
      %v2203 = vadd.f32 %v2150, %v2187
      %v2204 = vadd.f32 %v2151, %v2188
      %v2205 = vadd.f32 %v2152, %v2189
      %v2206 = vadd.f32 %v2153, %v2190
      %v2207 = vld [vmem:[%s2154 + $0x6] sm:$0xff]
      %v2208 = vld [vmem:[%s2154 + $0xe] sm:$0xff]
      %v2209 = vld [vmem:[%s2154 + $0x26] sm:$0xff]
      %v2210 = vld [vmem:[%s2154 + $0x2e] sm:$0xff]
      %v2211 = vld [vmem:[%s2154 + $0x46] sm:$0xff]
      %v2212 = vld [vmem:[%s2154 + $0x4e] sm:$0xff]
      %v2213 = vld [vmem:[%s2154 + $0x66] sm:$0xff]
      %v2214 = vld [vmem:[%s2154 + $0x6e] sm:$0xff]
      %v2215 = vld [vmem:[%s2154 + $0x86] sm:$0xff]
      %v2216 = vld [vmem:[%s2154 + $0x8e] sm:$0xff]
      %v2217 = vld [vmem:[%s2154 + $0xa6] sm:$0xff]
      %v2218 = vld [vmem:[%s2154 + $0xae] sm:$0xff]
      %v2219 = vld [vmem:[%s2154 + $0xc6] sm:$0xff]
      %v2220 = vld [vmem:[%s2154 + $0xce] sm:$0xff]
      %v2221 = vld [vmem:[%s2154 + $0xe6] sm:$0xff]
      %v2222 = vld [vmem:[%s2154 + $0xee] sm:$0xff]
      %v2223 = vlaneseq
      %v2224 = vshrl.u32 %v2223, 7
      %v2225 = vsub.s32 1, %v2224
      %v2226 = vrot.slane %v692, %v2225
      %v2227 = vmul.f32 %v2207, %v2226
      %v2228 = vmul.f32 %v2208, %v2226
      %v2229 = vmul.f32 %v2209, %v2226
      %v2230 = vmul.f32 %v2210, %v2226
      %v2231 = vmul.f32 %v2211, %v2226
      %v2232 = vmul.f32 %v2212, %v2226
      %v2233 = vmul.f32 %v2213, %v2226
      %v2234 = vmul.f32 %v2214, %v2226
      %v2235 = vmul.f32 %v2215, %v2226
      %v2236 = vmul.f32 %v2216, %v2226
      %v2237 = vmul.f32 %v2217, %v2226
      %v2238 = vmul.f32 %v2218, %v2226
      %v2239 = vmul.f32 %v2219, %v2226
      %v2240 = vmul.f32 %v2220, %v2226
      %v2241 = vmul.f32 %v2221, %v2226
      %v2242 = vmul.f32 %v2222, %v2226
      %v2243 = vadd.f32 %v2191, %v2227
      %v2244 = vadd.f32 %v2192, %v2228
      %v2245 = vadd.f32 %v2193, %v2229
      %v2246 = vadd.f32 %v2194, %v2230
      %v2247 = vadd.f32 %v2195, %v2231
      %v2248 = vadd.f32 %v2196, %v2232
      %v2249 = vadd.f32 %v2197, %v2233
      %v2250 = vadd.f32 %v2198, %v2234
      %v2251 = vadd.f32 %v2199, %v2235
      %v2252 = vadd.f32 %v2200, %v2236
      %v2253 = vadd.f32 %v2201, %v2237
      %v2254 = vadd.f32 %v2202, %v2238
      %v2255 = vadd.f32 %v2203, %v2239
      %v2256 = vadd.f32 %v2204, %v2240
      %v2257 = vadd.f32 %v2205, %v2241
      %v2258 = vadd.f32 %v2206, %v2242
      %v2259 = vld [vmem:[%s2154 + $0x7] sm:$0xff]
      %v2260 = vld [vmem:[%s2154 + $0xf] sm:$0xff]
      %v2261 = vld [vmem:[%s2154 + $0x27] sm:$0xff]
      %v2262 = vld [vmem:[%s2154 + $0x2f] sm:$0xff]
      %v2263 = vld [vmem:[%s2154 + $0x47] sm:$0xff]
      %v2264 = vld [vmem:[%s2154 + $0x4f] sm:$0xff]
      %v2265 = vld [vmem:[%s2154 + $0x67] sm:$0xff]
      %v2266 = vld [vmem:[%s2154 + $0x6f] sm:$0xff]
      %v2267 = vld [vmem:[%s2154 + $0x87] sm:$0xff]
      %v2268 = vld [vmem:[%s2154 + $0x8f] sm:$0xff]
      %v2269 = vld [vmem:[%s2154 + $0xa7] sm:$0xff]
      %v2270 = vld [vmem:[%s2154 + $0xaf] sm:$0xff]
      %v2271 = vld [vmem:[%s2154 + $0xc7] sm:$0xff]
      %v2272 = vld [vmem:[%s2154 + $0xcf] sm:$0xff]
      %v2273 = vld [vmem:[%s2154 + $0xe7] sm:$0xff]
      %v2274 = vld [vmem:[%s2154 + $0xef] sm:$0xff]
      %v2275 = vlaneseq
      %v2276 = vshrl.u32 %v2275, 7
      %v2277 = vsub.s32 2, %v2276
      %v2278 = vrot.slane %v692, %v2277
      %v2279 = vmul.f32 %v2259, %v2278
      %v2280 = vmul.f32 %v2260, %v2278
      %v2281 = vmul.f32 %v2261, %v2278
      %v2282 = vmul.f32 %v2262, %v2278
      %v2283 = vmul.f32 %v2263, %v2278
      %v2284 = vmul.f32 %v2264, %v2278
      %v2285 = vmul.f32 %v2265, %v2278
      %v2286 = vmul.f32 %v2266, %v2278
      %v2287 = vmul.f32 %v2267, %v2278
      %v2288 = vmul.f32 %v2268, %v2278
      %v2289 = vmul.f32 %v2269, %v2278
      %v2290 = vmul.f32 %v2270, %v2278
      %v2291 = vmul.f32 %v2271, %v2278
      %v2292 = vmul.f32 %v2272, %v2278
      %v2293 = vmul.f32 %v2273, %v2278
      %v2294 = vmul.f32 %v2274, %v2278
      %v2295 = vadd.f32 %v2243, %v2279
      %v2296 = vadd.f32 %v2244, %v2280
      %v2297 = vadd.f32 %v2245, %v2281
      %v2298 = vadd.f32 %v2246, %v2282
      %v2299 = vadd.f32 %v2247, %v2283
      %v2300 = vadd.f32 %v2248, %v2284
      %v2301 = vadd.f32 %v2249, %v2285
      %v2302 = vadd.f32 %v2250, %v2286
      %v2303 = vadd.f32 %v2251, %v2287
      %v2304 = vadd.f32 %v2252, %v2288
      %v2305 = vadd.f32 %v2253, %v2289
      %v2306 = vadd.f32 %v2254, %v2290
      %v2307 = vadd.f32 %v2255, %v2291
      %v2308 = vadd.f32 %v2256, %v2292
      %v2309 = vadd.f32 %v2257, %v2293
      %v2310 = vadd.f32 %v2258, %v2294
      %v2311 = vld [vmem:[%s2154 + $0x8] sm:$0xff]
      %v2312 = vld [vmem:[%s2154 + $0x10] sm:$0xff]
      %v2313 = vld [vmem:[%s2154 + $0x28] sm:$0xff]
      %v2314 = vld [vmem:[%s2154 + $0x30] sm:$0xff]
      %v2315 = vld [vmem:[%s2154 + $0x48] sm:$0xff]
      %v2316 = vld [vmem:[%s2154 + $0x50] sm:$0xff]
      %v2317 = vld [vmem:[%s2154 + $0x68] sm:$0xff]
      %v2318 = vld [vmem:[%s2154 + $0x70] sm:$0xff]
      %v2319 = vld [vmem:[%s2154 + $0x88] sm:$0xff]
      %v2320 = vld [vmem:[%s2154 + $0x90] sm:$0xff]
      %v2321 = vld [vmem:[%s2154 + $0xa8] sm:$0xff]
      %v2322 = vld [vmem:[%s2154 + $0xb0] sm:$0xff]
      %v2323 = vld [vmem:[%s2154 + $0xc8] sm:$0xff]
      %v2324 = vld [vmem:[%s2154 + $0xd0] sm:$0xff]
      %v2325 = vld [vmem:[%s2154 + $0xe8] sm:$0xff]
      %v2326 = vld [vmem:[%s2154 + $0xf0] sm:$0xff]
      %v2327 = vlaneseq
      %v2328 = vshrl.u32 %v2327, 7
      %v2329 = vsub.s32 3, %v2328
      %v2330 = vrot.slane %v692, %v2329
      %v2331 = vmul.f32 %v2311, %v2330
      %v2332 = vmul.f32 %v2312, %v2330
      %v2333 = vmul.f32 %v2313, %v2330
      %v2334 = vmul.f32 %v2314, %v2330
      %v2335 = vmul.f32 %v2315, %v2330
      %v2336 = vmul.f32 %v2316, %v2330
      %v2337 = vmul.f32 %v2317, %v2330
      %v2338 = vmul.f32 %v2318, %v2330
      %v2339 = vmul.f32 %v2319, %v2330
      %v2340 = vmul.f32 %v2320, %v2330
      %v2341 = vmul.f32 %v2321, %v2330
      %v2342 = vmul.f32 %v2322, %v2330
      %v2343 = vmul.f32 %v2323, %v2330
      %v2344 = vmul.f32 %v2324, %v2330
      %v2345 = vmul.f32 %v2325, %v2330
      %v2346 = vmul.f32 %v2326, %v2330
      %v2347 = vadd.f32 %v2295, %v2331
      %v2348 = vadd.f32 %v2296, %v2332
      %v2349 = vadd.f32 %v2297, %v2333
      %v2350 = vadd.f32 %v2298, %v2334
      %v2351 = vadd.f32 %v2299, %v2335
      %v2352 = vadd.f32 %v2300, %v2336
      %v2353 = vadd.f32 %v2301, %v2337
      %v2354 = vadd.f32 %v2302, %v2338
      %v2355 = vadd.f32 %v2303, %v2339
      %v2356 = vadd.f32 %v2304, %v2340
      %v2357 = vadd.f32 %v2305, %v2341
      %v2358 = vadd.f32 %v2306, %v2342
      %v2359 = vadd.f32 %v2307, %v2343
      %v2360 = vadd.f32 %v2308, %v2344
      %v2361 = vadd.f32 %v2309, %v2345
      %v2362 = vadd.f32 %v2310, %v2346
      %v2363 = vld [vmem:[%s2154 + $0x9] sm:$0xff]
      %v2364 = vld [vmem:[%s2154 + $0x11] sm:$0xff]
      %v2365 = vld [vmem:[%s2154 + $0x29] sm:$0xff]
      %v2366 = vld [vmem:[%s2154 + $0x31] sm:$0xff]
      %v2367 = vld [vmem:[%s2154 + $0x49] sm:$0xff]
      %v2368 = vld [vmem:[%s2154 + $0x51] sm:$0xff]
      %v2369 = vld [vmem:[%s2154 + $0x69] sm:$0xff]
      %v2370 = vld [vmem:[%s2154 + $0x71] sm:$0xff]
      %v2371 = vld [vmem:[%s2154 + $0x89] sm:$0xff]
      %v2372 = vld [vmem:[%s2154 + $0x91] sm:$0xff]
      %v2373 = vld [vmem:[%s2154 + $0xa9] sm:$0xff]
      %v2374 = vld [vmem:[%s2154 + $0xb1] sm:$0xff]
      %v2375 = vld [vmem:[%s2154 + $0xc9] sm:$0xff]
      %v2376 = vld [vmem:[%s2154 + $0xd1] sm:$0xff]
      %v2377 = vld [vmem:[%s2154 + $0xe9] sm:$0xff]
      %v2378 = vld [vmem:[%s2154 + $0xf1] sm:$0xff]
      %v2379 = vlaneseq
      %v2380 = vshrl.u32 %v2379, 7
      %v2381 = vsub.s32 4, %v2380
      %v2382 = vrot.slane %v692, %v2381
      %v2383 = vmul.f32 %v2363, %v2382
      %v2384 = vmul.f32 %v2364, %v2382
      %v2385 = vmul.f32 %v2365, %v2382
      %v2386 = vmul.f32 %v2366, %v2382
      %v2387 = vmul.f32 %v2367, %v2382
      %v2388 = vmul.f32 %v2368, %v2382
      %v2389 = vmul.f32 %v2369, %v2382
      %v2390 = vmul.f32 %v2370, %v2382
      %v2391 = vmul.f32 %v2371, %v2382
      %v2392 = vmul.f32 %v2372, %v2382
      %v2393 = vmul.f32 %v2373, %v2382
      %v2394 = vmul.f32 %v2374, %v2382
      %v2395 = vmul.f32 %v2375, %v2382
      %v2396 = vmul.f32 %v2376, %v2382
      %v2397 = vmul.f32 %v2377, %v2382
      %v2398 = vmul.f32 %v2378, %v2382
      %v2399 = vadd.f32 %v2347, %v2383
      %v2400 = vadd.f32 %v2348, %v2384
      %v2401 = vadd.f32 %v2349, %v2385
      %v2402 = vadd.f32 %v2350, %v2386
      %v2403 = vadd.f32 %v2351, %v2387
      %v2404 = vadd.f32 %v2352, %v2388
      %v2405 = vadd.f32 %v2353, %v2389
      %v2406 = vadd.f32 %v2354, %v2390
      %v2407 = vadd.f32 %v2355, %v2391
      %v2408 = vadd.f32 %v2356, %v2392
      %v2409 = vadd.f32 %v2357, %v2393
      %v2410 = vadd.f32 %v2358, %v2394
      %v2411 = vadd.f32 %v2359, %v2395
      %v2412 = vadd.f32 %v2360, %v2396
      %v2413 = vadd.f32 %v2361, %v2397
      %v2414 = vadd.f32 %v2362, %v2398
      %v2415 = vld [vmem:[%s2154 + $0xa] sm:$0xff]
      %v2416 = vld [vmem:[%s2154 + $0x12] sm:$0xff]
      %v2417 = vld [vmem:[%s2154 + $0x2a] sm:$0xff]
      %v2418 = vld [vmem:[%s2154 + $0x32] sm:$0xff]
      %v2419 = vld [vmem:[%s2154 + $0x4a] sm:$0xff]
      %v2420 = vld [vmem:[%s2154 + $0x52] sm:$0xff]
      %v2421 = vld [vmem:[%s2154 + $0x6a] sm:$0xff]
      %v2422 = vld [vmem:[%s2154 + $0x72] sm:$0xff]
      %v2423 = vld [vmem:[%s2154 + $0x8a] sm:$0xff]
      %v2424 = vld [vmem:[%s2154 + $0x92] sm:$0xff]
      %v2425 = vld [vmem:[%s2154 + $0xaa] sm:$0xff]
      %v2426 = vld [vmem:[%s2154 + $0xb2] sm:$0xff]
      %v2427 = vld [vmem:[%s2154 + $0xca] sm:$0xff]
      %v2428 = vld [vmem:[%s2154 + $0xd2] sm:$0xff]
      %v2429 = vld [vmem:[%s2154 + $0xea] sm:$0xff]
      %v2430 = vld [vmem:[%s2154 + $0xf2] sm:$0xff]
      %v2431 = vlaneseq
      %v2432 = vshrl.u32 %v2431, 7
      %v2433 = vsub.s32 5, %v2432
      %v2434 = vrot.slane %v692, %v2433
      %v2435 = vmul.f32 %v2415, %v2434
      %v2436 = vmul.f32 %v2416, %v2434
      %v2437 = vmul.f32 %v2417, %v2434
      %v2438 = vmul.f32 %v2418, %v2434
      %v2439 = vmul.f32 %v2419, %v2434
      %v2440 = vmul.f32 %v2420, %v2434
      %v2441 = vmul.f32 %v2421, %v2434
      %v2442 = vmul.f32 %v2422, %v2434
      %v2443 = vmul.f32 %v2423, %v2434
      %v2444 = vmul.f32 %v2424, %v2434
      %v2445 = vmul.f32 %v2425, %v2434
      %v2446 = vmul.f32 %v2426, %v2434
      %v2447 = vmul.f32 %v2427, %v2434
      %v2448 = vmul.f32 %v2428, %v2434
      %v2449 = vmul.f32 %v2429, %v2434
      %v2450 = vmul.f32 %v2430, %v2434
      %v2451 = vadd.f32 %v2399, %v2435
      %v2452 = vadd.f32 %v2400, %v2436
      %v2453 = vadd.f32 %v2401, %v2437
      %v2454 = vadd.f32 %v2402, %v2438
      %v2455 = vadd.f32 %v2403, %v2439
      %v2456 = vadd.f32 %v2404, %v2440
      %v2457 = vadd.f32 %v2405, %v2441
      %v2458 = vadd.f32 %v2406, %v2442
      %v2459 = vadd.f32 %v2407, %v2443
      %v2460 = vadd.f32 %v2408, %v2444
      %v2461 = vadd.f32 %v2409, %v2445
      %v2462 = vadd.f32 %v2410, %v2446
      %v2463 = vadd.f32 %v2411, %v2447
      %v2464 = vadd.f32 %v2412, %v2448
      %v2465 = vadd.f32 %v2413, %v2449
      %v2466 = vadd.f32 %v2414, %v2450
      %v2467 = vld [vmem:[%s2154 + $0xb] sm:$0xff]
      %v2468 = vld [vmem:[%s2154 + $0x13] sm:$0xff]
      %v2469 = vld [vmem:[%s2154 + $0x2b] sm:$0xff]
      %v2470 = vld [vmem:[%s2154 + $0x33] sm:$0xff]
      %v2471 = vld [vmem:[%s2154 + $0x4b] sm:$0xff]
      %v2472 = vld [vmem:[%s2154 + $0x53] sm:$0xff]
      %v2473 = vld [vmem:[%s2154 + $0x6b] sm:$0xff]
      %v2474 = vld [vmem:[%s2154 + $0x73] sm:$0xff]
      %v2475 = vld [vmem:[%s2154 + $0x8b] sm:$0xff]
      %v2476 = vld [vmem:[%s2154 + $0x93] sm:$0xff]
      %v2477 = vld [vmem:[%s2154 + $0xab] sm:$0xff]
      %v2478 = vld [vmem:[%s2154 + $0xb3] sm:$0xff]
      %v2479 = vld [vmem:[%s2154 + $0xcb] sm:$0xff]
      %v2480 = vld [vmem:[%s2154 + $0xd3] sm:$0xff]
      %v2481 = vld [vmem:[%s2154 + $0xeb] sm:$0xff]
      %v2482 = vld [vmem:[%s2154 + $0xf3] sm:$0xff]
      %v2483 = vlaneseq
      %v2484 = vshrl.u32 %v2483, 7
      %v2485 = vsub.s32 6, %v2484
      %v2486 = vrot.slane %v692, %v2485
      %v2487 = vmul.f32 %v2467, %v2486
      %v2488 = vmul.f32 %v2468, %v2486
      %v2489 = vmul.f32 %v2469, %v2486
      %v2490 = vmul.f32 %v2470, %v2486
      %v2491 = vmul.f32 %v2471, %v2486
      %v2492 = vmul.f32 %v2472, %v2486
      %v2493 = vmul.f32 %v2473, %v2486
      %v2494 = vmul.f32 %v2474, %v2486
      %v2495 = vmul.f32 %v2475, %v2486
      %v2496 = vmul.f32 %v2476, %v2486
      %v2497 = vmul.f32 %v2477, %v2486
      %v2498 = vmul.f32 %v2478, %v2486
      %v2499 = vmul.f32 %v2479, %v2486
      %v2500 = vmul.f32 %v2480, %v2486
      %v2501 = vmul.f32 %v2481, %v2486
      %v2502 = vmul.f32 %v2482, %v2486
      %v2503 = vadd.f32 %v2451, %v2487
      %v2504 = vadd.f32 %v2452, %v2488
      %v2505 = vadd.f32 %v2453, %v2489
      %v2506 = vadd.f32 %v2454, %v2490
      %v2507 = vadd.f32 %v2455, %v2491
      %v2508 = vadd.f32 %v2456, %v2492
      %v2509 = vadd.f32 %v2457, %v2493
      %v2510 = vadd.f32 %v2458, %v2494
      %v2511 = vadd.f32 %v2459, %v2495
      %v2512 = vadd.f32 %v2460, %v2496
      %v2513 = vadd.f32 %v2461, %v2497
      %v2514 = vadd.f32 %v2462, %v2498
      %v2515 = vadd.f32 %v2463, %v2499
      %v2516 = vadd.f32 %v2464, %v2500
      %v2517 = vadd.f32 %v2465, %v2501
      %v2518 = vadd.f32 %v2466, %v2502
      %s2519 = scalar_lea.vmem %s682, 160 [#allocation2]
      %v2520 = vld [vmem:[%s2519 + $0x5] sm:$0xff]
      %v2521 = vld [vmem:[%s2519 + $0xd] sm:$0xff]
      %v2522 = vld [vmem:[%s2519 + $0x25] sm:$0xff]
      %v2523 = vld [vmem:[%s2519 + $0x2d] sm:$0xff]
      %v2524 = vld [vmem:[%s2519 + $0x45] sm:$0xff]
      %v2525 = vld [vmem:[%s2519 + $0x4d] sm:$0xff]
      %v2526 = vld [vmem:[%s2519 + $0x65] sm:$0xff]
      %v2527 = vld [vmem:[%s2519 + $0x6d] sm:$0xff]
      %v2528 = vld [vmem:[%s2519 + $0x85] sm:$0xff]
      %v2529 = vld [vmem:[%s2519 + $0x8d] sm:$0xff]
      %v2530 = vld [vmem:[%s2519 + $0xa5] sm:$0xff]
      %v2531 = vld [vmem:[%s2519 + $0xad] sm:$0xff]
      %v2532 = vld [vmem:[%s2519 + $0xc5] sm:$0xff]
      %v2533 = vld [vmem:[%s2519 + $0xcd] sm:$0xff]
      %v2534 = vld [vmem:[%s2519 + $0xe5] sm:$0xff]
      %v2535 = vld [vmem:[%s2519 + $0xed] sm:$0xff]
      %v2536 = vlaneseq
      %v2537 = vshrl.u32 %v2536, 7
      %v2538 = vsub.s32 0, %v2537
      %v2539 = vrot.slane %v693, %v2538
      %v2540 = vmul.f32 %v2520, %v2539
      %v2541 = vmul.f32 %v2521, %v2539
      %v2542 = vmul.f32 %v2522, %v2539
      %v2543 = vmul.f32 %v2523, %v2539
      %v2544 = vmul.f32 %v2524, %v2539
      %v2545 = vmul.f32 %v2525, %v2539
      %v2546 = vmul.f32 %v2526, %v2539
      %v2547 = vmul.f32 %v2527, %v2539
      %v2548 = vmul.f32 %v2528, %v2539
      %v2549 = vmul.f32 %v2529, %v2539
      %v2550 = vmul.f32 %v2530, %v2539
      %v2551 = vmul.f32 %v2531, %v2539
      %v2552 = vmul.f32 %v2532, %v2539
      %v2553 = vmul.f32 %v2533, %v2539
      %v2554 = vmul.f32 %v2534, %v2539
      %v2555 = vmul.f32 %v2535, %v2539
      %v2556 = vadd.f32 %v2503, %v2540
      %v2557 = vadd.f32 %v2504, %v2541
      %v2558 = vadd.f32 %v2505, %v2542
      %v2559 = vadd.f32 %v2506, %v2543
      %v2560 = vadd.f32 %v2507, %v2544
      %v2561 = vadd.f32 %v2508, %v2545
      %v2562 = vadd.f32 %v2509, %v2546
      %v2563 = vadd.f32 %v2510, %v2547
      %v2564 = vadd.f32 %v2511, %v2548
      %v2565 = vadd.f32 %v2512, %v2549
      %v2566 = vadd.f32 %v2513, %v2550
      %v2567 = vadd.f32 %v2514, %v2551
      %v2568 = vadd.f32 %v2515, %v2552
      %v2569 = vadd.f32 %v2516, %v2553
      %v2570 = vadd.f32 %v2517, %v2554
      %v2571 = vadd.f32 %v2518, %v2555
      %v2572 = vld [vmem:[%s2519 + $0x6] sm:$0xff]
      %v2573 = vld [vmem:[%s2519 + $0xe] sm:$0xff]
      %v2574 = vld [vmem:[%s2519 + $0x26] sm:$0xff]
      %v2575 = vld [vmem:[%s2519 + $0x2e] sm:$0xff]
      %v2576 = vld [vmem:[%s2519 + $0x46] sm:$0xff]
      %v2577 = vld [vmem:[%s2519 + $0x4e] sm:$0xff]
      %v2578 = vld [vmem:[%s2519 + $0x66] sm:$0xff]
      %v2579 = vld [vmem:[%s2519 + $0x6e] sm:$0xff]
      %v2580 = vld [vmem:[%s2519 + $0x86] sm:$0xff]
      %v2581 = vld [vmem:[%s2519 + $0x8e] sm:$0xff]
      %v2582 = vld [vmem:[%s2519 + $0xa6] sm:$0xff]
      %v2583 = vld [vmem:[%s2519 + $0xae] sm:$0xff]
      %v2584 = vld [vmem:[%s2519 + $0xc6] sm:$0xff]
      %v2585 = vld [vmem:[%s2519 + $0xce] sm:$0xff]
      %v2586 = vld [vmem:[%s2519 + $0xe6] sm:$0xff]
      %v2587 = vld [vmem:[%s2519 + $0xee] sm:$0xff]
      %v2588 = vlaneseq
      %v2589 = vshrl.u32 %v2588, 7
      %v2590 = vsub.s32 1, %v2589
      %v2591 = vrot.slane %v693, %v2590
      %v2592 = vmul.f32 %v2572, %v2591
      %v2593 = vmul.f32 %v2573, %v2591
      %v2594 = vmul.f32 %v2574, %v2591
      %v2595 = vmul.f32 %v2575, %v2591
      %v2596 = vmul.f32 %v2576, %v2591
      %v2597 = vmul.f32 %v2577, %v2591
      %v2598 = vmul.f32 %v2578, %v2591
      %v2599 = vmul.f32 %v2579, %v2591
      %v2600 = vmul.f32 %v2580, %v2591
      %v2601 = vmul.f32 %v2581, %v2591
      %v2602 = vmul.f32 %v2582, %v2591
      %v2603 = vmul.f32 %v2583, %v2591
      %v2604 = vmul.f32 %v2584, %v2591
      %v2605 = vmul.f32 %v2585, %v2591
      %v2606 = vmul.f32 %v2586, %v2591
      %v2607 = vmul.f32 %v2587, %v2591
      %v2608 = vadd.f32 %v2556, %v2592
      %v2609 = vadd.f32 %v2557, %v2593
      %v2610 = vadd.f32 %v2558, %v2594
      %v2611 = vadd.f32 %v2559, %v2595
      %v2612 = vadd.f32 %v2560, %v2596
      %v2613 = vadd.f32 %v2561, %v2597
      %v2614 = vadd.f32 %v2562, %v2598
      %v2615 = vadd.f32 %v2563, %v2599
      %v2616 = vadd.f32 %v2564, %v2600
      %v2617 = vadd.f32 %v2565, %v2601
      %v2618 = vadd.f32 %v2566, %v2602
      %v2619 = vadd.f32 %v2567, %v2603
      %v2620 = vadd.f32 %v2568, %v2604
      %v2621 = vadd.f32 %v2569, %v2605
      %v2622 = vadd.f32 %v2570, %v2606
      %v2623 = vadd.f32 %v2571, %v2607
      %v2624 = vld [vmem:[%s2519 + $0x7] sm:$0xff]
      %v2625 = vld [vmem:[%s2519 + $0xf] sm:$0xff]
      %v2626 = vld [vmem:[%s2519 + $0x27] sm:$0xff]
      %v2627 = vld [vmem:[%s2519 + $0x2f] sm:$0xff]
      %v2628 = vld [vmem:[%s2519 + $0x47] sm:$0xff]
      %v2629 = vld [vmem:[%s2519 + $0x4f] sm:$0xff]
      %v2630 = vld [vmem:[%s2519 + $0x67] sm:$0xff]
      %v2631 = vld [vmem:[%s2519 + $0x6f] sm:$0xff]
      %v2632 = vld [vmem:[%s2519 + $0x87] sm:$0xff]
      %v2633 = vld [vmem:[%s2519 + $0x8f] sm:$0xff]
      %v2634 = vld [vmem:[%s2519 + $0xa7] sm:$0xff]
      %v2635 = vld [vmem:[%s2519 + $0xaf] sm:$0xff]
      %v2636 = vld [vmem:[%s2519 + $0xc7] sm:$0xff]
      %v2637 = vld [vmem:[%s2519 + $0xcf] sm:$0xff]
      %v2638 = vld [vmem:[%s2519 + $0xe7] sm:$0xff]
      %v2639 = vld [vmem:[%s2519 + $0xef] sm:$0xff]
      %v2640 = vlaneseq
      %v2641 = vshrl.u32 %v2640, 7
      %v2642 = vsub.s32 2, %v2641
      %v2643 = vrot.slane %v693, %v2642
      %v2644 = vmul.f32 %v2624, %v2643
      %v2645 = vmul.f32 %v2625, %v2643
      %v2646 = vmul.f32 %v2626, %v2643
      %v2647 = vmul.f32 %v2627, %v2643
      %v2648 = vmul.f32 %v2628, %v2643
      %v2649 = vmul.f32 %v2629, %v2643
      %v2650 = vmul.f32 %v2630, %v2643
      %v2651 = vmul.f32 %v2631, %v2643
      %v2652 = vmul.f32 %v2632, %v2643
      %v2653 = vmul.f32 %v2633, %v2643
      %v2654 = vmul.f32 %v2634, %v2643
      %v2655 = vmul.f32 %v2635, %v2643
      %v2656 = vmul.f32 %v2636, %v2643
      %v2657 = vmul.f32 %v2637, %v2643
      %v2658 = vmul.f32 %v2638, %v2643
      %v2659 = vmul.f32 %v2639, %v2643
      %v2660 = vadd.f32 %v2608, %v2644
      %v2661 = vadd.f32 %v2609, %v2645
      %v2662 = vadd.f32 %v2610, %v2646
      %v2663 = vadd.f32 %v2611, %v2647
      %v2664 = vadd.f32 %v2612, %v2648
      %v2665 = vadd.f32 %v2613, %v2649
      %v2666 = vadd.f32 %v2614, %v2650
      %v2667 = vadd.f32 %v2615, %v2651
      %v2668 = vadd.f32 %v2616, %v2652
      %v2669 = vadd.f32 %v2617, %v2653
      %v2670 = vadd.f32 %v2618, %v2654
      %v2671 = vadd.f32 %v2619, %v2655
      %v2672 = vadd.f32 %v2620, %v2656
      %v2673 = vadd.f32 %v2621, %v2657
      %v2674 = vadd.f32 %v2622, %v2658
      %v2675 = vadd.f32 %v2623, %v2659
      %v2676 = vld [vmem:[%s2519 + $0x8] sm:$0xff]
      %v2677 = vld [vmem:[%s2519 + $0x10] sm:$0xff]
      %v2678 = vld [vmem:[%s2519 + $0x28] sm:$0xff]
      %v2679 = vld [vmem:[%s2519 + $0x30] sm:$0xff]
      %v2680 = vld [vmem:[%s2519 + $0x48] sm:$0xff]
      %v2681 = vld [vmem:[%s2519 + $0x50] sm:$0xff]
      %v2682 = vld [vmem:[%s2519 + $0x68] sm:$0xff]
      %v2683 = vld [vmem:[%s2519 + $0x70] sm:$0xff]
      %v2684 = vld [vmem:[%s2519 + $0x88] sm:$0xff]
      %v2685 = vld [vmem:[%s2519 + $0x90] sm:$0xff]
      %v2686 = vld [vmem:[%s2519 + $0xa8] sm:$0xff]
      %v2687 = vld [vmem:[%s2519 + $0xb0] sm:$0xff]
      %v2688 = vld [vmem:[%s2519 + $0xc8] sm:$0xff]
      %v2689 = vld [vmem:[%s2519 + $0xd0] sm:$0xff]
      %v2690 = vld [vmem:[%s2519 + $0xe8] sm:$0xff]
      %v2691 = vld [vmem:[%s2519 + $0xf0] sm:$0xff]
      %v2692 = vlaneseq
      %v2693 = vshrl.u32 %v2692, 7
      %v2694 = vsub.s32 3, %v2693
      %v2695 = vrot.slane %v693, %v2694
      %v2696 = vmul.f32 %v2676, %v2695
      %v2697 = vmul.f32 %v2677, %v2695
      %v2698 = vmul.f32 %v2678, %v2695
      %v2699 = vmul.f32 %v2679, %v2695
      %v2700 = vmul.f32 %v2680, %v2695
      %v2701 = vmul.f32 %v2681, %v2695
      %v2702 = vmul.f32 %v2682, %v2695
      %v2703 = vmul.f32 %v2683, %v2695
      %v2704 = vmul.f32 %v2684, %v2695
      %v2705 = vmul.f32 %v2685, %v2695
      %v2706 = vmul.f32 %v2686, %v2695
      %v2707 = vmul.f32 %v2687, %v2695
      %v2708 = vmul.f32 %v2688, %v2695
      %v2709 = vmul.f32 %v2689, %v2695
      %v2710 = vmul.f32 %v2690, %v2695
      %v2711 = vmul.f32 %v2691, %v2695
      %v2712 = vadd.f32 %v2660, %v2696
      %v2713 = vadd.f32 %v2661, %v2697
      %v2714 = vadd.f32 %v2662, %v2698
      %v2715 = vadd.f32 %v2663, %v2699
      %v2716 = vadd.f32 %v2664, %v2700
      %v2717 = vadd.f32 %v2665, %v2701
      %v2718 = vadd.f32 %v2666, %v2702
      %v2719 = vadd.f32 %v2667, %v2703
      %v2720 = vadd.f32 %v2668, %v2704
      %v2721 = vadd.f32 %v2669, %v2705
      %v2722 = vadd.f32 %v2670, %v2706
      %v2723 = vadd.f32 %v2671, %v2707
      %v2724 = vadd.f32 %v2672, %v2708
      %v2725 = vadd.f32 %v2673, %v2709
      %v2726 = vadd.f32 %v2674, %v2710
      %v2727 = vadd.f32 %v2675, %v2711
      %v2728 = vld [vmem:[%s2519 + $0x9] sm:$0xff]
      %v2729 = vld [vmem:[%s2519 + $0x11] sm:$0xff]
      %v2730 = vld [vmem:[%s2519 + $0x29] sm:$0xff]
      %v2731 = vld [vmem:[%s2519 + $0x31] sm:$0xff]
      %v2732 = vld [vmem:[%s2519 + $0x49] sm:$0xff]
      %v2733 = vld [vmem:[%s2519 + $0x51] sm:$0xff]
      %v2734 = vld [vmem:[%s2519 + $0x69] sm:$0xff]
      %v2735 = vld [vmem:[%s2519 + $0x71] sm:$0xff]
      %v2736 = vld [vmem:[%s2519 + $0x89] sm:$0xff]
      %v2737 = vld [vmem:[%s2519 + $0x91] sm:$0xff]
      %v2738 = vld [vmem:[%s2519 + $0xa9] sm:$0xff]
      %v2739 = vld [vmem:[%s2519 + $0xb1] sm:$0xff]
      %v2740 = vld [vmem:[%s2519 + $0xc9] sm:$0xff]
      %v2741 = vld [vmem:[%s2519 + $0xd1] sm:$0xff]
      %v2742 = vld [vmem:[%s2519 + $0xe9] sm:$0xff]
      %v2743 = vld [vmem:[%s2519 + $0xf1] sm:$0xff]
      %v2744 = vlaneseq
      %v2745 = vshrl.u32 %v2744, 7
      %v2746 = vsub.s32 4, %v2745
      %v2747 = vrot.slane %v693, %v2746
      %v2748 = vmul.f32 %v2728, %v2747
      %v2749 = vmul.f32 %v2729, %v2747
      %v2750 = vmul.f32 %v2730, %v2747
      %v2751 = vmul.f32 %v2731, %v2747
      %v2752 = vmul.f32 %v2732, %v2747
      %v2753 = vmul.f32 %v2733, %v2747
      %v2754 = vmul.f32 %v2734, %v2747
      %v2755 = vmul.f32 %v2735, %v2747
      %v2756 = vmul.f32 %v2736, %v2747
      %v2757 = vmul.f32 %v2737, %v2747
      %v2758 = vmul.f32 %v2738, %v2747
      %v2759 = vmul.f32 %v2739, %v2747
      %v2760 = vmul.f32 %v2740, %v2747
      %v2761 = vmul.f32 %v2741, %v2747
      %v2762 = vmul.f32 %v2742, %v2747
      %v2763 = vmul.f32 %v2743, %v2747
      %v2764 = vadd.f32 %v2712, %v2748
      %v2765 = vadd.f32 %v2713, %v2749
      %v2766 = vadd.f32 %v2714, %v2750
      %v2767 = vadd.f32 %v2715, %v2751
      %v2768 = vadd.f32 %v2716, %v2752
      %v2769 = vadd.f32 %v2717, %v2753
      %v2770 = vadd.f32 %v2718, %v2754
      %v2771 = vadd.f32 %v2719, %v2755
      %v2772 = vadd.f32 %v2720, %v2756
      %v2773 = vadd.f32 %v2721, %v2757
      %v2774 = vadd.f32 %v2722, %v2758
      %v2775 = vadd.f32 %v2723, %v2759
      %v2776 = vadd.f32 %v2724, %v2760
      %v2777 = vadd.f32 %v2725, %v2761
      %v2778 = vadd.f32 %v2726, %v2762
      %v2779 = vadd.f32 %v2727, %v2763
      %v2780 = vld [vmem:[%s2519 + $0xa] sm:$0xff]
      %v2781 = vld [vmem:[%s2519 + $0x12] sm:$0xff]
      %v2782 = vld [vmem:[%s2519 + $0x2a] sm:$0xff]
      %v2783 = vld [vmem:[%s2519 + $0x32] sm:$0xff]
      %v2784 = vld [vmem:[%s2519 + $0x4a] sm:$0xff]
      %v2785 = vld [vmem:[%s2519 + $0x52] sm:$0xff]
      %v2786 = vld [vmem:[%s2519 + $0x6a] sm:$0xff]
      %v2787 = vld [vmem:[%s2519 + $0x72] sm:$0xff]
      %v2788 = vld [vmem:[%s2519 + $0x8a] sm:$0xff]
      %v2789 = vld [vmem:[%s2519 + $0x92] sm:$0xff]
      %v2790 = vld [vmem:[%s2519 + $0xaa] sm:$0xff]
      %v2791 = vld [vmem:[%s2519 + $0xb2] sm:$0xff]
      %v2792 = vld [vmem:[%s2519 + $0xca] sm:$0xff]
      %v2793 = vld [vmem:[%s2519 + $0xd2] sm:$0xff]
      %v2794 = vld [vmem:[%s2519 + $0xea] sm:$0xff]
      %v2795 = vld [vmem:[%s2519 + $0xf2] sm:$0xff]
      %v2796 = vlaneseq
      %v2797 = vshrl.u32 %v2796, 7
      %v2798 = vsub.s32 5, %v2797
      %v2799 = vrot.slane %v693, %v2798
      %v2800 = vmul.f32 %v2780, %v2799
      %v2801 = vmul.f32 %v2781, %v2799
      %v2802 = vmul.f32 %v2782, %v2799
      %v2803 = vmul.f32 %v2783, %v2799
      %v2804 = vmul.f32 %v2784, %v2799
      %v2805 = vmul.f32 %v2785, %v2799
      %v2806 = vmul.f32 %v2786, %v2799
      %v2807 = vmul.f32 %v2787, %v2799
      %v2808 = vmul.f32 %v2788, %v2799
      %v2809 = vmul.f32 %v2789, %v2799
      %v2810 = vmul.f32 %v2790, %v2799
      %v2811 = vmul.f32 %v2791, %v2799
      %v2812 = vmul.f32 %v2792, %v2799
      %v2813 = vmul.f32 %v2793, %v2799
      %v2814 = vmul.f32 %v2794, %v2799
      %v2815 = vmul.f32 %v2795, %v2799
      %v2816 = vadd.f32 %v2764, %v2800
      %v2817 = vadd.f32 %v2765, %v2801
      %v2818 = vadd.f32 %v2766, %v2802
      %v2819 = vadd.f32 %v2767, %v2803
      %v2820 = vadd.f32 %v2768, %v2804
      %v2821 = vadd.f32 %v2769, %v2805
      %v2822 = vadd.f32 %v2770, %v2806
      %v2823 = vadd.f32 %v2771, %v2807
      %v2824 = vadd.f32 %v2772, %v2808
      %v2825 = vadd.f32 %v2773, %v2809
      %v2826 = vadd.f32 %v2774, %v2810
      %v2827 = vadd.f32 %v2775, %v2811
      %v2828 = vadd.f32 %v2776, %v2812
      %v2829 = vadd.f32 %v2777, %v2813
      %v2830 = vadd.f32 %v2778, %v2814
      %v2831 = vadd.f32 %v2779, %v2815
      %v2832 = vld [vmem:[%s2519 + $0xb] sm:$0xff]
      %v2833 = vld [vmem:[%s2519 + $0x13] sm:$0xff]
      %v2834 = vld [vmem:[%s2519 + $0x2b] sm:$0xff]
      %v2835 = vld [vmem:[%s2519 + $0x33] sm:$0xff]
      %v2836 = vld [vmem:[%s2519 + $0x4b] sm:$0xff]
      %v2837 = vld [vmem:[%s2519 + $0x53] sm:$0xff]
      %v2838 = vld [vmem:[%s2519 + $0x6b] sm:$0xff]
      %v2839 = vld [vmem:[%s2519 + $0x73] sm:$0xff]
      %v2840 = vld [vmem:[%s2519 + $0x8b] sm:$0xff]
      %v2841 = vld [vmem:[%s2519 + $0x93] sm:$0xff]
      %v2842 = vld [vmem:[%s2519 + $0xab] sm:$0xff]
      %v2843 = vld [vmem:[%s2519 + $0xb3] sm:$0xff]
      %v2844 = vld [vmem:[%s2519 + $0xcb] sm:$0xff]
      %v2845 = vld [vmem:[%s2519 + $0xd3] sm:$0xff]
      %v2846 = vld [vmem:[%s2519 + $0xeb] sm:$0xff]
      %v2847 = vld [vmem:[%s2519 + $0xf3] sm:$0xff]
      %v2848 = vlaneseq
      %v2849 = vshrl.u32 %v2848, 7
      %v2850 = vsub.s32 6, %v2849
      %v2851 = vrot.slane %v693, %v2850
      %v2852 = vmul.f32 %v2832, %v2851
      %v2853 = vmul.f32 %v2833, %v2851
      %v2854 = vmul.f32 %v2834, %v2851
      %v2855 = vmul.f32 %v2835, %v2851
      %v2856 = vmul.f32 %v2836, %v2851
      %v2857 = vmul.f32 %v2837, %v2851
      %v2858 = vmul.f32 %v2838, %v2851
      %v2859 = vmul.f32 %v2839, %v2851
      %v2860 = vmul.f32 %v2840, %v2851
      %v2861 = vmul.f32 %v2841, %v2851
      %v2862 = vmul.f32 %v2842, %v2851
      %v2863 = vmul.f32 %v2843, %v2851
      %v2864 = vmul.f32 %v2844, %v2851
      %v2865 = vmul.f32 %v2845, %v2851
      %v2866 = vmul.f32 %v2846, %v2851
      %v2867 = vmul.f32 %v2847, %v2851
      %v2868 = vadd.f32 %v2816, %v2852
      %v2869 = vadd.f32 %v2817, %v2853
      %v2870 = vadd.f32 %v2818, %v2854
      %v2871 = vadd.f32 %v2819, %v2855
      %v2872 = vadd.f32 %v2820, %v2856
      %v2873 = vadd.f32 %v2821, %v2857
      %v2874 = vadd.f32 %v2822, %v2858
      %v2875 = vadd.f32 %v2823, %v2859
      %v2876 = vadd.f32 %v2824, %v2860
      %v2877 = vadd.f32 %v2825, %v2861
      %v2878 = vadd.f32 %v2826, %v2862
      %v2879 = vadd.f32 %v2827, %v2863
      %v2880 = vadd.f32 %v2828, %v2864
      %v2881 = vadd.f32 %v2829, %v2865
      %v2882 = vadd.f32 %v2830, %v2866
      %v2883 = vadd.f32 %v2831, %v2867
      %s2884 = scalar_lea.vmem %s682, 192 [#allocation2]
      %v2885 = vld [vmem:[%s2884 + $0x5] sm:$0xff]
      %v2886 = vld [vmem:[%s2884 + $0xd] sm:$0xff]
      %v2887 = vld [vmem:[%s2884 + $0x25] sm:$0xff]
      %v2888 = vld [vmem:[%s2884 + $0x2d] sm:$0xff]
      %v2889 = vld [vmem:[%s2884 + $0x45] sm:$0xff]
      %v2890 = vld [vmem:[%s2884 + $0x4d] sm:$0xff]
      %v2891 = vld [vmem:[%s2884 + $0x65] sm:$0xff]
      %v2892 = vld [vmem:[%s2884 + $0x6d] sm:$0xff]
      %v2893 = vld [vmem:[%s2884 + $0x85] sm:$0xff]
      %v2894 = vld [vmem:[%s2884 + $0x8d] sm:$0xff]
      %v2895 = vld [vmem:[%s2884 + $0xa5] sm:$0xff]
      %v2896 = vld [vmem:[%s2884 + $0xad] sm:$0xff]
      %v2897 = vld [vmem:[%s2884 + $0xc5] sm:$0xff]
      %v2898 = vld [vmem:[%s2884 + $0xcd] sm:$0xff]
      %v2899 = vld [vmem:[%s2884 + $0xe5] sm:$0xff]
      %v2900 = vld [vmem:[%s2884 + $0xed] sm:$0xff]
      %v2901 = vlaneseq
      %v2902 = vshrl.u32 %v2901, 7
      %v2903 = vsub.s32 0, %v2902
      %v2904 = vrot.slane %v694, %v2903
      %v2905 = vmul.f32 %v2885, %v2904
      %v2906 = vmul.f32 %v2886, %v2904
      %v2907 = vmul.f32 %v2887, %v2904
      %v2908 = vmul.f32 %v2888, %v2904
      %v2909 = vmul.f32 %v2889, %v2904
      %v2910 = vmul.f32 %v2890, %v2904
      %v2911 = vmul.f32 %v2891, %v2904
      %v2912 = vmul.f32 %v2892, %v2904
      %v2913 = vmul.f32 %v2893, %v2904
      %v2914 = vmul.f32 %v2894, %v2904
      %v2915 = vmul.f32 %v2895, %v2904
      %v2916 = vmul.f32 %v2896, %v2904
      %v2917 = vmul.f32 %v2897, %v2904
      %v2918 = vmul.f32 %v2898, %v2904
      %v2919 = vmul.f32 %v2899, %v2904
      %v2920 = vmul.f32 %v2900, %v2904
      %v2921 = vadd.f32 %v2868, %v2905
      %v2922 = vadd.f32 %v2869, %v2906
      %v2923 = vadd.f32 %v2870, %v2907
      %v2924 = vadd.f32 %v2871, %v2908
      %v2925 = vadd.f32 %v2872, %v2909
      %v2926 = vadd.f32 %v2873, %v2910
      %v2927 = vadd.f32 %v2874, %v2911
      %v2928 = vadd.f32 %v2875, %v2912
      %v2929 = vadd.f32 %v2876, %v2913
      %v2930 = vadd.f32 %v2877, %v2914
      %v2931 = vadd.f32 %v2878, %v2915
      %v2932 = vadd.f32 %v2879, %v2916
      %v2933 = vadd.f32 %v2880, %v2917
      %v2934 = vadd.f32 %v2881, %v2918
      %v2935 = vadd.f32 %v2882, %v2919
      %v2936 = vadd.f32 %v2883, %v2920
      %v2937 = vld [vmem:[%s2884 + $0x6] sm:$0xff]
      %v2938 = vld [vmem:[%s2884 + $0xe] sm:$0xff]
      %v2939 = vld [vmem:[%s2884 + $0x26] sm:$0xff]
      %v2940 = vld [vmem:[%s2884 + $0x2e] sm:$0xff]
      %v2941 = vld [vmem:[%s2884 + $0x46] sm:$0xff]
      %v2942 = vld [vmem:[%s2884 + $0x4e] sm:$0xff]
      %v2943 = vld [vmem:[%s2884 + $0x66] sm:$0xff]
      %v2944 = vld [vmem:[%s2884 + $0x6e] sm:$0xff]
      %v2945 = vld [vmem:[%s2884 + $0x86] sm:$0xff]
      %v2946 = vld [vmem:[%s2884 + $0x8e] sm:$0xff]
      %v2947 = vld [vmem:[%s2884 + $0xa6] sm:$0xff]
      %v2948 = vld [vmem:[%s2884 + $0xae] sm:$0xff]
      %v2949 = vld [vmem:[%s2884 + $0xc6] sm:$0xff]
      %v2950 = vld [vmem:[%s2884 + $0xce] sm:$0xff]
      %v2951 = vld [vmem:[%s2884 + $0xe6] sm:$0xff]
      %v2952 = vld [vmem:[%s2884 + $0xee] sm:$0xff]
      %v2953 = vlaneseq
      %v2954 = vshrl.u32 %v2953, 7
      %v2955 = vsub.s32 1, %v2954
      %v2956 = vrot.slane %v694, %v2955
      %v2957 = vmul.f32 %v2937, %v2956
      %v2958 = vmul.f32 %v2938, %v2956
      %v2959 = vmul.f32 %v2939, %v2956
      %v2960 = vmul.f32 %v2940, %v2956
      %v2961 = vmul.f32 %v2941, %v2956
      %v2962 = vmul.f32 %v2942, %v2956
      %v2963 = vmul.f32 %v2943, %v2956
      %v2964 = vmul.f32 %v2944, %v2956
      %v2965 = vmul.f32 %v2945, %v2956
      %v2966 = vmul.f32 %v2946, %v2956
      %v2967 = vmul.f32 %v2947, %v2956
      %v2968 = vmul.f32 %v2948, %v2956
      %v2969 = vmul.f32 %v2949, %v2956
      %v2970 = vmul.f32 %v2950, %v2956
      %v2971 = vmul.f32 %v2951, %v2956
      %v2972 = vmul.f32 %v2952, %v2956
      %v2973 = vadd.f32 %v2921, %v2957
      %v2974 = vadd.f32 %v2922, %v2958
      %v2975 = vadd.f32 %v2923, %v2959
      %v2976 = vadd.f32 %v2924, %v2960
      %v2977 = vadd.f32 %v2925, %v2961
      %v2978 = vadd.f32 %v2926, %v2962
      %v2979 = vadd.f32 %v2927, %v2963
      %v2980 = vadd.f32 %v2928, %v2964
      %v2981 = vadd.f32 %v2929, %v2965
      %v2982 = vadd.f32 %v2930, %v2966
      %v2983 = vadd.f32 %v2931, %v2967
      %v2984 = vadd.f32 %v2932, %v2968
      %v2985 = vadd.f32 %v2933, %v2969
      %v2986 = vadd.f32 %v2934, %v2970
      %v2987 = vadd.f32 %v2935, %v2971
      %v2988 = vadd.f32 %v2936, %v2972
      %v2989 = vld [vmem:[%s2884 + $0x7] sm:$0xff]
      %v2990 = vld [vmem:[%s2884 + $0xf] sm:$0xff]
      %v2991 = vld [vmem:[%s2884 + $0x27] sm:$0xff]
      %v2992 = vld [vmem:[%s2884 + $0x2f] sm:$0xff]
      %v2993 = vld [vmem:[%s2884 + $0x47] sm:$0xff]
      %v2994 = vld [vmem:[%s2884 + $0x4f] sm:$0xff]
      %v2995 = vld [vmem:[%s2884 + $0x67] sm:$0xff]
      %v2996 = vld [vmem:[%s2884 + $0x6f] sm:$0xff]
      %v2997 = vld [vmem:[%s2884 + $0x87] sm:$0xff]
      %v2998 = vld [vmem:[%s2884 + $0x8f] sm:$0xff]
      %v2999 = vld [vmem:[%s2884 + $0xa7] sm:$0xff]
      %v3000 = vld [vmem:[%s2884 + $0xaf] sm:$0xff]
      %v3001 = vld [vmem:[%s2884 + $0xc7] sm:$0xff]
      %v3002 = vld [vmem:[%s2884 + $0xcf] sm:$0xff]
      %v3003 = vld [vmem:[%s2884 + $0xe7] sm:$0xff]
      %v3004 = vld [vmem:[%s2884 + $0xef] sm:$0xff]
      %v3005 = vlaneseq
      %v3006 = vshrl.u32 %v3005, 7
      %v3007 = vsub.s32 2, %v3006
      %v3008 = vrot.slane %v694, %v3007
      %v3009 = vmul.f32 %v2989, %v3008
      %v3010 = vmul.f32 %v2990, %v3008
      %v3011 = vmul.f32 %v2991, %v3008
      %v3012 = vmul.f32 %v2992, %v3008
      %v3013 = vmul.f32 %v2993, %v3008
      %v3014 = vmul.f32 %v2994, %v3008
      %v3015 = vmul.f32 %v2995, %v3008
      %v3016 = vmul.f32 %v2996, %v3008
      %v3017 = vmul.f32 %v2997, %v3008
      %v3018 = vmul.f32 %v2998, %v3008
      %v3019 = vmul.f32 %v2999, %v3008
      %v3020 = vmul.f32 %v3000, %v3008
      %v3021 = vmul.f32 %v3001, %v3008
      %v3022 = vmul.f32 %v3002, %v3008
      %v3023 = vmul.f32 %v3003, %v3008
      %v3024 = vmul.f32 %v3004, %v3008
      %v3025 = vadd.f32 %v2973, %v3009
      %v3026 = vadd.f32 %v2974, %v3010
      %v3027 = vadd.f32 %v2975, %v3011
      %v3028 = vadd.f32 %v2976, %v3012
      %v3029 = vadd.f32 %v2977, %v3013
      %v3030 = vadd.f32 %v2978, %v3014
      %v3031 = vadd.f32 %v2979, %v3015
      %v3032 = vadd.f32 %v2980, %v3016
      %v3033 = vadd.f32 %v2981, %v3017
      %v3034 = vadd.f32 %v2982, %v3018
      %v3035 = vadd.f32 %v2983, %v3019
      %v3036 = vadd.f32 %v2984, %v3020
      %v3037 = vadd.f32 %v2985, %v3021
      %v3038 = vadd.f32 %v2986, %v3022
      %v3039 = vadd.f32 %v2987, %v3023
      %v3040 = vadd.f32 %v2988, %v3024
      %v3041 = vld [vmem:[%s2884 + $0x8] sm:$0xff]
      %v3042 = vld [vmem:[%s2884 + $0x10] sm:$0xff]
      %v3043 = vld [vmem:[%s2884 + $0x28] sm:$0xff]
      %v3044 = vld [vmem:[%s2884 + $0x30] sm:$0xff]
      %v3045 = vld [vmem:[%s2884 + $0x48] sm:$0xff]
      %v3046 = vld [vmem:[%s2884 + $0x50] sm:$0xff]
      %v3047 = vld [vmem:[%s2884 + $0x68] sm:$0xff]
      %v3048 = vld [vmem:[%s2884 + $0x70] sm:$0xff]
      %v3049 = vld [vmem:[%s2884 + $0x88] sm:$0xff]
      %v3050 = vld [vmem:[%s2884 + $0x90] sm:$0xff]
      %v3051 = vld [vmem:[%s2884 + $0xa8] sm:$0xff]
      %v3052 = vld [vmem:[%s2884 + $0xb0] sm:$0xff]
      %v3053 = vld [vmem:[%s2884 + $0xc8] sm:$0xff]
      %v3054 = vld [vmem:[%s2884 + $0xd0] sm:$0xff]
      %v3055 = vld [vmem:[%s2884 + $0xe8] sm:$0xff]
      %v3056 = vld [vmem:[%s2884 + $0xf0] sm:$0xff]
      %v3057 = vlaneseq
      %v3058 = vshrl.u32 %v3057, 7
      %v3059 = vsub.s32 3, %v3058
      %v3060 = vrot.slane %v694, %v3059
      %v3061 = vmul.f32 %v3041, %v3060
      %v3062 = vmul.f32 %v3042, %v3060
      %v3063 = vmul.f32 %v3043, %v3060
      %v3064 = vmul.f32 %v3044, %v3060
      %v3065 = vmul.f32 %v3045, %v3060
      %v3066 = vmul.f32 %v3046, %v3060
      %v3067 = vmul.f32 %v3047, %v3060
      %v3068 = vmul.f32 %v3048, %v3060
      %v3069 = vmul.f32 %v3049, %v3060
      %v3070 = vmul.f32 %v3050, %v3060
      %v3071 = vmul.f32 %v3051, %v3060
      %v3072 = vmul.f32 %v3052, %v3060
      %v3073 = vmul.f32 %v3053, %v3060
      %v3074 = vmul.f32 %v3054, %v3060
      %v3075 = vmul.f32 %v3055, %v3060
      %v3076 = vmul.f32 %v3056, %v3060
      %v3077 = vadd.f32 %v3025, %v3061
      %v3078 = vadd.f32 %v3026, %v3062
      %v3079 = vadd.f32 %v3027, %v3063
      %v3080 = vadd.f32 %v3028, %v3064
      %v3081 = vadd.f32 %v3029, %v3065
      %v3082 = vadd.f32 %v3030, %v3066
      %v3083 = vadd.f32 %v3031, %v3067
      %v3084 = vadd.f32 %v3032, %v3068
      %v3085 = vadd.f32 %v3033, %v3069
      %v3086 = vadd.f32 %v3034, %v3070
      %v3087 = vadd.f32 %v3035, %v3071
      %v3088 = vadd.f32 %v3036, %v3072
      %v3089 = vadd.f32 %v3037, %v3073
      %v3090 = vadd.f32 %v3038, %v3074
      %v3091 = vadd.f32 %v3039, %v3075
      %v3092 = vadd.f32 %v3040, %v3076
      %v3093 = vld [vmem:[%s2884 + $0x9] sm:$0xff]
      %v3094 = vld [vmem:[%s2884 + $0x11] sm:$0xff]
      %v3095 = vld [vmem:[%s2884 + $0x29] sm:$0xff]
      %v3096 = vld [vmem:[%s2884 + $0x31] sm:$0xff]
      %v3097 = vld [vmem:[%s2884 + $0x49] sm:$0xff]
      %v3098 = vld [vmem:[%s2884 + $0x51] sm:$0xff]
      %v3099 = vld [vmem:[%s2884 + $0x69] sm:$0xff]
      %v3100 = vld [vmem:[%s2884 + $0x71] sm:$0xff]
      %v3101 = vld [vmem:[%s2884 + $0x89] sm:$0xff]
      %v3102 = vld [vmem:[%s2884 + $0x91] sm:$0xff]
      %v3103 = vld [vmem:[%s2884 + $0xa9] sm:$0xff]
      %v3104 = vld [vmem:[%s2884 + $0xb1] sm:$0xff]
      %v3105 = vld [vmem:[%s2884 + $0xc9] sm:$0xff]
      %v3106 = vld [vmem:[%s2884 + $0xd1] sm:$0xff]
      %v3107 = vld [vmem:[%s2884 + $0xe9] sm:$0xff]
      %v3108 = vld [vmem:[%s2884 + $0xf1] sm:$0xff]
      %v3109 = vlaneseq
      %v3110 = vshrl.u32 %v3109, 7
      %v3111 = vsub.s32 4, %v3110
      %v3112 = vrot.slane %v694, %v3111
      %v3113 = vmul.f32 %v3093, %v3112
      %v3114 = vmul.f32 %v3094, %v3112
      %v3115 = vmul.f32 %v3095, %v3112
      %v3116 = vmul.f32 %v3096, %v3112
      %v3117 = vmul.f32 %v3097, %v3112
      %v3118 = vmul.f32 %v3098, %v3112
      %v3119 = vmul.f32 %v3099, %v3112
      %v3120 = vmul.f32 %v3100, %v3112
      %v3121 = vmul.f32 %v3101, %v3112
      %v3122 = vmul.f32 %v3102, %v3112
      %v3123 = vmul.f32 %v3103, %v3112
      %v3124 = vmul.f32 %v3104, %v3112
      %v3125 = vmul.f32 %v3105, %v3112
      %v3126 = vmul.f32 %v3106, %v3112
      %v3127 = vmul.f32 %v3107, %v3112
      %v3128 = vmul.f32 %v3108, %v3112
      %v3129 = vadd.f32 %v3077, %v3113
      %v3130 = vadd.f32 %v3078, %v3114
      %v3131 = vadd.f32 %v3079, %v3115
      %v3132 = vadd.f32 %v3080, %v3116
      %v3133 = vadd.f32 %v3081, %v3117
      %v3134 = vadd.f32 %v3082, %v3118
      %v3135 = vadd.f32 %v3083, %v3119
      %v3136 = vadd.f32 %v3084, %v3120
      %v3137 = vadd.f32 %v3085, %v3121
      %v3138 = vadd.f32 %v3086, %v3122
      %v3139 = vadd.f32 %v3087, %v3123
      %v3140 = vadd.f32 %v3088, %v3124
      %v3141 = vadd.f32 %v3089, %v3125
      %v3142 = vadd.f32 %v3090, %v3126
      %v3143 = vadd.f32 %v3091, %v3127
      %v3144 = vadd.f32 %v3092, %v3128
      %v3145 = vld [vmem:[%s2884 + $0xa] sm:$0xff]
      %v3146 = vld [vmem:[%s2884 + $0x12] sm:$0xff]
      %v3147 = vld [vmem:[%s2884 + $0x2a] sm:$0xff]
      %v3148 = vld [vmem:[%s2884 + $0x32] sm:$0xff]
      %v3149 = vld [vmem:[%s2884 + $0x4a] sm:$0xff]
      %v3150 = vld [vmem:[%s2884 + $0x52] sm:$0xff]
      %v3151 = vld [vmem:[%s2884 + $0x6a] sm:$0xff]
      %v3152 = vld [vmem:[%s2884 + $0x72] sm:$0xff]
      %v3153 = vld [vmem:[%s2884 + $0x8a] sm:$0xff]
      %v3154 = vld [vmem:[%s2884 + $0x92] sm:$0xff]
      %v3155 = vld [vmem:[%s2884 + $0xaa] sm:$0xff]
      %v3156 = vld [vmem:[%s2884 + $0xb2] sm:$0xff]
      %v3157 = vld [vmem:[%s2884 + $0xca] sm:$0xff]
      %v3158 = vld [vmem:[%s2884 + $0xd2] sm:$0xff]
      %v3159 = vld [vmem:[%s2884 + $0xea] sm:$0xff]
      %v3160 = vld [vmem:[%s2884 + $0xf2] sm:$0xff]
      %v3161 = vlaneseq
      %v3162 = vshrl.u32 %v3161, 7
      %v3163 = vsub.s32 5, %v3162
      %v3164 = vrot.slane %v694, %v3163
      %v3165 = vmul.f32 %v3145, %v3164
      %v3166 = vmul.f32 %v3146, %v3164
      %v3167 = vmul.f32 %v3147, %v3164
      %v3168 = vmul.f32 %v3148, %v3164
      %v3169 = vmul.f32 %v3149, %v3164
      %v3170 = vmul.f32 %v3150, %v3164
      %v3171 = vmul.f32 %v3151, %v3164
      %v3172 = vmul.f32 %v3152, %v3164
      %v3173 = vmul.f32 %v3153, %v3164
      %v3174 = vmul.f32 %v3154, %v3164
      %v3175 = vmul.f32 %v3155, %v3164
      %v3176 = vmul.f32 %v3156, %v3164
      %v3177 = vmul.f32 %v3157, %v3164
      %v3178 = vmul.f32 %v3158, %v3164
      %v3179 = vmul.f32 %v3159, %v3164
      %v3180 = vmul.f32 %v3160, %v3164
      %v3181 = vadd.f32 %v3129, %v3165
      %v3182 = vadd.f32 %v3130, %v3166
      %v3183 = vadd.f32 %v3131, %v3167
      %v3184 = vadd.f32 %v3132, %v3168
      %v3185 = vadd.f32 %v3133, %v3169
      %v3186 = vadd.f32 %v3134, %v3170
      %v3187 = vadd.f32 %v3135, %v3171
      %v3188 = vadd.f32 %v3136, %v3172
      %v3189 = vadd.f32 %v3137, %v3173
      %v3190 = vadd.f32 %v3138, %v3174
      %v3191 = vadd.f32 %v3139, %v3175
      %v3192 = vadd.f32 %v3140, %v3176
      %v3193 = vadd.f32 %v3141, %v3177
      %v3194 = vadd.f32 %v3142, %v3178
      %v3195 = vadd.f32 %v3143, %v3179
      %v3196 = vadd.f32 %v3144, %v3180
      %v3197 = vld [vmem:[%s2884 + $0xb] sm:$0xff]
      %v3198 = vld [vmem:[%s2884 + $0x13] sm:$0xff]
      %v3199 = vld [vmem:[%s2884 + $0x2b] sm:$0xff]
      %v3200 = vld [vmem:[%s2884 + $0x33] sm:$0xff]
      %v3201 = vld [vmem:[%s2884 + $0x4b] sm:$0xff]
      %v3202 = vld [vmem:[%s2884 + $0x53] sm:$0xff]
      %v3203 = vld [vmem:[%s2884 + $0x6b] sm:$0xff]
      %v3204 = vld [vmem:[%s2884 + $0x73] sm:$0xff]
      %v3205 = vld [vmem:[%s2884 + $0x8b] sm:$0xff]
      %v3206 = vld [vmem:[%s2884 + $0x93] sm:$0xff]
      %v3207 = vld [vmem:[%s2884 + $0xab] sm:$0xff]
      %v3208 = vld [vmem:[%s2884 + $0xb3] sm:$0xff]
      %v3209 = vld [vmem:[%s2884 + $0xcb] sm:$0xff]
      %v3210 = vld [vmem:[%s2884 + $0xd3] sm:$0xff]
      %v3211 = vld [vmem:[%s2884 + $0xeb] sm:$0xff]
      %v3212 = vld [vmem:[%s2884 + $0xf3] sm:$0xff]
      %v3213 = vlaneseq
      %v3214 = vshrl.u32 %v3213, 7
      %v3215 = vsub.s32 6, %v3214
      %v3216 = vrot.slane %v694, %v3215
      %v3217 = vmul.f32 %v3197, %v3216
      %v3218 = vmul.f32 %v3198, %v3216
      %v3219 = vmul.f32 %v3199, %v3216
      %v3220 = vmul.f32 %v3200, %v3216
      %v3221 = vmul.f32 %v3201, %v3216
      %v3222 = vmul.f32 %v3202, %v3216
      %v3223 = vmul.f32 %v3203, %v3216
      %v3224 = vmul.f32 %v3204, %v3216
      %v3225 = vmul.f32 %v3205, %v3216
      %v3226 = vmul.f32 %v3206, %v3216
      %v3227 = vmul.f32 %v3207, %v3216
      %v3228 = vmul.f32 %v3208, %v3216
      %v3229 = vmul.f32 %v3209, %v3216
      %v3230 = vmul.f32 %v3210, %v3216
      %v3231 = vmul.f32 %v3211, %v3216
      %v3232 = vmul.f32 %v3212, %v3216
      %v3233 = vadd.f32 %v3181, %v3217
      %v3234 = vadd.f32 %v3182, %v3218
      %v3235 = vadd.f32 %v3183, %v3219
      %v3236 = vadd.f32 %v3184, %v3220
      %v3237 = vadd.f32 %v3185, %v3221
      %v3238 = vadd.f32 %v3186, %v3222
      %v3239 = vadd.f32 %v3187, %v3223
      %v3240 = vadd.f32 %v3188, %v3224
      %v3241 = vadd.f32 %v3189, %v3225
      %v3242 = vadd.f32 %v3190, %v3226
      %v3243 = vadd.f32 %v3191, %v3227
      %v3244 = vadd.f32 %v3192, %v3228
      %v3245 = vadd.f32 %v3193, %v3229
      %v3246 = vadd.f32 %v3194, %v3230
      %v3247 = vadd.f32 %v3195, %v3231
      %v3248 = vadd.f32 %v3196, %v3232
      %v3249 = vld [vmem:[%s2] sm:$0x1]
      %v3251 = vlaneseq
      %v3252 = vshrl.u32 %v3251, 7
      %v3253 = vsub.s32 0, %v3252
      %v3254 = vrot.slane %v3249, %v3253
      %v3256 = vadd.f32 %v3233, %v3254
      %v3257 = vadd.f32 %v3234, %v3254
      %v3258 = vadd.f32 %v3235, %v3254
      %v3259 = vadd.f32 %v3236, %v3254
      %v3260 = vadd.f32 %v3237, %v3254
      %v3261 = vadd.f32 %v3238, %v3254
      %v3262 = vadd.f32 %v3239, %v3254
      %v3263 = vadd.f32 %v3240, %v3254
      %v3264 = vadd.f32 %v3241, %v3254
      %v3265 = vadd.f32 %v3242, %v3254
      %v3266 = vadd.f32 %v3243, %v3254
      %v3267 = vadd.f32 %v3244, %v3254
      %v3268 = vadd.f32 %v3245, %v3254
      %v3269 = vadd.f32 %v3246, %v3254
      %v3270 = vadd.f32 %v3247, %v3254
      %v3271 = vadd.f32 %v3248, %v3254
      %3272 = vadd.xlane.f32.xlu0 %v3256
      %v3273 = vpop.xlane.xlu0 %3272
      %3274 = vadd.xlane.f32.xlu0 %v3257
      %v3275 = vpop.xlane.xlu0 %3274
      %3276 = vadd.xlane.f32.xlu0 %v3258
      %v3277 = vpop.xlane.xlu0 %3276
      %3278 = vadd.xlane.f32.xlu0 %v3259
      %v3279 = vpop.xlane.xlu0 %3278
      %3280 = vadd.xlane.f32.xlu0 %v3260
      %v3281 = vpop.xlane.xlu0 %3280
      %3282 = vadd.xlane.f32.xlu0 %v3261
      %v3283 = vpop.xlane.xlu0 %3282
      %3284 = vadd.xlane.f32.xlu0 %v3262
      %v3285 = vpop.xlane.xlu0 %3284
      %3286 = vadd.xlane.f32.xlu0 %v3263
      %v3287 = vpop.xlane.xlu0 %3286
      %3288 = vadd.xlane.f32.xlu0 %v3264
      %v3289 = vpop.xlane.xlu0 %3288
      %3290 = vadd.xlane.f32.xlu0 %v3265
      %v3291 = vpop.xlane.xlu0 %3290
      %3292 = vadd.xlane.f32.xlu0 %v3266
      %v3293 = vpop.xlane.xlu0 %3292
      %3294 = vadd.xlane.f32.xlu0 %v3267
      %v3295 = vpop.xlane.xlu0 %3294
      %3296 = vadd.xlane.f32.xlu0 %v3268
      %v3297 = vpop.xlane.xlu0 %3296
      %3298 = vadd.xlane.f32.xlu0 %v3269
      %v3299 = vpop.xlane.xlu0 %3298
      %3300 = vadd.xlane.f32.xlu0 %v3270
      %v3301 = vpop.xlane.xlu0 %3300
      %3302 = vadd.xlane.f32.xlu0 %v3271
      %v3303 = vpop.xlane.xlu0 %3302
      %v3304 = vmul.f32 %v3273, 0.25
      %v3305 = vmul.f32 %v3275, 0.25
      %v3306 = vmul.f32 %v3277, 0.25
      %v3307 = vmul.f32 %v3279, 0.25
      %v3308 = vmul.f32 %v3281, 0.25
      %v3309 = vmul.f32 %v3283, 0.25
      %v3310 = vmul.f32 %v3285, 0.25
      %v3311 = vmul.f32 %v3287, 0.25
      %v3312 = vmul.f32 %v3289, 0.25
      %v3313 = vmul.f32 %v3291, 0.25
      %v3314 = vmul.f32 %v3293, 0.25
      %v3315 = vmul.f32 %v3295, 0.25
      %v3316 = vmul.f32 %v3297, 0.25
      %v3317 = vmul.f32 %v3299, 0.25
      %v3318 = vmul.f32 %v3301, 0.25
      %v3319 = vmul.f32 %v3303, 0.25
      %v3320 = vsub.f32 %v3256, %v3304
      %v3321 = vsub.f32 %v3257, %v3305
      %v3322 = vsub.f32 %v3258, %v3306
      %v3323 = vsub.f32 %v3259, %v3307
      %v3324 = vsub.f32 %v3260, %v3308
      %v3325 = vsub.f32 %v3261, %v3309
      %v3326 = vsub.f32 %v3262, %v3310
      %v3327 = vsub.f32 %v3263, %v3311
      %v3328 = vsub.f32 %v3264, %v3312
      %v3329 = vsub.f32 %v3265, %v3313
      %v3330 = vsub.f32 %v3266, %v3314
      %v3331 = vsub.f32 %v3267, %v3315
      %v3332 = vsub.f32 %v3268, %v3316
      %v3333 = vsub.f32 %v3269, %v3317
      %v3334 = vsub.f32 %v3270, %v3318
      %v3335 = vsub.f32 %v3271, %v3319
      %v3336 = vlaneseq
      %v3337 = vand.u32 %v3336, 127
      %vm3338 = vcmp.lt.s32.totalorder %v3337, 4
      %v3339 = vsel %vm3338, 1, 0
      %vm3340 = vcmp.eq.s32.totalorder %v3339, 1
      %v3341 = vsel %vm3340, %v3320, 0.0
      %v3342 = vsel %vm3340, %v3321, 0.0
      %v3343 = vsel %vm3340, %v3322, 0.0
      %v3344 = vsel %vm3340, %v3323, 0.0
      %v3345 = vsel %vm3340, %v3324, 0.0
      %v3346 = vsel %vm3340, %v3325, 0.0
      %v3347 = vsel %vm3340, %v3326, 0.0
      %v3348 = vsel %vm3340, %v3327, 0.0
      %v3349 = vsel %vm3340, %v3328, 0.0
      %v3350 = vsel %vm3340, %v3329, 0.0
      %v3351 = vsel %vm3340, %v3330, 0.0
      %v3352 = vsel %vm3340, %v3331, 0.0
      %v3353 = vsel %vm3340, %v3332, 0.0
      %v3354 = vsel %vm3340, %v3333, 0.0
      %v3355 = vsel %vm3340, %v3334, 0.0
      %v3356 = vsel %vm3340, %v3335, 0.0
      %v3357 = vmul.f32 %v3341, %v3341
      %v3358 = vmul.f32 %v3342, %v3342
      %v3359 = vmul.f32 %v3343, %v3343
      %v3360 = vmul.f32 %v3344, %v3344
      %v3361 = vmul.f32 %v3345, %v3345
      %v3362 = vmul.f32 %v3346, %v3346
      %v3363 = vmul.f32 %v3347, %v3347
      %v3364 = vmul.f32 %v3348, %v3348
      %v3365 = vmul.f32 %v3349, %v3349
      %v3366 = vmul.f32 %v3350, %v3350
      %v3367 = vmul.f32 %v3351, %v3351
      %v3368 = vmul.f32 %v3352, %v3352
      %v3369 = vmul.f32 %v3353, %v3353
      %v3370 = vmul.f32 %v3354, %v3354
      %v3371 = vmul.f32 %v3355, %v3355
      %v3372 = vmul.f32 %v3356, %v3356
      %3373 = vadd.xlane.f32.xlu0 %v3357
      %v3374 = vpop.xlane.xlu0 %3373
      %3375 = vadd.xlane.f32.xlu0 %v3358
      %v3376 = vpop.xlane.xlu0 %3375
      %3377 = vadd.xlane.f32.xlu0 %v3359
      %v3378 = vpop.xlane.xlu0 %3377
      %3379 = vadd.xlane.f32.xlu0 %v3360
      %v3380 = vpop.xlane.xlu0 %3379
      %3381 = vadd.xlane.f32.xlu0 %v3361
      %v3382 = vpop.xlane.xlu0 %3381
      %3383 = vadd.xlane.f32.xlu0 %v3362
      %v3384 = vpop.xlane.xlu0 %3383
      %3385 = vadd.xlane.f32.xlu0 %v3363
      %v3386 = vpop.xlane.xlu0 %3385
      %3387 = vadd.xlane.f32.xlu0 %v3364
      %v3388 = vpop.xlane.xlu0 %3387
      %3389 = vadd.xlane.f32.xlu0 %v3365
      %v3390 = vpop.xlane.xlu0 %3389
      %3391 = vadd.xlane.f32.xlu0 %v3366
      %v3392 = vpop.xlane.xlu0 %3391
      %3393 = vadd.xlane.f32.xlu0 %v3367
      %v3394 = vpop.xlane.xlu0 %3393
      %3395 = vadd.xlane.f32.xlu0 %v3368
      %v3396 = vpop.xlane.xlu0 %3395
      %3397 = vadd.xlane.f32.xlu0 %v3369
      %v3398 = vpop.xlane.xlu0 %3397
      %3399 = vadd.xlane.f32.xlu0 %v3370
      %v3400 = vpop.xlane.xlu0 %3399
      %3401 = vadd.xlane.f32.xlu0 %v3371
      %v3402 = vpop.xlane.xlu0 %3401
      %3403 = vadd.xlane.f32.xlu0 %v3372
      %v3404 = vpop.xlane.xlu0 %3403
      %v3405 = vmul.f32 %v3374, 0.25
      %v3406 = vmul.f32 %v3376, 0.25
      %v3407 = vmul.f32 %v3378, 0.25
      %v3408 = vmul.f32 %v3380, 0.25
      %v3409 = vmul.f32 %v3382, 0.25
      %v3410 = vmul.f32 %v3384, 0.25
      %v3411 = vmul.f32 %v3386, 0.25
      %v3412 = vmul.f32 %v3388, 0.25
      %v3413 = vmul.f32 %v3390, 0.25
      %v3414 = vmul.f32 %v3392, 0.25
      %v3415 = vmul.f32 %v3394, 0.25
      %v3416 = vmul.f32 %v3396, 0.25
      %v3417 = vmul.f32 %v3398, 0.25
      %v3418 = vmul.f32 %v3400, 0.25
      %v3419 = vmul.f32 %v3402, 0.25
      %v3420 = vmul.f32 %v3404, 0.25
      %v3421 = vadd.f32 %v3405, 1e-06
      %v3422 = vadd.f32 %v3406, 1e-06
      %v3423 = vadd.f32 %v3407, 1e-06
      %v3424 = vadd.f32 %v3408, 1e-06
      %v3425 = vadd.f32 %v3409, 1e-06
      %v3426 = vadd.f32 %v3410, 1e-06
      %v3427 = vadd.f32 %v3411, 1e-06
      %v3428 = vadd.f32 %v3412, 1e-06
      %v3429 = vadd.f32 %v3413, 1e-06
      %v3430 = vadd.f32 %v3414, 1e-06
      %v3431 = vadd.f32 %v3415, 1e-06
      %v3432 = vadd.f32 %v3416, 1e-06
      %v3433 = vadd.f32 %v3417, 1e-06
      %v3434 = vadd.f32 %v3418, 1e-06
      %v3435 = vadd.f32 %v3419, 1e-06
      %v3436 = vadd.f32 %v3420, 1e-06
      %v3437 = vrsqrt.pop %v3421
      %v3438 = vrsqrt.pop %v3422
      %v3439 = vrsqrt.pop %v3423
      %v3440 = vrsqrt.pop %v3424
      %v3441 = vrsqrt.pop %v3425
      %v3442 = vrsqrt.pop %v3426
      %v3443 = vrsqrt.pop %v3427
      %v3444 = vrsqrt.pop %v3428
      %v3445 = vrsqrt.pop %v3429
      %v3446 = vrsqrt.pop %v3430
      %v3447 = vrsqrt.pop %v3431
      %v3448 = vrsqrt.pop %v3432
      %v3449 = vrsqrt.pop %v3433
      %v3450 = vrsqrt.pop %v3434
      %v3451 = vrsqrt.pop %v3435
      %v3452 = vrsqrt.pop %v3436
      %v3453 = vmul.f32 %v3341, %v3437
      %v3454 = vmul.f32 %v3342, %v3438
      %v3455 = vmul.f32 %v3343, %v3439
      %v3456 = vmul.f32 %v3344, %v3440
      %v3457 = vmul.f32 %v3345, %v3441
      %v3458 = vmul.f32 %v3346, %v3442
      %v3459 = vmul.f32 %v3347, %v3443
      %v3460 = vmul.f32 %v3348, %v3444
      %v3461 = vmul.f32 %v3349, %v3445
      %v3462 = vmul.f32 %v3350, %v3446
      %v3463 = vmul.f32 %v3351, %v3447
      %v3464 = vmul.f32 %v3352, %v3448
      %v3465 = vmul.f32 %v3353, %v3449
      %v3466 = vmul.f32 %v3354, %v3450
      %v3467 = vmul.f32 %v3355, %v3451
      %v3468 = vmul.f32 %v3356, %v3452
      %v3469 = vld [vmem:[%s3] sm:$0x1]
      %v3471 = vlaneseq
      %v3472 = vshrl.u32 %v3471, 7
      %v3473 = vsub.s32 0, %v3472
      %v3474 = vrot.slane %v3469, %v3473
      %v3476 = vmul.f32 %v3453, %v3474
      %v3477 = vmul.f32 %v3454, %v3474
      %v3478 = vmul.f32 %v3455, %v3474
      %v3479 = vmul.f32 %v3456, %v3474
      %v3480 = vmul.f32 %v3457, %v3474
      %v3481 = vmul.f32 %v3458, %v3474
      %v3482 = vmul.f32 %v3459, %v3474
      %v3483 = vmul.f32 %v3460, %v3474
      %v3484 = vmul.f32 %v3461, %v3474
      %v3485 = vmul.f32 %v3462, %v3474
      %v3486 = vmul.f32 %v3463, %v3474
      %v3487 = vmul.f32 %v3464, %v3474
      %v3488 = vmul.f32 %v3465, %v3474
      %v3489 = vmul.f32 %v3466, %v3474
      %v3490 = vmul.f32 %v3467, %v3474
      %v3491 = vmul.f32 %v3468, %v3474
      %v3492 = vld [vmem:[%s4] sm:$0x1]
      %v3494 = vlaneseq
      %v3495 = vshrl.u32 %v3494, 7
      %v3496 = vsub.s32 0, %v3495
      %v3497 = vrot.slane %v3492, %v3496
      %v3499 = vadd.f32 %v3476, %v3497
      %v3500 = vadd.f32 %v3477, %v3497
      %v3501 = vadd.f32 %v3478, %v3497
      %v3502 = vadd.f32 %v3479, %v3497
      %v3503 = vadd.f32 %v3480, %v3497
      %v3504 = vadd.f32 %v3481, %v3497
      %v3505 = vadd.f32 %v3482, %v3497
      %v3506 = vadd.f32 %v3483, %v3497
      %v3507 = vadd.f32 %v3484, %v3497
      %v3508 = vadd.f32 %v3485, %v3497
      %v3509 = vadd.f32 %v3486, %v3497
      %v3510 = vadd.f32 %v3487, %v3497
      %v3511 = vadd.f32 %v3488, %v3497
      %v3512 = vadd.f32 %v3489, %v3497
      %v3513 = vadd.f32 %v3490, %v3497
      %v3514 = vadd.f32 %v3491, %v3497
      %v3515 = vld [vmem:[%s5] sm:$0xff]
      %v3516 = vld [vmem:[%s5 + $0x8] sm:$0xff]
      %v3517 = vld [vmem:[%s5 + $0x10] sm:$0xff]
      %v3518 = vld [vmem:[%s5 + $0x18] sm:$0xff]
      %v3519 = vld [vmem:[%s5 + $0x20] sm:$0xff]
      %v3520 = vld [vmem:[%s5 + $0x28] sm:$0xff]
      %v3521 = vld [vmem:[%s5 + $0x30] sm:$0xff]
      %v3522 = vld [vmem:[%s5 + $0x38] sm:$0xff]
      %v3523 = vld [vmem:[%s5 + $0x40] sm:$0xff]
      %v3524 = vld [vmem:[%s5 + $0x48] sm:$0xff]
      %v3525 = vld [vmem:[%s5 + $0x50] sm:$0xff]
      %v3526 = vld [vmem:[%s5 + $0x58] sm:$0xff]
      %v3527 = vld [vmem:[%s5 + $0x60] sm:$0xff]
      %v3528 = vld [vmem:[%s5 + $0x68] sm:$0xff]
      %v3529 = vld [vmem:[%s5 + $0x70] sm:$0xff]
      %v3530 = vld [vmem:[%s5 + $0x78] sm:$0xff]
      %v3531 = vld [vmem:[%s6] sm:$0x1]
      %v3533 = vlaneseq
      %v3534 = vshrl.u32 %v3533, 7
      %v3535 = vsub.s32 0, %v3534
      %v3536 = vrot.slane %v3531, %v3535
      %3538 = vmatprep.subr.mxu0 0.0
      %3539 = vmatpush1.msra.mxu0 %v3515
      %3540 = vmatprep.subr.mxu0 0.0
      %3541 = vmatpush1.msra.mxu0 %v3516
      %3542 = vmatprep.subr.mxu0 0.0
      %3543 = vmatpush1.msra.mxu0 %v3517
      %3544 = vmatprep.subr.mxu0 0.0
      %3545 = vmatpush1.msra.mxu0 %v3518
      %3546 = vmatprep.subr.mxu0 0.0
      %3547 = vmatpush1.msra.mxu0 %v3519
      %3548 = vmatprep.subr.mxu0 0.0
      %3549 = vmatpush1.msra.mxu0 %v3520
      %3550 = vmatprep.subr.mxu0 0.0
      %3551 = vmatpush1.msra.mxu0 %v3521
      %3552 = vmatprep.subr.mxu0 0.0
      %3553 = vmatpush1.msra.mxu0 %v3522
      %3554 = vmatprep.subr.mxu0 0.0
      %3555 = vmatpush1.msra.mxu0 %v3523
      %3556 = vmatprep.subr.mxu0 0.0
      %3557 = vmatpush1.msra.mxu0 %v3524
      %3558 = vmatprep.subr.mxu0 0.0
      %3559 = vmatpush1.msra.mxu0 %v3525
      %3560 = vmatprep.subr.mxu0 0.0
      %3561 = vmatpush1.msra.mxu0 %v3526
      %3562 = vmatprep.subr.mxu0 0.0
      %3563 = vmatpush1.msra.mxu0 %v3527
      %3564 = vmatprep.subr.mxu0 0.0
      %3565 = vmatpush1.msra.mxu0 %v3528
      %3566 = vmatprep.subr.mxu0 0.0
      %3567 = vmatpush1.msra.mxu0 %v3529
      %3568 = vmatprep.subr.mxu0 0.0
      %3569 = vmatpush1.msra.mxu0 %v3530
      %3570 = vmatprep.subr.mxu0 0.0
      %3571 = vmatpush1.msra.mxu0 0.0
      %3572 = vmatprep.subr.mxu0 0.0
      %3573 = vmatpush1.msra.mxu0 0.0
      %3574 = vmatprep.subr.mxu0 0.0
      %3575 = vmatpush1.msra.mxu0 0.0
      %3576 = vmatprep.subr.mxu0 0.0
      %3577 = vmatpush1.msra.mxu0 0.0
      %3578 = vmatprep.subr.mxu0 0.0
      %3579 = vmatpush1.msra.mxu0 0.0
      %3580 = vmatprep.subr.mxu0 0.0
      %3581 = vmatpush1.msra.mxu0 0.0
      %3582 = vmatprep.subr.mxu0 0.0
      %3583 = vmatpush1.msra.mxu0 0.0
      %3584 = vmatprep.subr.mxu0 0.0
      %3585 = vmatpush1.msra.mxu0 0.0
      %3586 = vmatprep.subr.mxu0 0.0
      %3587 = vmatpush1.msra.mxu0 0.0
      %3588 = vmatprep.subr.mxu0 0.0
      %3589 = vmatpush1.msra.mxu0 0.0
      %3590 = vmatprep.subr.mxu0 0.0
      %3591 = vmatpush1.msra.mxu0 0.0
      %3592 = vmatprep.subr.mxu0 0.0
      %3593 = vmatpush1.msra.mxu0 0.0
      %3594 = vmatprep.subr.mxu0 0.0
      %3595 = vmatpush1.msra.mxu0 0.0
      %3596 = vmatprep.subr.mxu0 0.0
      %3597 = vmatpush1.msra.mxu0 0.0
      %3598 = vmatprep.subr.mxu0 0.0
      %3599 = vmatpush1.msra.mxu0 0.0
      %3600 = vmatprep.subr.mxu0 0.0
      %3601 = vmatpush1.msra.mxu0 0.0
      %3602 = vmatprep.mubr.f32.mxu0 0.0
      %3603 = vmatmul.mubr.f32.gmra.mrb[0].mxu0 %v3499
      %v3604 = vpop.f32.mrb[0].mxu0
      %v3605 = vadd.f32 %v3536, %v3604
      %v3606 = vpop.f32.mrb[0].mxu0
      %3607 = vmatprep.mubr.f32.mxu0 0.0
      %3608 = vmatmul.mubr.f32.gmra.mrb[0].mxu0 %v3500
      %v3609 = vpop.f32.mrb[0].mxu0
      %v3610 = vadd.f32 %v3536, %v3609
      %v3611 = vpop.f32.mrb[0].mxu0
      %3612 = vmatprep.mubr.f32.mxu0 0.0
      %3613 = vmatmul.mubr.f32.gmra.mrb[0].mxu0 %v3501
      %v3614 = vpop.f32.mrb[0].mxu0
      %v3615 = vadd.f32 %v3536, %v3614
      %v3616 = vpop.f32.mrb[0].mxu0
      %3617 = vmatprep.mubr.f32.mxu0 0.0
      %3618 = vmatmul.mubr.f32.gmra.mrb[0].mxu0 %v3502
      %v3619 = vpop.f32.mrb[0].mxu0
      %v3620 = vadd.f32 %v3536, %v3619
      %v3621 = vpop.f32.mrb[0].mxu0
      %3622 = vmatprep.mubr.f32.mxu0 0.0
      %3623 = vmatmul.mubr.f32.gmra.mrb[0].mxu0 %v3503
      %v3624 = vpop.f32.mrb[0].mxu0
      %v3625 = vadd.f32 %v3536, %v3624
      %v3626 = vpop.f32.mrb[0].mxu0
      %3627 = vmatprep.mubr.f32.mxu0 0.0
      %3628 = vmatmul.mubr.f32.gmra.mrb[0].mxu0 %v3504
      %v3629 = vpop.f32.mrb[0].mxu0
      %v3630 = vadd.f32 %v3536, %v3629
      %v3631 = vpop.f32.mrb[0].mxu0
      %3632 = vmatprep.mubr.f32.mxu0 0.0
      %3633 = vmatmul.mubr.f32.gmra.mrb[0].mxu0 %v3505
      %v3634 = vpop.f32.mrb[0].mxu0
      %v3635 = vadd.f32 %v3536, %v3634
      %v3636 = vpop.f32.mrb[0].mxu0
      %3637 = vmatprep.mubr.f32.mxu0 0.0
      %3638 = vmatmul.mubr.f32.gmra.mrb[0].mxu0 %v3506
      %v3639 = vpop.f32.mrb[0].mxu0
      %v3640 = vadd.f32 %v3536, %v3639
      %v3641 = vpop.f32.mrb[0].mxu0
      %3642 = vmatprep.mubr.f32.mxu0 0.0
      %3643 = vmatmul.mubr.f32.gmra.mrb[0].mxu0 %v3507
      %v3644 = vpop.f32.mrb[0].mxu0
      %v3645 = vadd.f32 %v3536, %v3644
      %v3646 = vpop.f32.mrb[0].mxu0
      %3647 = vmatprep.mubr.f32.mxu0 0.0
      %3648 = vmatmul.mubr.f32.gmra.mrb[0].mxu0 %v3508
      %v3649 = vpop.f32.mrb[0].mxu0
      %v3650 = vadd.f32 %v3536, %v3649
      %v3651 = vpop.f32.mrb[0].mxu0
      %3652 = vmatprep.mubr.f32.mxu0 0.0
      %3653 = vmatmul.mubr.f32.gmra.mrb[0].mxu0 %v3509
      %v3654 = vpop.f32.mrb[0].mxu0
      %v3655 = vadd.f32 %v3536, %v3654
      %v3656 = vpop.f32.mrb[0].mxu0
      %3657 = vmatprep.mubr.f32.mxu0 0.0
      %3658 = vmatmul.mubr.f32.gmra.mrb[0].mxu0 %v3510
      %v3659 = vpop.f32.mrb[0].mxu0
      %v3660 = vadd.f32 %v3536, %v3659
      %v3661 = vpop.f32.mrb[0].mxu0
      %3662 = vmatprep.mubr.f32.mxu0 0.0
      %3663 = vmatmul.mubr.f32.gmra.mrb[0].mxu0 %v3511
      %v3664 = vpop.f32.mrb[0].mxu0
      %v3665 = vadd.f32 %v3536, %v3664
      %v3666 = vpop.f32.mrb[0].mxu0
      %3667 = vmatprep.mubr.f32.mxu0 0.0
      %3668 = vmatmul.mubr.f32.gmra.mrb[0].mxu0 %v3512
      %v3669 = vpop.f32.mrb[0].mxu0
      %v3670 = vadd.f32 %v3536, %v3669
      %v3671 = vpop.f32.mrb[0].mxu0
      %3672 = vmatprep.mubr.f32.mxu0 0.0
      %3673 = vmatmul.mubr.f32.gmra.mrb[0].mxu0 %v3513
      %v3674 = vpop.f32.mrb[0].mxu0
      %v3675 = vadd.f32 %v3536, %v3674
      %v3676 = vpop.f32.mrb[0].mxu0
      %3677 = vmatprep.mubr.f32.mxu0 0.0
      %3678 = vmatmul.mubr.f32.gmra.mrb[0].mxu0 %v3514
      %v3679 = vpop.f32.mrb[0].mxu0
      %v3680 = vadd.f32 %v3536, %v3679
      %v3681 = vpop.f32.mrb[0].mxu0
      %3682 = vdwg.mxu0
      %v3683 = vmul.f32 %v3605, 0.5
      %v3684 = vmul.f32 %v3610, 0.5
      %v3685 = vmul.f32 %v3615, 0.5
      %v3686 = vmul.f32 %v3620, 0.5
      %v3687 = vmul.f32 %v3625, 0.5
      %v3688 = vmul.f32 %v3630, 0.5
      %v3689 = vmul.f32 %v3635, 0.5
      %v3690 = vmul.f32 %v3640, 0.5
      %v3691 = vmul.f32 %v3645, 0.5
      %v3692 = vmul.f32 %v3650, 0.5
      %v3693 = vmul.f32 %v3655, 0.5
      %v3694 = vmul.f32 %v3660, 0.5
      %v3695 = vmul.f32 %v3665, 0.5
      %v3696 = vmul.f32 %v3670, 0.5
      %v3697 = vmul.f32 %v3675, 0.5
      %v3698 = vmul.f32 %v3680, 0.5
      %v3699 = vmul.f32 %v3605, 0.70710677
      %v3700 = vmul.f32 %v3610, 0.70710677
      %v3701 = vmul.f32 %v3615, 0.70710677
      %v3702 = vmul.f32 %v3620, 0.70710677
      %v3703 = vmul.f32 %v3625, 0.70710677
      %v3704 = vmul.f32 %v3630, 0.70710677
      %v3705 = vmul.f32 %v3635, 0.70710677
      %v3706 = vmul.f32 %v3640, 0.70710677
      %v3707 = vmul.f32 %v3645, 0.70710677
      %v3708 = vmul.f32 %v3650, 0.70710677
      %v3709 = vmul.f32 %v3655, 0.70710677
      %v3710 = vmul.f32 %v3660, 0.70710677
      %v3711 = vmul.f32 %v3665, 0.70710677
      %v3712 = vmul.f32 %v3670, 0.70710677
      %v3713 = vmul.f32 %v3675, 0.70710677
      %v3714 = vmul.f32 %v3680, 0.70710677
      %v3715 = verf.f32.pop %v3699
      %v3716 = verf.f32.pop %v3700
      %v3717 = verf.f32.pop %v3701
      %v3718 = verf.f32.pop %v3702
      %v3719 = verf.f32.pop %v3703
      %v3720 = verf.f32.pop %v3704
      %v3721 = verf.f32.pop %v3705
      %v3722 = verf.f32.pop %v3706
      %v3723 = verf.f32.pop %v3707
      %v3724 = verf.f32.pop %v3708
      %v3725 = verf.f32.pop %v3709
      %v3726 = verf.f32.pop %v3710
      %v3727 = verf.f32.pop %v3711
      %v3728 = verf.f32.pop %v3712
      %v3729 = verf.f32.pop %v3713
      %v3730 = verf.f32.pop %v3714
      %v3731 = vadd.f32 %v3715, 1.0
      %v3732 = vadd.f32 %v3716, 1.0
      %v3733 = vadd.f32 %v3717, 1.0
      %v3734 = vadd.f32 %v3718, 1.0
      %v3735 = vadd.f32 %v3719, 1.0
      %v3736 = vadd.f32 %v3720, 1.0
      %v3737 = vadd.f32 %v3721, 1.0
      %v3738 = vadd.f32 %v3722, 1.0
      %v3739 = vadd.f32 %v3723, 1.0
      %v3740 = vadd.f32 %v3724, 1.0
      %v3741 = vadd.f32 %v3725, 1.0
      %v3742 = vadd.f32 %v3726, 1.0
      %v3743 = vadd.f32 %v3727, 1.0
      %v3744 = vadd.f32 %v3728, 1.0
      %v3745 = vadd.f32 %v3729, 1.0
      %v3746 = vadd.f32 %v3730, 1.0
      %v3747 = vmul.f32 %v3683, %v3731
      %v3748 = vmul.f32 %v3684, %v3732
      %v3749 = vmul.f32 %v3685, %v3733
      %v3750 = vmul.f32 %v3686, %v3734
      %v3751 = vmul.f32 %v3687, %v3735
      %v3752 = vmul.f32 %v3688, %v3736
      %v3753 = vmul.f32 %v3689, %v3737
      %v3754 = vmul.f32 %v3690, %v3738
      %v3755 = vmul.f32 %v3691, %v3739
      %v3756 = vmul.f32 %v3692, %v3740
      %v3757 = vmul.f32 %v3693, %v3741
      %v3758 = vmul.f32 %v3694, %v3742
      %v3759 = vmul.f32 %v3695, %v3743
      %v3760 = vmul.f32 %v3696, %v3744
      %v3761 = vmul.f32 %v3697, %v3745
      %v3762 = vmul.f32 %v3698, %v3746
      %v3763 = vld [vmem:[%s7] sm:$0xff]
      %v3764 = vld [vmem:[%s7 + $0x8] sm:$0xff]
      %v3765 = vld [vmem:[%s7 + $0x10] sm:$0xff]
      %v3766 = vld [vmem:[%s7 + $0x18] sm:$0xff]
      %v3767 = vld [vmem:[%s7 + $0x20] sm:$0xff]
      %v3768 = vld [vmem:[%s7 + $0x28] sm:$0xff]
      %v3769 = vld [vmem:[%s7 + $0x30] sm:$0xff]
      %v3770 = vld [vmem:[%s7 + $0x38] sm:$0xff]
      %v3771 = vld [vmem:[%s7 + $0x40] sm:$0xff]
      %v3772 = vld [vmem:[%s7 + $0x48] sm:$0xff]
      %v3773 = vld [vmem:[%s7 + $0x50] sm:$0xff]
      %v3774 = vld [vmem:[%s7 + $0x58] sm:$0xff]
      %v3775 = vld [vmem:[%s7 + $0x60] sm:$0xff]
      %v3776 = vld [vmem:[%s7 + $0x68] sm:$0xff]
      %v3777 = vld [vmem:[%s7 + $0x70] sm:$0xff]
      %v3778 = vld [vmem:[%s7 + $0x78] sm:$0xff]
      %v3779 = vld [vmem:[%s8] sm:$0x1]
      %v3781 = vlaneseq
      %v3782 = vshrl.u32 %v3781, 7
      %v3783 = vsub.s32 0, %v3782
      %v3784 = vrot.slane %v3779, %v3783
      %3786 = vmatprep.subr.mxu0 0.0
      %3787 = vmatpush1.msra.mxu0 %v3763
      %3788 = vmatprep.subr.mxu0 0.0
      %3789 = vmatpush1.msra.mxu0 %v3764
      %3790 = vmatprep.subr.mxu0 0.0
      %3791 = vmatpush1.msra.mxu0 %v3765
      %3792 = vmatprep.subr.mxu0 0.0
      %3793 = vmatpush1.msra.mxu0 %v3766
      %3794 = vmatprep.subr.mxu0 0.0
      %3795 = vmatpush1.msra.mxu0 %v3767
      %3796 = vmatprep.subr.mxu0 0.0
      %3797 = vmatpush1.msra.mxu0 %v3768
      %3798 = vmatprep.subr.mxu0 0.0
      %3799 = vmatpush1.msra.mxu0 %v3769
      %3800 = vmatprep.subr.mxu0 0.0
      %3801 = vmatpush1.msra.mxu0 %v3770
      %3802 = vmatprep.subr.mxu0 0.0
      %3803 = vmatpush1.msra.mxu0 %v3771
      %3804 = vmatprep.subr.mxu0 0.0
      %3805 = vmatpush1.msra.mxu0 %v3772
      %3806 = vmatprep.subr.mxu0 0.0
      %3807 = vmatpush1.msra.mxu0 %v3773
      %3808 = vmatprep.subr.mxu0 0.0
      %3809 = vmatpush1.msra.mxu0 %v3774
      %3810 = vmatprep.subr.mxu0 0.0
      %3811 = vmatpush1.msra.mxu0 %v3775
      %3812 = vmatprep.subr.mxu0 0.0
      %3813 = vmatpush1.msra.mxu0 %v3776
      %3814 = vmatprep.subr.mxu0 0.0
      %3815 = vmatpush1.msra.mxu0 %v3777
      %3816 = vmatprep.subr.mxu0 0.0
      %3817 = vmatpush1.msra.mxu0 %v3778
      %3818 = vmatprep.subr.mxu0 0.0
      %3819 = vmatpush1.msra.mxu0 0.0
      %3820 = vmatprep.subr.mxu0 0.0
      %3821 = vmatpush1.msra.mxu0 0.0
      %3822 = vmatprep.subr.mxu0 0.0
      %3823 = vmatpush1.msra.mxu0 0.0
      %3824 = vmatprep.subr.mxu0 0.0
      %3825 = vmatpush1.msra.mxu0 0.0
      %3826 = vmatprep.subr.mxu0 0.0
      %3827 = vmatpush1.msra.mxu0 0.0
      %3828 = vmatprep.subr.mxu0 0.0
      %3829 = vmatpush1.msra.mxu0 0.0
      %3830 = vmatprep.subr.mxu0 0.0
      %3831 = vmatpush1.msra.mxu0 0.0
      %3832 = vmatprep.subr.mxu0 0.0
      %3833 = vmatpush1.msra.mxu0 0.0
      %3834 = vmatprep.subr.mxu0 0.0
      %3835 = vmatpush1.msra.mxu0 0.0
      %3836 = vmatprep.subr.mxu0 0.0
      %3837 = vmatpush1.msra.mxu0 0.0
      %3838 = vmatprep.subr.mxu0 0.0
      %3839 = vmatpush1.msra.mxu0 0.0
      %3840 = vmatprep.subr.mxu0 0.0
      %3841 = vmatpush1.msra.mxu0 0.0
      %3842 = vmatprep.subr.mxu0 0.0
      %3843 = vmatpush1.msra.mxu0 0.0
      %3844 = vmatprep.subr.mxu0 0.0
      %3845 = vmatpush1.msra.mxu0 0.0
      %3846 = vmatprep.subr.mxu0 0.0
      %3847 = vmatpush1.msra.mxu0 0.0
      %3848 = vmatprep.subr.mxu0 0.0
      %3849 = vmatpush1.msra.mxu0 0.0
      %3850 = vmatprep.mubr.f32.mxu0 0.0
      %3851 = vmatmul.mubr.f32.gmra.mrb[0].mxu0 %v3747
      %v3852 = vpop.f32.mrb[0].mxu0
      %v3853 = vadd.f32 %v3784, %v3852
      %v3854 = vpop.f32.mrb[0].mxu0
      %3855 = vmatprep.mubr.f32.mxu0 0.0
      %3856 = vmatmul.mubr.f32.gmra.mrb[0].mxu0 %v3748
      %v3857 = vpop.f32.mrb[0].mxu0
      %v3858 = vadd.f32 %v3784, %v3857
      %v3859 = vpop.f32.mrb[0].mxu0
      %3860 = vmatprep.mubr.f32.mxu0 0.0
      %3861 = vmatmul.mubr.f32.gmra.mrb[0].mxu0 %v3749
      %v3862 = vpop.f32.mrb[0].mxu0
      %v3863 = vadd.f32 %v3784, %v3862
      %v3864 = vpop.f32.mrb[0].mxu0
      %3865 = vmatprep.mubr.f32.mxu0 0.0
      %3866 = vmatmul.mubr.f32.gmra.mrb[0].mxu0 %v3750
      %v3867 = vpop.f32.mrb[0].mxu0
      %v3868 = vadd.f32 %v3784, %v3867
      %v3869 = vpop.f32.mrb[0].mxu0
      %3870 = vmatprep.mubr.f32.mxu0 0.0
      %3871 = vmatmul.mubr.f32.gmra.mrb[0].mxu0 %v3751
      %v3872 = vpop.f32.mrb[0].mxu0
      %v3873 = vadd.f32 %v3784, %v3872
      %v3874 = vpop.f32.mrb[0].mxu0
      %3875 = vmatprep.mubr.f32.mxu0 0.0
      %3876 = vmatmul.mubr.f32.gmra.mrb[0].mxu0 %v3752
      %v3877 = vpop.f32.mrb[0].mxu0
      %v3878 = vadd.f32 %v3784, %v3877
      %v3879 = vpop.f32.mrb[0].mxu0
      %3880 = vmatprep.mubr.f32.mxu0 0.0
      %3881 = vmatmul.mubr.f32.gmra.mrb[0].mxu0 %v3753
      %v3882 = vpop.f32.mrb[0].mxu0
      %v3883 = vadd.f32 %v3784, %v3882
      %v3884 = vpop.f32.mrb[0].mxu0
      %3885 = vmatprep.mubr.f32.mxu0 0.0
      %3886 = vmatmul.mubr.f32.gmra.mrb[0].mxu0 %v3754
      %v3887 = vpop.f32.mrb[0].mxu0
      %v3888 = vadd.f32 %v3784, %v3887
      %v3889 = vpop.f32.mrb[0].mxu0
      %3890 = vmatprep.mubr.f32.mxu0 0.0
      %3891 = vmatmul.mubr.f32.gmra.mrb[0].mxu0 %v3755
      %v3892 = vpop.f32.mrb[0].mxu0
      %v3893 = vadd.f32 %v3784, %v3892
      %v3894 = vpop.f32.mrb[0].mxu0
      %3895 = vmatprep.mubr.f32.mxu0 0.0
      %3896 = vmatmul.mubr.f32.gmra.mrb[0].mxu0 %v3756
      %v3897 = vpop.f32.mrb[0].mxu0
      %v3898 = vadd.f32 %v3784, %v3897
      %v3899 = vpop.f32.mrb[0].mxu0
      %3900 = vmatprep.mubr.f32.mxu0 0.0
      %3901 = vmatmul.mubr.f32.gmra.mrb[0].mxu0 %v3757
      %v3902 = vpop.f32.mrb[0].mxu0
      %v3903 = vadd.f32 %v3784, %v3902
      %v3904 = vpop.f32.mrb[0].mxu0
      %3905 = vmatprep.mubr.f32.mxu0 0.0
      %3906 = vmatmul.mubr.f32.gmra.mrb[0].mxu0 %v3758
      %v3907 = vpop.f32.mrb[0].mxu0
      %v3908 = vadd.f32 %v3784, %v3907
      %v3909 = vpop.f32.mrb[0].mxu0
      %3910 = vmatprep.mubr.f32.mxu0 0.0
      %3911 = vmatmul.mubr.f32.gmra.mrb[0].mxu0 %v3759
      %v3912 = vpop.f32.mrb[0].mxu0
      %v3913 = vadd.f32 %v3784, %v3912
      %v3914 = vpop.f32.mrb[0].mxu0
      %3915 = vmatprep.mubr.f32.mxu0 0.0
      %3916 = vmatmul.mubr.f32.gmra.mrb[0].mxu0 %v3760
      %v3917 = vpop.f32.mrb[0].mxu0
      %v3918 = vadd.f32 %v3784, %v3917
      %v3919 = vpop.f32.mrb[0].mxu0
      %3920 = vmatprep.mubr.f32.mxu0 0.0
      %3921 = vmatmul.mubr.f32.gmra.mrb[0].mxu0 %v3761
      %v3922 = vpop.f32.mrb[0].mxu0
      %v3923 = vadd.f32 %v3784, %v3922
      %v3924 = vpop.f32.mrb[0].mxu0
      %3925 = vmatprep.mubr.f32.mxu0 0.0
      %3926 = vmatmul.mubr.f32.gmra.mrb[0].mxu0 %v3762
      %v3927 = vpop.f32.mrb[0].mxu0
      %v3928 = vadd.f32 %v3784, %v3927
      %v3929 = vpop.f32.mrb[0].mxu0
      %3930 = vdwg.mxu0
      %v3931 = vld [vmem:[%s9] sm:$0x1]
      %v3933 = vlaneseq
      %v3934 = vshrl.u32 %v3933, 7
      %v3935 = vsub.s32 0, %v3934
      %v3936 = vrot.slane %v3931, %v3935
      %v3938 = vmul.f32 %v3853, %v3936
      %v3939 = vmul.f32 %v3858, %v3936
      %v3940 = vmul.f32 %v3863, %v3936
      %v3941 = vmul.f32 %v3868, %v3936
      %v3942 = vmul.f32 %v3873, %v3936
      %v3943 = vmul.f32 %v3878, %v3936
      %v3944 = vmul.f32 %v3883, %v3936
      %v3945 = vmul.f32 %v3888, %v3936
      %v3946 = vmul.f32 %v3893, %v3936
      %v3947 = vmul.f32 %v3898, %v3936
      %v3948 = vmul.f32 %v3903, %v3936
      %v3949 = vmul.f32 %v3908, %v3936
      %v3950 = vmul.f32 %v3913, %v3936
      %v3951 = vmul.f32 %v3918, %v3936
      %v3952 = vmul.f32 %v3923, %v3936
      %v3953 = vmul.f32 %v3928, %v3936
      %v3954 = vadd.f32 %v1946, %v3938
      %v3955 = vadd.f32 %v1947, %v3939
      %v3956 = vadd.f32 %v1948, %v3940
      %v3957 = vadd.f32 %v1949, %v3941
      %v3958 = vadd.f32 %v1950, %v3942
      %v3959 = vadd.f32 %v1951, %v3943
      %v3960 = vadd.f32 %v1952, %v3944
      %v3961 = vadd.f32 %v1953, %v3945
      %v3962 = vadd.f32 %v1954, %v3946
      %v3963 = vadd.f32 %v1955, %v3947
      %v3964 = vadd.f32 %v1956, %v3948
      %v3965 = vadd.f32 %v1957, %v3949
      %v3966 = vadd.f32 %v1958, %v3950
      %v3967 = vadd.f32 %v1959, %v3951
      %v3968 = vadd.f32 %v1960, %v3952
      %v3969 = vadd.f32 %v1961, %v3953
      %3970 = vst [vmem:[%s337] sm:$0xff] %v3954
      %3971 = vst [vmem:[%s337 + $0x8] sm:$0xff] %v3955
      %3972 = vst [vmem:[%s337 + $0x10] sm:$0xff] %v3956
      %3973 = vst [vmem:[%s337 + $0x18] sm:$0xff] %v3957
      %3974 = vst [vmem:[%s337 + $0x20] sm:$0xff] %v3958
      %3975 = vst [vmem:[%s337 + $0x28] sm:$0xff] %v3959
      %3976 = vst [vmem:[%s337 + $0x30] sm:$0xff] %v3960
      %3977 = vst [vmem:[%s337 + $0x38] sm:$0xff] %v3961
      %3978 = vst [vmem:[%s337 + $0x40] sm:$0xff] %v3962
      %3979 = vst [vmem:[%s337 + $0x48] sm:$0xff] %v3963
      %3980 = vst [vmem:[%s337 + $0x50] sm:$0xff] %v3964
      %3981 = vst [vmem:[%s337 + $0x58] sm:$0xff] %v3965
      %3982 = vst [vmem:[%s337 + $0x60] sm:$0xff] %v3966
      %3983 = vst [vmem:[%s337 + $0x68] sm:$0xff] %v3967
      %3984 = vst [vmem:[%s337 + $0x70] sm:$0xff] %v3968
      %3985 = vst [vmem:[%s337 + $0x78] sm:$0xff] %v3969
      %s3986 = smul.u32 8, %s26
      %p3987 = scmp.lt.s32.totalorder %s25, 1
      %s3988 = scalar_select %p3987, %s25, 1
      %p3989 = scmp.lt.s32.totalorder %s3986, 15
      %s3990 = scalar_select %p3989, %s3986, 15
      %s3991 = smul.addr %s3990, 2
      %s3992 = smul.addr %s3988, 32
      %s3993 = sadd.s32 %s3991, %s3992
      %s3994 = smul.addr %s3993, 8
      %s3995 = scalar_lea.vmem %s10, %s3994
      // Predicated region
      $region133: #{acl_forward.1} parent=55 // pred_check
        %p3996 = pneg %p242
      $region134: #{acl_forward.1} parent=55 // pred_check_branch
        %3998 = sbr.rel (%p3996) target = $region136
      $region135: #{acl_forward.1} parent=55 // pred_region
        %s3999 = smul.u32 8, %s26
      $region136: #{acl_forward.1} parent=55 // pred_fallthru
        _
    $region56: #{acl_forward.1} parent=5 // pred_fallthru
      _
    %p4000 = scmp.le.s32.totalorder 2, %s16
    // Predicated region
    $region137: #{acl_forward.1} parent=5 // pred_check
      %p4001 = pneg %p4000
    $region138: #{acl_forward.1} parent=5 // pred_check_branch
      %4003 = sbr.rel (%p4001) target = $region140
    $region139: #{acl_forward.1} parent=5 // pred_region
      %s4004 = ssub.s32 %s16, 2
      // Predicated region
      $region141: #{acl_forward.1} parent=139 // pred_check
        %p4005 = pneg %p248
      $region142: #{acl_forward.1} parent=139 // pred_check_branch
        %4007 = sbr.rel (%p4005) target = $region144
      $region143: #{acl_forward.1} parent=139 // pred_region
        %s4008 = smul.u32 8, %s28
        %p4009 = scmp.lt.s32.totalorder %s27, 1
        %s4010 = scalar_select %p4009, %s27, 1
        %p4011 = scmp.lt.s32.totalorder %s4008, 15
        %s4012 = scalar_select %p4011, %s4008, 15
        %s4013 = smul.addr %s4012, 2
        %s4014 = smul.addr %s4010, 32
        %s4015 = sadd.s32 %s4013, %s4014
        %s4016 = smul.addr %s4015, 8
        %s4017 = scalar_lea.vmem %s10, %s4016
      $region144: #{acl_forward.1} parent=139 // pred_fallthru
        _
    $region140: #{acl_forward.1} parent=5 // pred_fallthru
      _
  $region6: #{acl_forward.1} parent=0 // loop_footer
    %s20 = sadd.s32 1, %s16
  $region7: #{acl_forward.1} parent=0 // loop_footer_branch
    %15 = sbr.rel target = $region3
  $region8: #{acl_forward.1} parent=0 // loop_exit
    _
  %4018 = vsyncmov [#allocation3]
  %s4019 = vpop.sfrf %4018
  %p4020 = scmp.eq.s32.totalorder %s4019, 0
  %p4021 = pneg %p4020
  %4023 = shalt.err (%p4021)
  %s4024 = scalar_lea.sflag [#allocation3], 1
  %4025 = vsyncmov %s4024
  %s4026 = vpop.sfrf %4025
  %p4027 = scmp.eq.s32.totalorder %s4026, 0
  %p4028 = pneg %p4027
  %4030 = shalt.err (%p4028)

</llo_original>
